<compile_context>
chip_gen: v5e
topology: v5e:2x2
jax: 0.10.0
libtpu: 0.0.40
codegen_flags: <defaults>
</compile_context>

<pallas_src>
import jax
import jax.numpy as jnp
from jax import lax
from jax.experimental import pallas as pl
from jax.experimental.pallas import tpu as pltpu

MM_HIDDEN = 1200      # MLBGrounding.mm_hidden
MM_PAD = 1280         # next multiple of 128 (lane-aligned)


def _grounding_kernel(
    encT_ref, encI_ref, mask_ref,
    wT_ref, wI_ref, wTc_bot_ref, wIc_bot_ref,
    bT_ref, bI_ref, swa_ref, swc_ref, sb_ref,
    out_ref,
):
    """Single grid step: the whole (small) batch is resident in VMEM."""
    f32 = jnp.float32
    B, n_tok, n_roi = out_ref.shape
    mmp = swa_ref.shape[1]
    mxu_dtype = encT_ref.dtype          # compute dtype for MXU inputs (f32 or bf16)

    encT = encT_ref[...]                # (B*n_tok, Th)
    encI = encI_ref[...]                # (B*n_roi, Ih)

    # ---- phase A: batched, N-fused projections ---------------------------
    # columns [0, mmp)     -> attention MLB branch
    # columns [mmp, 2*mmp) -> classification MLB branch (encoder half, bias incl.)
    projT = jnp.dot(encT, wT_ref[...], preferred_element_type=f32) + bT_ref[...]
    projI = jnp.dot(encI, wI_ref[...], preferred_element_type=f32) + bI_ref[...]
    tT = jnp.tanh(projT[:, :mmp])       # (B*n_tok, mmp)
    tI = jnp.tanh(projI[:, :mmp])       # (B*n_roi, mmp)
    cT_base = projT[:, mmp:]            # (B*n_tok, mmp), pre-tanh, bias added
    cI_base = projI[:, mmp:]            # (B*n_roi, mmp)

    swa = swa_ref[...]                  # (1, mmp) f32, zero in padded lanes
    swc = swc_ref[...]
    sb_a = sb_ref[0, 0]
    sb_c = sb_ref[0, 1]

    # contract last dims of both operands (rhs-transposed matmul, no XLU .T)
    dn_last = (((1,), (1,)), ((), ()))

    # ---- phase B: per-batch attention + softmax + attended features ------
    attn_list, attT_list, attI_list = [], [], []
    for b in range(B):
        tT_b = tT[b * n_tok:(b + 1) * n_tok]        # (n_tok, mmp)
        tI_b = tI[b * n_roi:(b + 1) * n_roi]        # (n_roi, mmp)
        m_b = mask_ref[b]                           # (n_tok, n_roi)

        attn = lax.dot_general(
            (tT_b * swa).astype(mxu_dtype), tI_b.astype(mxu_dtype), dn_last,
            preferred_element_type=f32) + sb_a + m_b

        attn_on_T = jax.nn.softmax(attn, axis=0)    # softmax over tokens (dim=1)
        attn_on_I = jax.nn.softmax(attn, axis=1)    # softmax over RoIs   (dim=2)

        encT_b = encT[b * n_tok:(b + 1) * n_tok].astype(f32)
        encI_b = encI[b * n_roi:(b + 1) * n_roi].astype(f32)
        # tiny (n_tok, n_roi) transpose — negligible compared with the mm-wide ones
        attT = jnp.dot(attn_on_T.T, encT_b, preferred_element_type=f32)  # (n_roi, Th)
        attI = jnp.dot(attn_on_I, encI_b, preferred_element_type=f32)    # (n_tok, Ih)

        attn_list.append(attn)
        attT_list.append(attT)
        attI_list.append(attI)

    attT_all = jnp.concatenate(attT_list, axis=0)   # (B*n_roi, Th)
    attI_all = jnp.concatenate(attI_list, axis=0)   # (B*n_tok, Ih)

    # ---- phase C: batched classification projections of the attended half -
    # fused_T = [encT | attented_I], fused_I = [encI | attented_T]; the concat's
    # matmul is split into two matmuls (identical math, no concat materialized).
    cT = jnp.tanh(cT_base + jnp.dot(attI_all.astype(mxu_dtype), wTc_bot_ref[...],
                                    preferred_element_type=f32))
    cI = jnp.tanh(cI_base + jnp.dot(attT_all.astype(mxu_dtype), wIc_bot_ref[...],
                                    preferred_element_type=f32))

    # ---- phase D: per-batch classification score + final sum -------------
    for b in range(B):
        cT_b = cT[b * n_tok:(b + 1) * n_tok]
        cI_b = cI[b * n_roi:(b + 1) * n_roi]
        m_b = mask_ref[b]
        cls = lax.dot_general(
            (cT_b * swc).astype(mxu_dtype), cI_b.astype(mxu_dtype), dn_last,
            preferred_element_type=f32) + sb_c + m_b
        # logits = classification + attention + mask.squeeze(1)
        out_ref[b] = (cls + attn_list[b] + m_b).astype(out_ref.dtype)


def pack_params(params, t_hidden, i_hidden, compute_dtype=jnp.float32):
    """One-time packing: pad mm 1200->1280 and fuse same-LHS weights along N.

    Use compute_dtype=jnp.bfloat16 on v6e/v7x for the bf16 MXU path (the kernel
    keeps accumulation / tanh / softmax in f32).
    """
    pad = MM_PAD - MM_HIDDEN

    def padm(x):
        return jnp.pad(x, ((0, 0), (0, pad)))

    wT_c, wI_c = params["wT_c"], params["wI_c"]
    wT_fused = jnp.concatenate([padm(params["wT_a"]), padm(wT_c[:t_hidden])], axis=1)
    wI_fused = jnp.concatenate([padm(params["wI_a"]), padm(wI_c[:i_hidden])], axis=1)
    bT_fused = jnp.concatenate([padm(params["bT_a"]), padm(params["bT_c"])], axis=1)
    bI_fused = jnp.concatenate([padm(params["bI_a"]), padm(params["bI_c"])], axis=1)

    return {
        "wT_fused": wT_fused.astype(compute_dtype),                 # (Th, 2*MM_PAD)
        "wI_fused": wI_fused.astype(compute_dtype),                 # (Ih, 2*MM_PAD)
        "wT_c_bot": padm(wT_c[t_hidden:]).astype(compute_dtype),    # (Ih, MM_PAD)
        "wI_c_bot": padm(wI_c[i_hidden:]).astype(compute_dtype),    # (Th, MM_PAD)
        "bT_fused": bT_fused.astype(jnp.float32),                   # (1, 2*MM_PAD)
        "bI_fused": bI_fused.astype(jnp.float32),
        "sw_a": padm(params["sw_a"]).astype(jnp.float32),           # zero-padded lanes
        "sw_c": padm(params["sw_c"]).astype(jnp.float32),
        "sb": jnp.concatenate([params["sb_a"].reshape(1, 1),
                               params["sb_c"].reshape(1, 1)], axis=1).astype(jnp.float32),
    }


def fusion_fusion_grounding(encT, encI, mask, spatials, packed):
    """FusionFusionGrounding forward. `packed` comes from pack_params()."""
    del spatials  # MLBGrounding.forward ignores spatials
    B, n_tok, t_hidden = encT.shape
    _, n_roi, i_hidden = encI.shape

    cdt = packed["wT_fused"].dtype
    encT_flat = encT.reshape(B * n_tok, t_hidden).astype(cdt)   # fold batch into M
    encI_flat = encI.reshape(B * n_roi, i_hidden).astype(cdt)
    mask_sq = mask[:, 0, :, :].astype(jnp.float32)              # (B, n_tok, n_roi)

    def full(shape):
        nd = len(shape)
        return pl.BlockSpec(shape, lambda i, nd=nd: (0,) * nd)

    grid_spec = pltpu.PrefetchScalarGridSpec(
        num_scalar_prefetch=0,
        grid=(1,),   # single step: every operand DMA'd exactly once
        in_specs=[
            full((B * n_tok, t_hidden)),          # encT (flattened)
            full((B * n_roi, i_hidden)),          # encI (flattened)
            full((B, n_tok, n_roi)),              # mask
            full((t_hidden, 2 * MM_PAD)),         # wT_fused = [wT_a | wT_c_top]
            full((i_hidden, 2 * MM_PAD)),         # wI_fused = [wI_a | wI_c_top]
            full((i_hidden, MM_PAD)),             # wT_c_bot (applies to attented_I)
            full((t_hidden, MM_PAD)),             # wI_c_bot (applies to attented_T)
            full((1, 2 * MM_PAD)),                # bT_fused
            full((1, 2 * MM_PAD)),                # bI_fused
            full((1, MM_PAD)),                    # sw_a
            full((1, MM_PAD)),                    # sw_c
            pl.BlockSpec(memory_space=pltpu.MemorySpace.SMEM),  # sb (1, 2)
        ],
        out_specs=full((B, n_tok, n_roi)),
    )

    return pl.pallas_call(
        _grounding_kernel,
        out_shape=jax.ShapeDtypeStruct((B, n_tok, n_roi), jnp.float32),
        grid_spec=grid_spec,
        compiler_params=pltpu.CompilerParams(
            dimension_semantics=("arbitrary",),
        ),
    )(
        encT_flat, encI_flat, mask_sq,
        packed["wT_fused"], packed["wI_fused"],
        packed["wT_c_bot"], packed["wI_c_bot"],
        packed["bT_fused"], packed["bI_fused"],
        packed["sw_a"], packed["sw_c"], packed["sb"],
    )


def _reference(encT, encI, mask, params):
    """Pure-JAX reference reproducing the PyTorch forward literally."""
    B, n_tok, Th = encT.shape
    _, n_roi, Ih = encI.shape
    msk = mask[:, 0]

    def mlb(xT, xI, w_t, b_t, w_i, b_i, sw, sb):
        # broadcast_to_match + MLB fusion + score linear
        tT = jnp.tanh(xT @ w_t + b_t)          # (B, nT, mm)
        tI = jnp.tanh(xI @ w_i + b_i)          # (B, nR, mm)
        tT_b = jnp.repeat(tT[:, :, None, :], xI.shape[1], axis=2)
        tI_b = jnp.tile(tI[:, None, :, :], (1, xT.shape[1], 1, 1))
        fusion = tT_b * tI_b                   # (B, nT, nR, mm)
        return jnp.einsum("btrm,m->btr", fusion, sw[0]) + sb[0, 0]

    attn = mlb(encT, encI, params["wT_a"], params["bT_a"], params["wI_a"],
               params["bI_a"], params["sw_a"], params["sb_a"]) + msk
    aT = jax.nn.softmax(attn, axis=1)
    aI = jax.nn.softmax(attn, axis=2)
    attented_T = jnp.einsum("btr,bth->brh", aT, encT)
    attented_I = jnp.einsum("btr,brh->bth", aI, encI)
    fused_T = jnp.concatenate([encT, attented_I], axis=-1)
    fused_I = jnp.concatenate([encI, attented_T], axis=-1)
    cls = mlb(fused_T, fused_I, params["wT_c"], params["bT_c"], params["wI_c"],
              params["bI_c"], params["sw_c"], params["sb_c"]) + msk
    return cls + attn + msk


def init_params(key, t_hidden, i_hidden):
    ks = jax.random.split(key, 12)
    s = 0.05
    f = t_hidden + i_hidden
    return {
        "wT_a": s * jax.random.normal(ks[0], (t_hidden, MM_HIDDEN), jnp.float32),
        "bT_a": s * jax.random.normal(ks[1], (1, MM_HIDDEN), jnp.float32),
        "wI_a": s * jax.random.normal(ks[2], (i_hidden, MM_HIDDEN), jnp.float32),
        "bI_a": s * jax.random.normal(ks[3], (1, MM_HIDDEN), jnp.float32),
        "sw_a": s * jax.random.normal(ks[4], (1, MM_HIDDEN), jnp.float32),
        "sb_a": s * jax.random.normal(ks[5], (1, 1), jnp.float32),
        "wT_c": s * jax.random.normal(ks[6], (f, MM_HIDDEN), jnp.float32),
        "bT_c": s * jax.random.normal(ks[7], (1, MM_HIDDEN), jnp.float32),
        "wI_c": s * jax.random.normal(ks[8], (f, MM_HIDDEN), jnp.float32),
        "bI_c": s * jax.random.normal(ks[9], (1, MM_HIDDEN), jnp.float32),
        "sw_c": s * jax.random.normal(ks[10], (1, MM_HIDDEN), jnp.float32),
        "sb_c": s * jax.random.normal(ks[11], (1, 1), jnp.float32),
    }


if __name__ == "__main__":
    B, n_tok, n_roi = 2, 8, 16
    T_hidden, I_hidden = 32, 32

    key = jax.random.PRNGKey(0)
    k_t, k_i, k_m, k_s, k_p = jax.random.split(key, 5)

    encT = jax.random.normal(k_t, (B, n_tok, T_hidden), jnp.float32)
    encI = jax.random.normal(k_i, (B, n_roi, I_hidden), jnp.float32)
    mask = jax.random.normal(k_m, (B, 1, n_tok, n_roi), jnp.float32) * 0.1
    spatials = jax.random.normal(k_s, (B, n_roi, 5), jnp.float32)  # unused downstream
    params = init_params(k_p, T_hidden, I_hidden)

    # f32 packing for exact parity with the PyTorch module; pass
    # compute_dtype=jnp.bfloat16 here on v6e/v7x for the bf16 MXU path.
    packed = pack_params(params, T_hidden, I_hidden)

    out = fusion_fusion_grounding(encT, encI, mask, spatials, packed)
    out = jax.block_until_ready(out)

    ref = _reference(encT, encI, mask, params)
    assert out.shape == (B, n_tok, n_roi)
    assert jnp.allclose(out, ref, rtol=1e-4, atol=1e-4), "mismatch vs reference"

    print("KERNEL_OK")
</pallas_src>

<mosaic_0001>
module attributes {stable_mosaic.version = 11 : i64} {
  func.func @_grounding_kernel(%arg0: i32, %arg1: memref<16x32xf32, #tpu.memory_space<vmem>>, %arg2: memref<32x32xf32, #tpu.memory_space<vmem>>, %arg3: memref<2x8x16xf32, #tpu.memory_space<vmem>>, %arg4: memref<32x2560xf32, #tpu.memory_space<vmem>>, %arg5: memref<32x2560xf32, #tpu.memory_space<vmem>>, %arg6: memref<32x1280xf32, #tpu.memory_space<vmem>>, %arg7: memref<32x1280xf32, #tpu.memory_space<vmem>>, %arg8: memref<1x2560xf32, #tpu.memory_space<vmem>>, %arg9: memref<1x2560xf32, #tpu.memory_space<vmem>>, %arg10: memref<1x1280xf32, #tpu.memory_space<vmem>>, %arg11: memref<1x1280xf32, #tpu.memory_space<vmem>>, %arg12: memref<1x2xf32, #tpu.memory_space<smem>>, %arg13: memref<2x8x16xf32, #tpu.memory_space<vmem>>) attributes {dimension_semantics = [#tpu.dimension_semantics<arbitrary>], iteration_bounds = array<i64: 1>, scalar_prefetch = 0 : i64, scratch_operands = 0 : i64, tpu.core_type = #tpu.core_type<tc>, window_params = [{pipeline_mode = #tpu.pipeline_mode<synchronous>, transform_indices = @transform_0, window_bounds = array<i64: 16, 32>}, {pipeline_mode = #tpu.pipeline_mode<synchronous>, transform_indices = @transform_1, window_bounds = array<i64: 32, 32>}, {pipeline_mode = #tpu.pipeline_mode<synchronous>, transform_indices = @transform_2, window_bounds = array<i64: 2, 8, 16>}, {pipeline_mode = #tpu.pipeline_mode<synchronous>, transform_indices = @transform_3, window_bounds = array<i64: 32, 2560>}, {pipeline_mode = #tpu.pipeline_mode<synchronous>, transform_indices = @transform_4, window_bounds = array<i64: 32, 2560>}, {pipeline_mode = #tpu.pipeline_mode<synchronous>, transform_indices = @transform_5, window_bounds = array<i64: 32, 1280>}, {pipeline_mode = #tpu.pipeline_mode<synchronous>, transform_indices = @transform_6, window_bounds = array<i64: 32, 1280>}, {pipeline_mode = #tpu.pipeline_mode<synchronous>, transform_indices = @transform_7, window_bounds = array<i64: 1, 2560>}, {pipeline_mode = #tpu.pipeline_mode<synchronous>, transform_indices = @transform_8, window_bounds = array<i64: 1, 2560>}, {pipeline_mode = #tpu.pipeline_mode<synchronous>, transform_indices = @transform_9, window_bounds = array<i64: 1, 1280>}, {pipeline_mode = #tpu.pipeline_mode<synchronous>, transform_indices = @transform_10, window_bounds = array<i64: 1, 1280>}, {transform_indices = @transform_11, window_bounds = array<i64: 1, 2>}, {pipeline_mode = #tpu.pipeline_mode<synchronous>, transform_indices = @transform_12, window_bounds = array<i64: 2, 8, 16>}]} {
    %c0 = arith.constant 0 : index
    %c0_0 = arith.constant 0 : index
    %0 = vector.load %arg1[%c0, %c0_0] : memref<16x32xf32, #tpu.memory_space<vmem>>, vector<16x32xf32>
    %c0_1 = arith.constant 0 : index
    %c0_2 = arith.constant 0 : index
    %1 = vector.load %arg2[%c0_1, %c0_2] : memref<32x32xf32, #tpu.memory_space<vmem>>, vector<32x32xf32>
    %c0_3 = arith.constant 0 : index
    %c0_4 = arith.constant 0 : index
    %2 = vector.load %arg4[%c0_3, %c0_4] : memref<32x2560xf32, #tpu.memory_space<vmem>>, vector<32x2560xf32>
    %cst = arith.constant dense<0.000000e+00> : vector<16x2560xf32>
    %3 = tpu.matmul %0, %2, %cst {dimension_numbers = #tpu.dot_dimension_numbers<[1], [0], [0], [1], [0, 0, 1, 1], [], []>} : vector<16x32xf32>, vector<32x2560xf32>, vector<16x2560xf32> -> vector<16x2560xf32>
    %c0_5 = arith.constant 0 : index
    %c0_6 = arith.constant 0 : index
    %4 = vector.load %arg8[%c0_5, %c0_6] : memref<1x2560xf32, #tpu.memory_space<vmem>>, vector<1x2560xf32>
    %5 = vector.broadcast %4 : vector<1x2560xf32> to vector<16x2560xf32>
    %6 = arith.addf %3, %5 : vector<16x2560xf32>
    %c0_7 = arith.constant 0 : index
    %c0_8 = arith.constant 0 : index
    %7 = vector.load %arg5[%c0_7, %c0_8] : memref<32x2560xf32, #tpu.memory_space<vmem>>, vector<32x2560xf32>
    %cst_9 = arith.constant dense<0.000000e+00> : vector<32x2560xf32>
    %8 = tpu.matmul %1, %7, %cst_9 {dimension_numbers = #tpu.dot_dimension_numbers<[1], [0], [0], [1], [0, 0, 1, 1], [], []>} : vector<32x32xf32>, vector<32x2560xf32>, vector<32x2560xf32> -> vector<32x2560xf32>
    %c0_10 = arith.constant 0 : index
    %c0_11 = arith.constant 0 : index
    %9 = vector.load %arg9[%c0_10, %c0_11] : memref<1x2560xf32, #tpu.memory_space<vmem>>, vector<1x2560xf32>
    %10 = vector.broadcast %9 : vector<1x2560xf32> to vector<32x2560xf32>
    %11 = arith.addf %8, %10 : vector<32x2560xf32>
    %12 = vector.extract_strided_slice %6 {offsets = [0, 0], sizes = [16, 1280], strides = [1, 1]} : vector<16x2560xf32> to vector<16x1280xf32>
    %13 = math.tanh %12 : vector<16x1280xf32>
    %14 = vector.extract_strided_slice %11 {offsets = [0, 0], sizes = [32, 1280], strides = [1, 1]} : vector<32x2560xf32> to vector<32x1280xf32>
    %15 = math.tanh %14 : vector<32x1280xf32>
    %16 = vector.extract_strided_slice %6 {offsets = [0, 1280], sizes = [16, 1280], strides = [1, 1]} : vector<16x2560xf32> to vector<16x1280xf32>
    %17 = vector.extract_strided_slice %11 {offsets = [0, 1280], sizes = [32, 1280], strides = [1, 1]} : vector<32x2560xf32> to vector<32x1280xf32>
    %c0_12 = arith.constant 0 : index
    %c0_13 = arith.constant 0 : index
    %18 = vector.load %arg10[%c0_12, %c0_13] : memref<1x1280xf32, #tpu.memory_space<vmem>>, vector<1x1280xf32>
    %c0_14 = arith.constant 0 : index
    %c0_15 = arith.constant 0 : index
    %19 = vector.load %arg11[%c0_14, %c0_15] : memref<1x1280xf32, #tpu.memory_space<vmem>>, vector<1x1280xf32>
    %c0_16 = arith.constant 0 : index
    %c0_17 = arith.constant 0 : index
    %20 = memref.load %arg12[%c0_16, %c0_17] : memref<1x2xf32, #tpu.memory_space<smem>>
    %c0_18 = arith.constant 0 : index
    %c1 = arith.constant 1 : index
    %21 = memref.load %arg12[%c0_18, %c1] : memref<1x2xf32, #tpu.memory_space<smem>>
    %22 = vector.extract_strided_slice %13 {offsets = [0, 0], sizes = [8, 1280], strides = [1, 1]} : vector<16x1280xf32> to vector<8x1280xf32>
    %23 = vector.extract_strided_slice %15 {offsets = [0, 0], sizes = [16, 1280], strides = [1, 1]} : vector<32x1280xf32> to vector<16x1280xf32>
    %c0_19 = arith.constant 0 : index
    %c0_20 = arith.constant 0 : index
    %c0_21 = arith.constant 0 : index
    %24 = vector.load %arg3[%c0_19, %c0_20, %c0_21] : memref<2x8x16xf32, #tpu.memory_space<vmem>>, vector<1x8x16xf32>
    %25 = vector.shape_cast %24 : vector<1x8x16xf32> to vector<8x16xf32>
    %26 = vector.broadcast %18 : vector<1x1280xf32> to vector<8x1280xf32>
    %27 = arith.mulf %22, %26 : vector<8x1280xf32>
    %cst_22 = arith.constant dense<0.000000e+00> : vector<8x16xf32>
    %28 = tpu.matmul %27, %23, %cst_22 {dimension_numbers = #tpu.dot_dimension_numbers<[1], [1], [0], [0], [0, 0, 1, 0], [], []>} : vector<8x1280xf32>, vector<16x1280xf32>, vector<8x16xf32> -> vector<8x16xf32>
    %29 = vector.broadcast %20 : f32 to vector<8x16xf32>
    %30 = arith.addf %28, %29 : vector<8x16xf32>
    %31 = arith.addf %30, %25 : vector<8x16xf32>
    %cst_23 = arith.constant dense<0xFF800000> : vector<16xf32>
    %32 = vector.multi_reduction <maximumf>, %31, %cst_23 [0] : vector<8x16xf32> to vector<16xf32>
    %cst_24 = arith.constant 0xFF800000 : f32
    %33 = vector.broadcast %cst_24 : f32 to vector<16xf32>
    %34 = arith.maximumf %33, %32 : vector<16xf32>
    %35 = vector.shape_cast %34 : vector<16xf32> to vector<1x16xf32>
    %36 = vector.broadcast %35 : vector<1x16xf32> to vector<8x16xf32>
    %37 = arith.subf %31, %36 : vector<8x16xf32>
    %38 = math.exp %37 : vector<8x16xf32>
    %cst_25 = arith.constant dense<0.000000e+00> : vector<16xf32>
    %39 = vector.multi_reduction <add>, %38, %cst_25 [0] : vector<8x16xf32> to vector<16xf32>
    %40 = vector.shape_cast %39 : vector<16xf32> to vector<1x16xf32>
    %41 = vector.broadcast %40 : vector<1x16xf32> to vector<8x16xf32>
    %42 = arith.divf %38, %41 : vector<8x16xf32>
    %cst_26 = arith.constant dense<0xFF800000> : vector<8xf32>
    %43 = vector.multi_reduction <maximumf>, %31, %cst_26 [1] : vector<8x16xf32> to vector<8xf32>
    %cst_27 = arith.constant 0xFF800000 : f32
    %44 = vector.broadcast %cst_27 : f32 to vector<8xf32>
    %45 = arith.maximumf %44, %43 : vector<8xf32>
    %46 = vector.shape_cast %45 : vector<8xf32> to vector<8x1xf32>
    %47 = vector.broadcast %46 : vector<8x1xf32> to vector<8x16xf32>
    %48 = arith.subf %31, %47 : vector<8x16xf32>
    %49 = math.exp %48 : vector<8x16xf32>
    %cst_28 = arith.constant dense<0.000000e+00> : vector<8xf32>
    %50 = vector.multi_reduction <add>, %49, %cst_28 [1] : vector<8x16xf32> to vector<8xf32>
    %51 = vector.shape_cast %50 : vector<8xf32> to vector<8x1xf32>
    %52 = vector.broadcast %51 : vector<8x1xf32> to vector<8x16xf32>
    %53 = arith.divf %49, %52 : vector<8x16xf32>
    %54 = vector.extract_strided_slice %0 {offsets = [0, 0], sizes = [8, 32], strides = [1, 1]} : vector<16x32xf32> to vector<8x32xf32>
    %55 = vector.extract_strided_slice %1 {offsets = [0, 0], sizes = [16, 32], strides = [1, 1]} : vector<32x32xf32> to vector<16x32xf32>
    %56 = tpu.transpose %42, [1, 0] : vector<8x16xf32> -> vector<16x8xf32>
    %cst_29 = arith.constant dense<0.000000e+00> : vector<16x32xf32>
    %57 = tpu.matmul %56, %54, %cst_29 {dimension_numbers = #tpu.dot_dimension_numbers<[1], [0], [0], [1], [0, 0, 1, 1], [], []>} : vector<16x8xf32>, vector<8x32xf32>, vector<16x32xf32> -> vector<16x32xf32>
    %cst_30 = arith.constant dense<0.000000e+00> : vector<8x32xf32>
    %58 = tpu.matmul %53, %55, %cst_30 {dimension_numbers = #tpu.dot_dimension_numbers<[1], [0], [0], [1], [0, 0, 1, 1], [], []>} : vector<8x16xf32>, vector<16x32xf32>, vector<8x32xf32> -> vector<8x32xf32>
    %59 = vector.extract_strided_slice %13 {offsets = [8, 0], sizes = [8, 1280], strides = [1, 1]} : vector<16x1280xf32> to vector<8x1280xf32>
    %60 = vector.extract_strided_slice %15 {offsets = [16, 0], sizes = [16, 1280], strides = [1, 1]} : vector<32x1280xf32> to vector<16x1280xf32>
    %c1_31 = arith.constant 1 : index
    %c0_32 = arith.constant 0 : index
    %c0_33 = arith.constant 0 : index
    %61 = vector.load %arg3[%c1_31, %c0_32, %c0_33] : memref<2x8x16xf32, #tpu.memory_space<vmem>>, vector<1x8x16xf32>
    %62 = vector.shape_cast %61 : vector<1x8x16xf32> to vector<8x16xf32>
    %63 = vector.broadcast %18 : vector<1x1280xf32> to vector<8x1280xf32>
    %64 = arith.mulf %59, %63 : vector<8x1280xf32>
    %cst_34 = arith.constant dense<0.000000e+00> : vector<8x16xf32>
    %65 = tpu.matmul %64, %60, %cst_34 {dimension_numbers = #tpu.dot_dimension_numbers<[1], [1], [0], [0], [0, 0, 1, 0], [], []>} : vector<8x1280xf32>, vector<16x1280xf32>, vector<8x16xf32> -> vector<8x16xf32>
    %66 = vector.broadcast %20 : f32 to vector<8x16xf32>
    %67 = arith.addf %65, %66 : vector<8x16xf32>
    %68 = arith.addf %67, %62 : vector<8x16xf32>
    %cst_35 = arith.constant dense<0xFF800000> : vector<16xf32>
    %69 = vector.multi_reduction <maximumf>, %68, %cst_35 [0] : vector<8x16xf32> to vector<16xf32>
    %cst_36 = arith.constant 0xFF800000 : f32
    %70 = vector.broadcast %cst_36 : f32 to vector<16xf32>
    %71 = arith.maximumf %70, %69 : vector<16xf32>
    %72 = vector.shape_cast %71 : vector<16xf32> to vector<1x16xf32>
    %73 = vector.broadcast %72 : vector<1x16xf32> to vector<8x16xf32>
    %74 = arith.subf %68, %73 : vector<8x16xf32>
    %75 = math.exp %74 : vector<8x16xf32>
    %cst_37 = arith.constant dense<0.000000e+00> : vector<16xf32>
    %76 = vector.multi_reduction <add>, %75, %cst_37 [0] : vector<8x16xf32> to vector<16xf32>
    %77 = vector.shape_cast %76 : vector<16xf32> to vector<1x16xf32>
    %78 = vector.broadcast %77 : vector<1x16xf32> to vector<8x16xf32>
    %79 = arith.divf %75, %78 : vector<8x16xf32>
    %cst_38 = arith.constant dense<0xFF800000> : vector<8xf32>
    %80 = vector.multi_reduction <maximumf>, %68, %cst_38 [1] : vector<8x16xf32> to vector<8xf32>
    %cst_39 = arith.constant 0xFF800000 : f32
    %81 = vector.broadcast %cst_39 : f32 to vector<8xf32>
    %82 = arith.maximumf %81, %80 : vector<8xf32>
    %83 = vector.shape_cast %82 : vector<8xf32> to vector<8x1xf32>
    %84 = vector.broadcast %83 : vector<8x1xf32> to vector<8x16xf32>
    %85 = arith.subf %68, %84 : vector<8x16xf32>
    %86 = math.exp %85 : vector<8x16xf32>
    %cst_40 = arith.constant dense<0.000000e+00> : vector<8xf32>
    %87 = vector.multi_reduction <add>, %86, %cst_40 [1] : vector<8x16xf32> to vector<8xf32>
    %88 = vector.shape_cast %87 : vector<8xf32> to vector<8x1xf32>
    %89 = vector.broadcast %88 : vector<8x1xf32> to vector<8x16xf32>
    %90 = arith.divf %86, %89 : vector<8x16xf32>
    %91 = vector.extract_strided_slice %0 {offsets = [8, 0], sizes = [8, 32], strides = [1, 1]} : vector<16x32xf32> to vector<8x32xf32>
    %92 = vector.extract_strided_slice %1 {offsets = [16, 0], sizes = [16, 32], strides = [1, 1]} : vector<32x32xf32> to vector<16x32xf32>
    %93 = tpu.transpose %79, [1, 0] : vector<8x16xf32> -> vector<16x8xf32>
    %cst_41 = arith.constant dense<0.000000e+00> : vector<16x32xf32>
    %94 = tpu.matmul %93, %91, %cst_41 {dimension_numbers = #tpu.dot_dimension_numbers<[1], [0], [0], [1], [0, 0, 1, 1], [], []>} : vector<16x8xf32>, vector<8x32xf32>, vector<16x32xf32> -> vector<16x32xf32>
    %cst_42 = arith.constant dense<0.000000e+00> : vector<8x32xf32>
    %95 = tpu.matmul %90, %92, %cst_42 {dimension_numbers = #tpu.dot_dimension_numbers<[1], [0], [0], [1], [0, 0, 1, 1], [], []>} : vector<8x16xf32>, vector<16x32xf32>, vector<8x32xf32> -> vector<8x32xf32>
    %96 = tpu.concatenate %57, %94 in 0 : vector<16x32xf32>, vector<16x32xf32> -> vector<32x32xf32>
    %97 = tpu.concatenate %58, %95 in 0 : vector<8x32xf32>, vector<8x32xf32> -> vector<16x32xf32>
    %c0_43 = arith.constant 0 : index
    %c0_44 = arith.constant 0 : index
    %98 = vector.load %arg6[%c0_43, %c0_44] : memref<32x1280xf32, #tpu.memory_space<vmem>>, vector<32x1280xf32>
    %cst_45 = arith.constant dense<0.000000e+00> : vector<16x1280xf32>
    %99 = tpu.matmul %97, %98, %cst_45 {dimension_numbers = #tpu.dot_dimension_numbers<[1], [0], [0], [1], [0, 0, 1, 1], [], []>} : vector<16x32xf32>, vector<32x1280xf32>, vector<16x1280xf32> -> vector<16x1280xf32>
    %100 = arith.addf %16, %99 : vector<16x1280xf32>
    %101 = math.tanh %100 : vector<16x1280xf32>
    %c0_46 = arith.constant 0 : index
    %c0_47 = arith.constant 0 : index
    %102 = vector.load %arg7[%c0_46, %c0_47] : memref<32x1280xf32, #tpu.memory_space<vmem>>, vector<32x1280xf32>
    %cst_48 = arith.constant dense<0.000000e+00> : vector<32x1280xf32>
    %103 = tpu.matmul %96, %102, %cst_48 {dimension_numbers = #tpu.dot_dimension_numbers<[1], [0], [0], [1], [0, 0, 1, 1], [], []>} : vector<32x32xf32>, vector<32x1280xf32>, vector<32x1280xf32> -> vector<32x1280xf32>
    %104 = arith.addf %17, %103 : vector<32x1280xf32>
    %105 = math.tanh %104 : vector<32x1280xf32>
    %106 = vector.extract_strided_slice %101 {offsets = [0, 0], sizes = [8, 1280], strides = [1, 1]} : vector<16x1280xf32> to vector<8x1280xf32>
    %107 = vector.extract_strided_slice %105 {offsets = [0, 0], sizes = [16, 1280], strides = [1, 1]} : vector<32x1280xf32> to vector<16x1280xf32>
    %c0_49 = arith.constant 0 : index
    %c0_50 = arith.constant 0 : index
    %c0_51 = arith.constant 0 : index
    %108 = vector.load %arg3[%c0_49, %c0_50, %c0_51] : memref<2x8x16xf32, #tpu.memory_space<vmem>>, vector<1x8x16xf32>
    %109 = vector.shape_cast %108 : vector<1x8x16xf32> to vector<8x16xf32>
    %110 = vector.broadcast %19 : vector<1x1280xf32> to vector<8x1280xf32>
    %111 = arith.mulf %106, %110 : vector<8x1280xf32>
    %cst_52 = arith.constant dense<0.000000e+00> : vector<8x16xf32>
    %112 = tpu.matmul %111, %107, %cst_52 {dimension_numbers = #tpu.dot_dimension_numbers<[1], [1], [0], [0], [0, 0, 1, 0], [], []>} : vector<8x1280xf32>, vector<16x1280xf32>, vector<8x16xf32> -> vector<8x16xf32>
    %113 = vector.broadcast %21 : f32 to vector<8x16xf32>
    %114 = arith.addf %112, %113 : vector<8x16xf32>
    %115 = arith.addf %114, %109 : vector<8x16xf32>
    %116 = arith.addf %115, %31 : vector<8x16xf32>
    %117 = arith.addf %116, %109 : vector<8x16xf32>
    %c0_53 = arith.constant 0 : index
    %c0_54 = arith.constant 0 : index
    %c0_55 = arith.constant 0 : index
    %118 = vector.load %arg13[%c0_53, %c0_54, %c0_55] : memref<2x8x16xf32, #tpu.memory_space<vmem>>, vector<1x8x16xf32>
    %119 = vector.shape_cast %118 : vector<1x8x16xf32> to vector<8x16xf32>
    %120 = vector.shape_cast %117 : vector<8x16xf32> to vector<1x8x16xf32>
    tpu.vector_store %arg13[%c0_53, %c0_54, %c0_55], %120 {strides = array<i32>} : memref<2x8x16xf32, #tpu.memory_space<vmem>>, vector<1x8x16xf32>,
    %121 = vector.extract_strided_slice %101 {offsets = [8, 0], sizes = [8, 1280], strides = [1, 1]} : vector<16x1280xf32> to vector<8x1280xf32>
    %122 = vector.extract_strided_slice %105 {offsets = [16, 0], sizes = [16, 1280], strides = [1, 1]} : vector<32x1280xf32> to vector<16x1280xf32>
    %c1_56 = arith.constant 1 : index
    %c0_57 = arith.constant 0 : index
    %c0_58 = arith.constant 0 : index
    %123 = vector.load %arg3[%c1_56, %c0_57, %c0_58] : memref<2x8x16xf32, #tpu.memory_space<vmem>>, vector<1x8x16xf32>
    %124 = vector.shape_cast %123 : vector<1x8x16xf32> to vector<8x16xf32>
    %125 = vector.broadcast %19 : vector<1x1280xf32> to vector<8x1280xf32>
    %126 = arith.mulf %121, %125 : vector<8x1280xf32>
    %cst_59 = arith.constant dense<0.000000e+00> : vector<8x16xf32>
    %127 = tpu.matmul %126, %122, %cst_59 {dimension_numbers = #tpu.dot_dimension_numbers<[1], [1], [0], [0], [0, 0, 1, 0], [], []>} : vector<8x1280xf32>, vector<16x1280xf32>, vector<8x16xf32> -> vector<8x16xf32>
    %128 = vector.broadcast %21 : f32 to vector<8x16xf32>
    %129 = arith.addf %127, %128 : vector<8x16xf32>
    %130 = arith.addf %129, %124 : vector<8x16xf32>
    %131 = arith.addf %130, %68 : vector<8x16xf32>
    %132 = arith.addf %131, %124 : vector<8x16xf32>
    %c1_60 = arith.constant 1 : index
    %c0_61 = arith.constant 0 : index
    %c0_62 = arith.constant 0 : index
    %133 = vector.load %arg13[%c1_60, %c0_61, %c0_62] : memref<2x8x16xf32, #tpu.memory_space<vmem>>, vector<1x8x16xf32>
    %134 = vector.shape_cast %133 : vector<1x8x16xf32> to vector<8x16xf32>
    %135 = vector.shape_cast %132 : vector<8x16xf32> to vector<1x8x16xf32>
    tpu.vector_store %arg13[%c1_60, %c0_61, %c0_62], %135 {strides = array<i32>} : memref<2x8x16xf32, #tpu.memory_space<vmem>>, vector<1x8x16xf32>,
    return
  }
  func.func @transform_0(%arg0: i32) -> (i32, i32) {
    %c0_i32 = arith.constant 0 : i32
    %c0_i32_0 = arith.constant 0 : i32
    %c0_i32_1 = arith.constant 0 : i32
    return %c0_i32, %c0_i32_0 : i32, i32
  }
  func.func @transform_1(%arg0: i32) -> (i32, i32) {
    %c0_i32 = arith.constant 0 : i32
    %c0_i32_0 = arith.constant 0 : i32
    %c0_i32_1 = arith.constant 0 : i32
    return %c0_i32, %c0_i32_0 : i32, i32
  }
  func.func @transform_2(%arg0: i32) -> (i32, i32, i32) {
    %c0_i32 = arith.constant 0 : i32
    %c0_i32_0 = arith.constant 0 : i32
    %c0_i32_1 = arith.constant 0 : i32
    %c0_i32_2 = arith.constant 0 : i32
    return %c0_i32, %c0_i32_0, %c0_i32_1 : i32, i32, i32
  }
  func.func @transform_3(%arg0: i32) -> (i32, i32) {
    %c0_i32 = arith.constant 0 : i32
    %c0_i32_0 = arith.constant 0 : i32
    %c0_i32_1 = arith.constant 0 : i32
    return %c0_i32, %c0_i32_0 : i32, i32
  }
  func.func @transform_4(%arg0: i32) -> (i32, i32) {
    %c0_i32 = arith.constant 0 : i32
    %c0_i32_0 = arith.constant 0 : i32
    %c0_i32_1 = arith.constant 0 : i32
    return %c0_i32, %c0_i32_0 : i32, i32
  }
  func.func @transform_5(%arg0: i32) -> (i32, i32) {
    %c0_i32 = arith.constant 0 : i32
    %c0_i32_0 = arith.constant 0 : i32
    %c0_i32_1 = arith.constant 0 : i32
    return %c0_i32, %c0_i32_0 : i32, i32
  }
  func.func @transform_6(%arg0: i32) -> (i32, i32) {
    %c0_i32 = arith.constant 0 : i32
    %c0_i32_0 = arith.constant 0 : i32
    %c0_i32_1 = arith.constant 0 : i32
    return %c0_i32, %c0_i32_0 : i32, i32
  }
  func.func @transform_7(%arg0: i32) -> (i32, i32) {
    %c0_i32 = arith.constant 0 : i32
    %c0_i32_0 = arith.constant 0 : i32
    %c0_i32_1 = arith.constant 0 : i32
    return %c0_i32, %c0_i32_0 : i32, i32
  }
  func.func @transform_8(%arg0: i32) -> (i32, i32) {
    %c0_i32 = arith.constant 0 : i32
    %c0_i32_0 = arith.constant 0 : i32
    %c0_i32_1 = arith.constant 0 : i32
    return %c0_i32, %c0_i32_0 : i32, i32
  }
  func.func @transform_9(%arg0: i32) -> (i32, i32) {
    %c0_i32 = arith.constant 0 : i32
    %c0_i32_0 = arith.constant 0 : i32
    %c0_i32_1 = arith.constant 0 : i32
    return %c0_i32, %c0_i32_0 : i32, i32
  }
  func.func @transform_10(%arg0: i32) -> (i32, i32) {
    %c0_i32 = arith.constant 0 : i32
    %c0_i32_0 = arith.constant 0 : i32
    %c0_i32_1 = arith.constant 0 : i32
    return %c0_i32, %c0_i32_0 : i32, i32
  }
  func.func @transform_11(%arg0: i32) -> (i32, i32) {
    %c0_i32 = arith.constant 0 : i32
    %c0_i32_0 = arith.constant 0 : i32
    %c0_i32_1 = arith.constant 0 : i32
    return %c0_i32, %c0_i32_0 : i32, i32
  }
  func.func @transform_12(%arg0: i32) -> (i32, i32, i32) {
    %c0_i32 = arith.constant 0 : i32
    %c0_i32_0 = arith.constant 0 : i32
    %c0_i32_1 = arith.constant 0 : i32
    %c0_i32_2 = arith.constant 0 : i32
    return %c0_i32, %c0_i32_0, %c0_i32_1 : i32, i32, i32
  }
}

</mosaic_0001>

<llo_original>
// kernel: tpu_custom_call.1
$region0: #{tpu_custom_call.1}
  #allocation0 [shape = 'u32[]', space=smem, size = 0x4, offset = 0x4, fixed_abs, tag = 'smem constant byte address 0x4 - core index']
  #allocation1 [shape = 'u32[72,128]{1,0:T(1,128)}', space=vmem, size = 0x9000, scoped, tag = 'internal scratch']
  %s0 = inlined_call_operand.hbm [shape: f32[16,32], index: 0, kind: input, shape index: {}]
  %s1 = inlined_call_operand.hbm [shape: f32[32,32], index: 1, kind: input, shape index: {}]
  %s2 = inlined_call_operand.hbm [shape: f32[2,8,16], index: 2, kind: input, shape index: {}]
  %s3 = inlined_call_operand.hbm [shape: f32[32,2560], index: 3, kind: input, shape index: {}]
  %s4 = inlined_call_operand.hbm [shape: f32[32,2560], index: 4, kind: input, shape index: {}]
  %s5 = inlined_call_operand.hbm [shape: f32[32,1280], index: 5, kind: input, shape index: {}]
  %s6 = inlined_call_operand.hbm [shape: f32[32,1280], index: 6, kind: input, shape index: {}]
  %s7 = inlined_call_operand.hbm [shape: f32[1,2560], index: 7, kind: input, shape index: {}]
  %s8 = inlined_call_operand.hbm [shape: f32[1,2560], index: 8, kind: input, shape index: {}]
  %s9 = inlined_call_operand.hbm [shape: f32[1,1280], index: 9, kind: input, shape index: {}]
  %s10 = inlined_call_operand.hbm [shape: f32[1,1280], index: 10, kind: input, shape index: {}]
  %s11 = inlined_call_operand.vmem [shape: f32[1,2], index: 11, kind: input, shape index: {}]
  %s12 = inlined_call_operand.hbm [shape: f32[2,8,16], index: 12, kind: output, shape index: {}]
  %s13 = sld [smem:[#allocation0]]
  $region106: #{tpu_custom_call.1} parent=0
    _
  %s15 = ssub.s32 1, %s13
  %s16 = scalar_select 0, %s15, %s13
  $region1: #{tpu_custom_call.1} parent=0
    #allocation2 [shape = 'u8[8192]{0}', space=vmem, size = 0x2000, scoped, tag = 'input window, operand 0, single buffered']
    #allocation3 [shape = 's32[1]{0}', space=sflag, size = 0x4, scoped, tag = 'scoped memory for tpu_custom_call.1']
    #allocation4 [shape = 's32[1]{0}', space=sflag, size = 0x4, scoped, tag = 'scoped memory for tpu_custom_call.1']
    #allocation5 [shape = 's32[1]{0}', space=sflag, size = 0x4, scoped, tag = 'scoped memory for tpu_custom_call.1']
    #allocation6 [shape = 'u8[16384]{0}', space=vmem, size = 0x4000, scoped, tag = 'input window, operand 1, single buffered']
    #allocation7 [shape = 's32[1]{0}', space=sflag, size = 0x4, scoped, tag = 'scoped memory for tpu_custom_call.1']
    #allocation8 [shape = 'u8[8192]{0}', space=vmem, size = 0x2000, scoped, tag = 'input window, operand 2, single buffered']
    #allocation9 [shape = 'u8[327680]{0}', space=vmem, size = 0x50000, scoped, tag = 'input window, operand 3, single buffered']
    #allocation10 [shape = 's32[1]{0}', space=sflag, size = 0x4, scoped, tag = 'scoped memory for tpu_custom_call.1']
    #allocation11 [shape = 'u8[327680]{0}', space=vmem, size = 0x50000, scoped, tag = 'input window, operand 4, single buffered']
    #allocation12 [shape = 'u8[163840]{0}', space=vmem, size = 0x28000, scoped, tag = 'input window, operand 5, single buffered']
    #allocation13 [shape = 's32[1]{0}', space=sflag, size = 0x4, scoped, tag = 'scoped memory for tpu_custom_call.1']
    #allocation14 [shape = 'u8[163840]{0}', space=vmem, size = 0x28000, scoped, tag = 'input window, operand 6, single buffered']
    #allocation15 [shape = 'u8[10240]{0}', space=vmem, size = 0x2800, scoped, tag = 'input window, operand 7, single buffered']
    #allocation16 [shape = 's32[1]{0}', space=sflag, size = 0x4, scoped, tag = 'scoped memory for tpu_custom_call.1']
    #allocation17 [shape = 'u8[10240]{0}', space=vmem, size = 0x2800, scoped, tag = 'input window, operand 8, single buffered']
    #allocation18 [shape = 'u8[5120]{0}', space=vmem, size = 0x1400, scoped, tag = 'input window, operand 9, single buffered']
    #allocation19 [shape = 's32[1]{0}', space=sflag, size = 0x4, scoped, tag = 'scoped memory for tpu_custom_call.1']
    #allocation20 [shape = 'u8[5120]{0}', space=vmem, size = 0x1400, scoped, tag = 'input window, operand 10, single buffered']
    #allocation21 [shape = 'u8[512]{0}', space=smem, size = 0x200, scoped, tag = 'input window, operand 11, single buffered']
    #allocation22 [shape = 'u8[8192]{0}', space=vmem, size = 0x2000, scoped, tag = 'output window, operand 0, single buffered']
    %17 = vsyncpa [#allocation3], 0
    %18 = vsyncpa [#allocation7], 0
    %19 = vsyncpa [#allocation10], 0
    %20 = vsyncpa [#allocation13], 0
    %21 = vsyncpa [#allocation16], 0
    %22 = vsyncpa [#allocation19], 0
    %23 = vsyncpa [#allocation5], 0
    %24 = vsyncpa [#allocation4], 0
    // Predicated region
    $region2: #{tpu_custom_call.1} parent=1 // pred_check
      _
    $region3: #{tpu_custom_call.1} parent=1 // pred_check_branch
      %26 = sbr.rel (0) target = $region5
    $region4: #{tpu_custom_call.1} parent=1 // pred_region
      %28 = vsyncadd [#allocation3], 0
      %s29 = sshll.u32 %s0, 4
      %s30 = int_to_ptr.hbm [resolvable:$true] %s29
      %s31 = sshll.u32 [#allocation2], 4
      %s32 = int_to_ptr.vmem [resolvable:$true] %s31
      %37 = dma.hbm_to_vmem [thread:$0]  %s30, 256, %s32, [#allocation3], 128, 128, 8
    $region5: #{tpu_custom_call.1} parent=1 // pred_fallthru
      _
    // Predicated region
    $region6: #{tpu_custom_call.1} parent=1 // pred_check
      _
    $region7: #{tpu_custom_call.1} parent=1 // pred_check_branch
      %39 = sbr.rel (0) target = $region9
    $region8: #{tpu_custom_call.1} parent=1 // pred_region
      %41 = vsyncadd [#allocation7], 0
      %s42 = sshll.u32 %s1, 4
      %s43 = int_to_ptr.hbm [resolvable:$true] %s42
      %s44 = sshll.u32 [#allocation6], 4
      %s45 = int_to_ptr.vmem [resolvable:$true] %s44
      %50 = dma.hbm_to_vmem [thread:$0]  %s43, 512, %s45, [#allocation7], 128, 128, 8
    $region9: #{tpu_custom_call.1} parent=1 // pred_fallthru
      _
    // Predicated region
    $region10: #{tpu_custom_call.1} parent=1 // pred_check
      _
    $region11: #{tpu_custom_call.1} parent=1 // pred_check_branch
      %52 = sbr.rel (0) target = $region13
    $region12: #{tpu_custom_call.1} parent=1 // pred_region
      %54 = vsyncadd [#allocation7], 0
      %s55 = sshll.u32 %s2, 4
      %s56 = int_to_ptr.hbm [resolvable:$true] %s55
      %s57 = sshll.u32 [#allocation8], 4
      %s58 = int_to_ptr.vmem [resolvable:$true] %s57
      %63 = dma.hbm_to_vmem [thread:$0]  %s56, 256, %s58, [#allocation7], 128, 128, 8
    $region13: #{tpu_custom_call.1} parent=1 // pred_fallthru
      _
    // Predicated region
    $region14: #{tpu_custom_call.1} parent=1 // pred_check
      _
    $region15: #{tpu_custom_call.1} parent=1 // pred_check_branch
      %65 = sbr.rel (0) target = $region17
    $region16: #{tpu_custom_call.1} parent=1 // pred_region
      %67 = vsyncadd [#allocation10], 0
      %s68 = sshll.u32 %s3, 4
      %s69 = int_to_ptr.hbm [resolvable:$true] %s68
      %s70 = sshll.u32 [#allocation9], 4
      %s71 = int_to_ptr.vmem [resolvable:$true] %s70
      %76 = dma.hbm_to_vmem [thread:$0]  %s69, 10240, %s71, [#allocation10], 2560, 2560, 160
    $region17: #{tpu_custom_call.1} parent=1 // pred_fallthru
      _
    // Predicated region
    $region18: #{tpu_custom_call.1} parent=1 // pred_check
      _
    $region19: #{tpu_custom_call.1} parent=1 // pred_check_branch
      %78 = sbr.rel (0) target = $region21
    $region20: #{tpu_custom_call.1} parent=1 // pred_region
      %80 = vsyncadd [#allocation10], 0
      %s81 = sshll.u32 %s4, 4
      %s82 = int_to_ptr.hbm [resolvable:$true] %s81
      %s83 = sshll.u32 [#allocation11], 4
      %s84 = int_to_ptr.vmem [resolvable:$true] %s83
      %89 = dma.hbm_to_vmem [thread:$0]  %s82, 10240, %s84, [#allocation10], 2560, 2560, 160
    $region21: #{tpu_custom_call.1} parent=1 // pred_fallthru
      _
    // Predicated region
    $region22: #{tpu_custom_call.1} parent=1 // pred_check
      _
    $region23: #{tpu_custom_call.1} parent=1 // pred_check_branch
      %91 = sbr.rel (0) target = $region25
    $region24: #{tpu_custom_call.1} parent=1 // pred_region
      %93 = vsyncadd [#allocation13], 0
      %s94 = sshll.u32 %s5, 4
      %s95 = int_to_ptr.hbm [resolvable:$true] %s94
      %s96 = sshll.u32 [#allocation12], 4
      %s97 = int_to_ptr.vmem [resolvable:$true] %s96
      %102 = dma.hbm_to_vmem [thread:$0]  %s95, 5120, %s97, [#allocation13], 1280, 1280, 80
    $region25: #{tpu_custom_call.1} parent=1 // pred_fallthru
      _
    // Predicated region
    $region26: #{tpu_custom_call.1} parent=1 // pred_check
      _
    $region27: #{tpu_custom_call.1} parent=1 // pred_check_branch
      %104 = sbr.rel (0) target = $region29
    $region28: #{tpu_custom_call.1} parent=1 // pred_region
      %106 = vsyncadd [#allocation13], 0
      %s107 = sshll.u32 %s6, 4
      %s108 = int_to_ptr.hbm [resolvable:$true] %s107
      %s109 = sshll.u32 [#allocation14], 4
      %s110 = int_to_ptr.vmem [resolvable:$true] %s109
      %115 = dma.hbm_to_vmem [thread:$0]  %s108, 5120, %s110, [#allocation13], 1280, 1280, 80
    $region29: #{tpu_custom_call.1} parent=1 // pred_fallthru
      _
    // Predicated region
    $region30: #{tpu_custom_call.1} parent=1 // pred_check
      _
    $region31: #{tpu_custom_call.1} parent=1 // pred_check_branch
      %117 = sbr.rel (0) target = $region33
    $region32: #{tpu_custom_call.1} parent=1 // pred_region
      %119 = vsyncadd [#allocation16], 0
      %s121 = sshll.u32 %s7, 4
      %s122 = int_to_ptr.hbm [resolvable:$true] %s121
      %s123 = sshll.u32 [#allocation15], 4
      %s124 = int_to_ptr.vmem [resolvable:$true] %s123
      %126 = dma.hbm_to_vmem [thread:$0]  %s122, 320, %s124, [#allocation16]
    $region33: #{tpu_custom_call.1} parent=1 // pred_fallthru
      _
    // Predicated region
    $region34: #{tpu_custom_call.1} parent=1 // pred_check
      _
    $region35: #{tpu_custom_call.1} parent=1 // pred_check_branch
      %128 = sbr.rel (0) target = $region37
    $region36: #{tpu_custom_call.1} parent=1 // pred_region
      %130 = vsyncadd [#allocation16], 0
      %s132 = sshll.u32 %s8, 4
      %s133 = int_to_ptr.hbm [resolvable:$true] %s132
      %s134 = sshll.u32 [#allocation17], 4
      %s135 = int_to_ptr.vmem [resolvable:$true] %s134
      %137 = dma.hbm_to_vmem [thread:$0]  %s133, 320, %s135, [#allocation16]
    $region37: #{tpu_custom_call.1} parent=1 // pred_fallthru
      _
    // Predicated region
    $region38: #{tpu_custom_call.1} parent=1 // pred_check
      _
    $region39: #{tpu_custom_call.1} parent=1 // pred_check_branch
      %139 = sbr.rel (0) target = $region41
    $region40: #{tpu_custom_call.1} parent=1 // pred_region
      %141 = vsyncadd [#allocation19], 0
      %s143 = sshll.u32 %s9, 4
      %s144 = int_to_ptr.hbm [resolvable:$true] %s143
      %s145 = sshll.u32 [#allocation18], 4
      %s146 = int_to_ptr.vmem [resolvable:$true] %s145
      %148 = dma.hbm_to_vmem [thread:$0]  %s144, 160, %s146, [#allocation19]
    $region41: #{tpu_custom_call.1} parent=1 // pred_fallthru
      _
    // Predicated region
    $region42: #{tpu_custom_call.1} parent=1 // pred_check
      _
    $region43: #{tpu_custom_call.1} parent=1 // pred_check_branch
      %150 = sbr.rel (0) target = $region45
    $region44: #{tpu_custom_call.1} parent=1 // pred_region
      %152 = vsyncadd [#allocation19], 0
      %s154 = sshll.u32 %s10, 4
      %s155 = int_to_ptr.hbm [resolvable:$true] %s154
      %s156 = sshll.u32 [#allocation20], 4
      %s157 = int_to_ptr.vmem [resolvable:$true] %s156
      %159 = dma.hbm_to_vmem [thread:$0]  %s155, 160, %s157, [#allocation19]
    $region45: #{tpu_custom_call.1} parent=1 // pred_fallthru
      _
    // Predicated region
    $region46: #{tpu_custom_call.1} parent=1 // pred_check
      _
    $region47: #{tpu_custom_call.1} parent=1 // pred_check_branch
      %161 = sbr.rel (0) target = $region49
    $region48: #{tpu_custom_call.1} parent=1 // pred_region
      %163 = vsyncadd [#allocation5], 0
      %s165 = sshll.u32 %s11, 4
      %s166 = int_to_ptr.vmem [resolvable:$true] %s165
      %168 = dma.vmem_to_smem %s166, 16, [#allocation21], [#allocation5]
    $region49: #{tpu_custom_call.1} parent=1 // pred_fallthru
      _
    // Predicated region
    $region50: #{tpu_custom_call.1} parent=1 // pred_check
      _
    $region51: #{tpu_custom_call.1} parent=1 // pred_check_branch
      %170 = sbr.rel (0) target = $region53
    $region52: #{tpu_custom_call.1} parent=1 // pred_region
      %172 = dma.done [#allocation3], 256
    $region53: #{tpu_custom_call.1} parent=1 // pred_fallthru
      _
    // Predicated region
    $region54: #{tpu_custom_call.1} parent=1 // pred_check
      _
    $region55: #{tpu_custom_call.1} parent=1 // pred_check_branch
      %174 = sbr.rel (0) target = $region57
    $region56: #{tpu_custom_call.1} parent=1 // pred_region
      %176 = dma.done [#allocation7], 512
    $region57: #{tpu_custom_call.1} parent=1 // pred_fallthru
      _
    // Predicated region
    $region58: #{tpu_custom_call.1} parent=1 // pred_check
      _
    $region59: #{tpu_custom_call.1} parent=1 // pred_check_branch
      %178 = sbr.rel (0) target = $region61
    $region60: #{tpu_custom_call.1} parent=1 // pred_region
      %180 = dma.done [#allocation7], 256
    $region61: #{tpu_custom_call.1} parent=1 // pred_fallthru
      _
    // Predicated region
    $region62: #{tpu_custom_call.1} parent=1 // pred_check
      _
    $region63: #{tpu_custom_call.1} parent=1 // pred_check_branch
      %182 = sbr.rel (0) target = $region65
    $region64: #{tpu_custom_call.1} parent=1 // pred_region
      %184 = dma.done [#allocation10], 10240
    $region65: #{tpu_custom_call.1} parent=1 // pred_fallthru
      _
    // Predicated region
    $region66: #{tpu_custom_call.1} parent=1 // pred_check
      _
    $region67: #{tpu_custom_call.1} parent=1 // pred_check_branch
      %186 = sbr.rel (0) target = $region69
    $region68: #{tpu_custom_call.1} parent=1 // pred_region
      %188 = dma.done [#allocation10], 10240
    $region69: #{tpu_custom_call.1} parent=1 // pred_fallthru
      _
    // Predicated region
    $region70: #{tpu_custom_call.1} parent=1 // pred_check
      _
    $region71: #{tpu_custom_call.1} parent=1 // pred_check_branch
      %190 = sbr.rel (0) target = $region73
    $region72: #{tpu_custom_call.1} parent=1 // pred_region
      %192 = dma.done [#allocation13], 5120
    $region73: #{tpu_custom_call.1} parent=1 // pred_fallthru
      _
    // Predicated region
    $region74: #{tpu_custom_call.1} parent=1 // pred_check
      _
    $region75: #{tpu_custom_call.1} parent=1 // pred_check_branch
      %194 = sbr.rel (0) target = $region77
    $region76: #{tpu_custom_call.1} parent=1 // pred_region
      %196 = dma.done [#allocation13], 5120
    $region77: #{tpu_custom_call.1} parent=1 // pred_fallthru
      _
    // Predicated region
    $region78: #{tpu_custom_call.1} parent=1 // pred_check
      _
    $region79: #{tpu_custom_call.1} parent=1 // pred_check_branch
      %198 = sbr.rel (0) target = $region81
    $region80: #{tpu_custom_call.1} parent=1 // pred_region
      %200 = dma.done [#allocation16], 320
    $region81: #{tpu_custom_call.1} parent=1 // pred_fallthru
      _
    // Predicated region
    $region82: #{tpu_custom_call.1} parent=1 // pred_check
      _
    $region83: #{tpu_custom_call.1} parent=1 // pred_check_branch
      %202 = sbr.rel (0) target = $region85
    $region84: #{tpu_custom_call.1} parent=1 // pred_region
      %204 = dma.done [#allocation16], 320
    $region85: #{tpu_custom_call.1} parent=1 // pred_fallthru
      _
    // Predicated region
    $region86: #{tpu_custom_call.1} parent=1 // pred_check
      _
    $region87: #{tpu_custom_call.1} parent=1 // pred_check_branch
      %206 = sbr.rel (0) target = $region89
    $region88: #{tpu_custom_call.1} parent=1 // pred_region
      %208 = dma.done [#allocation19], 160
    $region89: #{tpu_custom_call.1} parent=1 // pred_fallthru
      _
    // Predicated region
    $region90: #{tpu_custom_call.1} parent=1 // pred_check
      _
    $region91: #{tpu_custom_call.1} parent=1 // pred_check_branch
      %210 = sbr.rel (0) target = $region93
    $region92: #{tpu_custom_call.1} parent=1 // pred_region
      %212 = dma.done [#allocation19], 160
    $region93: #{tpu_custom_call.1} parent=1 // pred_fallthru
      _
    // Predicated region
    $region94: #{tpu_custom_call.1} parent=1 // pred_check
      _
    $region95: #{tpu_custom_call.1} parent=1 // pred_check_branch
      %214 = sbr.rel (0) target = $region97
    $region96: #{tpu_custom_call.1} parent=1 // pred_region
      %216 = dma.done [#allocation5], 16
    $region97: #{tpu_custom_call.1} parent=1 // pred_fallthru
      _
    %217 = sfence
    %v218 = vld [vmem:[#allocation2] sm:$0xff]
    %v219 = vld [vmem:[#allocation2 + $0x8] sm:$0xff]
    %v220 = vld [vmem:[#allocation6] sm:$0xff]
    %v221 = vld [vmem:[#allocation6 + $0x8] sm:$0xff]
    %v222 = vld [vmem:[#allocation6 + $0x10] sm:$0xff]
    %v223 = vld [vmem:[#allocation6 + $0x18] sm:$0xff]
    %v224 = vld [vmem:[#allocation9] sm:$0xff]
    %v225 = vld [vmem:[#allocation9 + $0x8] sm:$0xff]
    %v226 = vld [vmem:[#allocation9 + $0x10] sm:$0xff]
    %v227 = vld [vmem:[#allocation9 + $0x18] sm:$0xff]
    %v228 = vld [vmem:[#allocation9 + $0x20] sm:$0xff]
    %v229 = vld [vmem:[#allocation9 + $0x28] sm:$0xff]
    %v230 = vld [vmem:[#allocation9 + $0x30] sm:$0xff]
    %v231 = vld [vmem:[#allocation9 + $0x38] sm:$0xff]
    %v232 = vld [vmem:[#allocation9 + $0x40] sm:$0xff]
    %v233 = vld [vmem:[#allocation9 + $0x48] sm:$0xff]
    %v234 = vld [vmem:[#allocation9 + $0x50] sm:$0xff]
    %v235 = vld [vmem:[#allocation9 + $0x58] sm:$0xff]
    %v236 = vld [vmem:[#allocation9 + $0x60] sm:$0xff]
    %v237 = vld [vmem:[#allocation9 + $0x68] sm:$0xff]
    %v238 = vld [vmem:[#allocation9 + $0x70] sm:$0xff]
    %v239 = vld [vmem:[#allocation9 + $0x78] sm:$0xff]
    %v240 = vld [vmem:[#allocation9 + $0x80] sm:$0xff]
    %v241 = vld [vmem:[#allocation9 + $0x88] sm:$0xff]
    %v242 = vld [vmem:[#allocation9 + $0x90] sm:$0xff]
    %v243 = vld [vmem:[#allocation9 + $0x98] sm:$0xff]
    %v244 = vld [vmem:[#allocation9 + $0xa0] sm:$0xff]
    %v245 = vld [vmem:[#allocation9 + $0xa8] sm:$0xff]
    %v246 = vld [vmem:[#allocation9 + $0xb0] sm:$0xff]
    %v247 = vld [vmem:[#allocation9 + $0xb8] sm:$0xff]
    %v248 = vld [vmem:[#allocation9 + $0xc0] sm:$0xff]
    %v249 = vld [vmem:[#allocation9 + $0xc8] sm:$0xff]
    %v250 = vld [vmem:[#allocation9 + $0xd0] sm:$0xff]
    %v251 = vld [vmem:[#allocation9 + $0xd8] sm:$0xff]
    %v252 = vld [vmem:[#allocation9 + $0xe0] sm:$0xff]
    %v253 = vld [vmem:[#allocation9 + $0xe8] sm:$0xff]
    %v254 = vld [vmem:[#allocation9 + $0xf0] sm:$0xff]
    %v255 = vld [vmem:[#allocation9 + $0xf8] sm:$0xff]
    %v256 = vld [vmem:[#allocation9 + $0x100] sm:$0xff]
    %v257 = vld [vmem:[#allocation9 + $0x108] sm:$0xff]
    %v258 = vld [vmem:[#allocation9 + $0x110] sm:$0xff]
    %v259 = vld [vmem:[#allocation9 + $0x118] sm:$0xff]
    %v260 = vld [vmem:[#allocation9 + $0x120] sm:$0xff]
    %v261 = vld [vmem:[#allocation9 + $0x128] sm:$0xff]
    %v262 = vld [vmem:[#allocation9 + $0x130] sm:$0xff]
    %v263 = vld [vmem:[#allocation9 + $0x138] sm:$0xff]
    %v264 = vld [vmem:[#allocation9 + $0x140] sm:$0xff]
    %v265 = vld [vmem:[#allocation9 + $0x148] sm:$0xff]
    %v266 = vld [vmem:[#allocation9 + $0x150] sm:$0xff]
    %v267 = vld [vmem:[#allocation9 + $0x158] sm:$0xff]
    %v268 = vld [vmem:[#allocation9 + $0x160] sm:$0xff]
    %v269 = vld [vmem:[#allocation9 + $0x168] sm:$0xff]
    %v270 = vld [vmem:[#allocation9 + $0x170] sm:$0xff]
    %v271 = vld [vmem:[#allocation9 + $0x178] sm:$0xff]
    %v272 = vld [vmem:[#allocation9 + $0x180] sm:$0xff]
    %v273 = vld [vmem:[#allocation9 + $0x188] sm:$0xff]
    %v274 = vld [vmem:[#allocation9 + $0x190] sm:$0xff]
    %v275 = vld [vmem:[#allocation9 + $0x198] sm:$0xff]
    %v276 = vld [vmem:[#allocation9 + $0x1a0] sm:$0xff]
    %v277 = vld [vmem:[#allocation9 + $0x1a8] sm:$0xff]
    %v278 = vld [vmem:[#allocation9 + $0x1b0] sm:$0xff]
    %v279 = vld [vmem:[#allocation9 + $0x1b8] sm:$0xff]
    %v280 = vld [vmem:[#allocation9 + $0x1c0] sm:$0xff]
    %v281 = vld [vmem:[#allocation9 + $0x1c8] sm:$0xff]
    %v282 = vld [vmem:[#allocation9 + $0x1d0] sm:$0xff]
    %v283 = vld [vmem:[#allocation9 + $0x1d8] sm:$0xff]
    %v284 = vld [vmem:[#allocation9 + $0x1e0] sm:$0xff]
    %v285 = vld [vmem:[#allocation9 + $0x1e8] sm:$0xff]
    %v286 = vld [vmem:[#allocation9 + $0x1f0] sm:$0xff]
    %v287 = vld [vmem:[#allocation9 + $0x1f8] sm:$0xff]
    %v288 = vld [vmem:[#allocation9 + $0x200] sm:$0xff]
    %v289 = vld [vmem:[#allocation9 + $0x208] sm:$0xff]
    %v290 = vld [vmem:[#allocation9 + $0x210] sm:$0xff]
    %v291 = vld [vmem:[#allocation9 + $0x218] sm:$0xff]
    %v292 = vld [vmem:[#allocation9 + $0x220] sm:$0xff]
    %v293 = vld [vmem:[#allocation9 + $0x228] sm:$0xff]
    %v294 = vld [vmem:[#allocation9 + $0x230] sm:$0xff]
    %v295 = vld [vmem:[#allocation9 + $0x238] sm:$0xff]
    %v296 = vld [vmem:[#allocation9 + $0x240] sm:$0xff]
    %v297 = vld [vmem:[#allocation9 + $0x248] sm:$0xff]
    %v298 = vld [vmem:[#allocation9 + $0x250] sm:$0xff]
    %v299 = vld [vmem:[#allocation9 + $0x258] sm:$0xff]
    %v300 = vld [vmem:[#allocation9 + $0x260] sm:$0xff]
    %v301 = vld [vmem:[#allocation9 + $0x268] sm:$0xff]
    %v302 = vld [vmem:[#allocation9 + $0x270] sm:$0xff]
    %v303 = vld [vmem:[#allocation9 + $0x278] sm:$0xff]
    %v304 = vld [vmem:[#allocation15] sm:$0xff]
    %v305 = vld [vmem:[#allocation15 + $0x8] sm:$0xff]
    %v306 = vld [vmem:[#allocation15 + $0x10] sm:$0xf]
    %v310 = vperm.slane %v304, 0
    %v311 = vperm.slane %v304, 1
    %v312 = vperm.slane %v304, 2
    %v313 = vperm.slane %v304, 3
    %v314 = vperm.slane %v304, 4
    %v315 = vperm.slane %v304, 5
    %v316 = vperm.slane %v304, 6
    %v317 = vperm.slane %v304, 7
    %v318 = vperm.slane %v305, 0
    %v319 = vperm.slane %v305, 1
    %v320 = vperm.slane %v305, 2
    %v321 = vperm.slane %v305, 3
    %v322 = vperm.slane %v305, 4
    %v323 = vperm.slane %v305, 5
    %v324 = vperm.slane %v305, 6
    %v325 = vperm.slane %v305, 7
    %v326 = vperm.slane %v306, 0
    %v327 = vperm.slane %v306, 1
    %v328 = vperm.slane %v306, 2
    %v329 = vperm.slane %v306, 3
    %vm350 = vcmask 261120
    %v352 = vsel %vm350, %v218, 0
    %v355 = vsel %vm350, %v219, 0
    %357 = vmatpush.msra.mxu0 0.0
    %358 = vmatpush.msra.mxu0 0.0
    %359 = vmatpush.msra.mxu0 0.0
    %360 = vmatpush.msra.mxu0 0.0
    %361 = vmatpush.msra.mxu0 0.0
    %362 = vmatpush.msra.mxu0 0.0
    %363 = vmatpush.msra.mxu0 0.0
    %364 = vmatpush.msra.mxu0 0.0
    %365 = vmatpush.msra.mxu0 0.0
    %366 = vmatpush.msra.mxu0 0.0
    %367 = vmatpush.msra.mxu0 0.0
    %368 = vmatpush.msra.mxu0 0.0
    %369 = vmatpush.msra.mxu0 %v284
    %370 = vmatpush.msra.mxu0 %v264
    %371 = vmatpush.msra.mxu0 %v244
    %372 = vmatpush.msra.mxu0 %v224
    %373 = vmatmul.f32.gmra.mxu0 %v352
    %v374 = vpop.f32.mrf.mxu0
    %v375 = vadd.f32 %v310, %v374
    %376 = vmatmul.f32.gmra.mxu0 %v355
    %v377 = vpop.f32.mrf.mxu0
    %v378 = vadd.f32 %v310, %v377
    %379 = vdwg.mxu0
    %380 = vmatpush.msra.mxu0 0.0
    %381 = vmatpush.msra.mxu0 0.0
    %382 = vmatpush.msra.mxu0 0.0
    %383 = vmatpush.msra.mxu0 0.0
    %384 = vmatpush.msra.mxu0 0.0
    %385 = vmatpush.msra.mxu0 0.0
    %386 = vmatpush.msra.mxu0 0.0
    %387 = vmatpush.msra.mxu0 0.0
    %388 = vmatpush.msra.mxu0 0.0
    %389 = vmatpush.msra.mxu0 0.0
    %390 = vmatpush.msra.mxu0 0.0
    %391 = vmatpush.msra.mxu0 0.0
    %392 = vmatpush.msra.mxu0 %v285
    %393 = vmatpush.msra.mxu0 %v265
    %394 = vmatpush.msra.mxu0 %v245
    %395 = vmatpush.msra.mxu0 %v225
    %396 = vmatmul.f32.gmra.mxu0 %v352
    %v397 = vpop.f32.mrf.mxu0
    %v398 = vadd.f32 %v311, %v397
    %399 = vmatmul.f32.gmra.mxu0 %v355
    %v400 = vpop.f32.mrf.mxu0
    %v401 = vadd.f32 %v311, %v400
    %402 = vdwg.mxu0
    %403 = vmatpush.msra.mxu0 0.0
    %404 = vmatpush.msra.mxu0 0.0
    %405 = vmatpush.msra.mxu0 0.0
    %406 = vmatpush.msra.mxu0 0.0
    %407 = vmatpush.msra.mxu0 0.0
    %408 = vmatpush.msra.mxu0 0.0
    %409 = vmatpush.msra.mxu0 0.0
    %410 = vmatpush.msra.mxu0 0.0
    %411 = vmatpush.msra.mxu0 0.0
    %412 = vmatpush.msra.mxu0 0.0
    %413 = vmatpush.msra.mxu0 0.0
    %414 = vmatpush.msra.mxu0 0.0
    %415 = vmatpush.msra.mxu0 %v286
    %416 = vmatpush.msra.mxu0 %v266
    %417 = vmatpush.msra.mxu0 %v246
    %418 = vmatpush.msra.mxu0 %v226
    %419 = vmatmul.f32.gmra.mxu0 %v352
    %v420 = vpop.f32.mrf.mxu0
    %v421 = vadd.f32 %v312, %v420
    %422 = vmatmul.f32.gmra.mxu0 %v355
    %v423 = vpop.f32.mrf.mxu0
    %v424 = vadd.f32 %v312, %v423
    %425 = vdwg.mxu0
    %426 = vmatpush.msra.mxu0 0.0
    %427 = vmatpush.msra.mxu0 0.0
    %428 = vmatpush.msra.mxu0 0.0
    %429 = vmatpush.msra.mxu0 0.0
    %430 = vmatpush.msra.mxu0 0.0
    %431 = vmatpush.msra.mxu0 0.0
    %432 = vmatpush.msra.mxu0 0.0
    %433 = vmatpush.msra.mxu0 0.0
    %434 = vmatpush.msra.mxu0 0.0
    %435 = vmatpush.msra.mxu0 0.0
    %436 = vmatpush.msra.mxu0 0.0
    %437 = vmatpush.msra.mxu0 0.0
    %438 = vmatpush.msra.mxu0 %v287
    %439 = vmatpush.msra.mxu0 %v267
    %440 = vmatpush.msra.mxu0 %v247
    %441 = vmatpush.msra.mxu0 %v227
    %442 = vmatmul.f32.gmra.mxu0 %v352
    %v443 = vpop.f32.mrf.mxu0
    %v444 = vadd.f32 %v313, %v443
    %445 = vmatmul.f32.gmra.mxu0 %v355
    %v446 = vpop.f32.mrf.mxu0
    %v447 = vadd.f32 %v313, %v446
    %448 = vdwg.mxu0
    %449 = vmatpush.msra.mxu0 0.0
    %450 = vmatpush.msra.mxu0 0.0
    %451 = vmatpush.msra.mxu0 0.0
    %452 = vmatpush.msra.mxu0 0.0
    %453 = vmatpush.msra.mxu0 0.0
    %454 = vmatpush.msra.mxu0 0.0
    %455 = vmatpush.msra.mxu0 0.0
    %456 = vmatpush.msra.mxu0 0.0
    %457 = vmatpush.msra.mxu0 0.0
    %458 = vmatpush.msra.mxu0 0.0
    %459 = vmatpush.msra.mxu0 0.0
    %460 = vmatpush.msra.mxu0 0.0
    %461 = vmatpush.msra.mxu0 %v288
    %462 = vmatpush.msra.mxu0 %v268
    %463 = vmatpush.msra.mxu0 %v248
    %464 = vmatpush.msra.mxu0 %v228
    %465 = vmatmul.f32.gmra.mxu0 %v352
    %v466 = vpop.f32.mrf.mxu0
    %v467 = vadd.f32 %v314, %v466
    %468 = vmatmul.f32.gmra.mxu0 %v355
    %v469 = vpop.f32.mrf.mxu0
    %v470 = vadd.f32 %v314, %v469
    %471 = vdwg.mxu0
    %472 = vmatpush.msra.mxu0 0.0
    %473 = vmatpush.msra.mxu0 0.0
    %474 = vmatpush.msra.mxu0 0.0
    %475 = vmatpush.msra.mxu0 0.0
    %476 = vmatpush.msra.mxu0 0.0
    %477 = vmatpush.msra.mxu0 0.0
    %478 = vmatpush.msra.mxu0 0.0
    %479 = vmatpush.msra.mxu0 0.0
    %480 = vmatpush.msra.mxu0 0.0
    %481 = vmatpush.msra.mxu0 0.0
    %482 = vmatpush.msra.mxu0 0.0
    %483 = vmatpush.msra.mxu0 0.0
    %484 = vmatpush.msra.mxu0 %v289
    %485 = vmatpush.msra.mxu0 %v269
    %486 = vmatpush.msra.mxu0 %v249
    %487 = vmatpush.msra.mxu0 %v229
    %488 = vmatmul.f32.gmra.mxu0 %v352
    %v489 = vpop.f32.mrf.mxu0
    %v490 = vadd.f32 %v315, %v489
    %491 = vmatmul.f32.gmra.mxu0 %v355
    %v492 = vpop.f32.mrf.mxu0
    %v493 = vadd.f32 %v315, %v492
    %494 = vdwg.mxu0
    %495 = vmatpush.msra.mxu0 0.0
    %496 = vmatpush.msra.mxu0 0.0
    %497 = vmatpush.msra.mxu0 0.0
    %498 = vmatpush.msra.mxu0 0.0
    %499 = vmatpush.msra.mxu0 0.0
    %500 = vmatpush.msra.mxu0 0.0
    %501 = vmatpush.msra.mxu0 0.0
    %502 = vmatpush.msra.mxu0 0.0
    %503 = vmatpush.msra.mxu0 0.0
    %504 = vmatpush.msra.mxu0 0.0
    %505 = vmatpush.msra.mxu0 0.0
    %506 = vmatpush.msra.mxu0 0.0
    %507 = vmatpush.msra.mxu0 %v290
    %508 = vmatpush.msra.mxu0 %v270
    %509 = vmatpush.msra.mxu0 %v250
    %510 = vmatpush.msra.mxu0 %v230
    %511 = vmatmul.f32.gmra.mxu0 %v352
    %v512 = vpop.f32.mrf.mxu0
    %v513 = vadd.f32 %v316, %v512
    %514 = vmatmul.f32.gmra.mxu0 %v355
    %v515 = vpop.f32.mrf.mxu0
    %v516 = vadd.f32 %v316, %v515
    %517 = vdwg.mxu0
    %518 = vmatpush.msra.mxu0 0.0
    %519 = vmatpush.msra.mxu0 0.0
    %520 = vmatpush.msra.mxu0 0.0
    %521 = vmatpush.msra.mxu0 0.0
    %522 = vmatpush.msra.mxu0 0.0
    %523 = vmatpush.msra.mxu0 0.0
    %524 = vmatpush.msra.mxu0 0.0
    %525 = vmatpush.msra.mxu0 0.0
    %526 = vmatpush.msra.mxu0 0.0
    %527 = vmatpush.msra.mxu0 0.0
    %528 = vmatpush.msra.mxu0 0.0
    %529 = vmatpush.msra.mxu0 0.0
    %530 = vmatpush.msra.mxu0 %v291
    %531 = vmatpush.msra.mxu0 %v271
    %532 = vmatpush.msra.mxu0 %v251
    %533 = vmatpush.msra.mxu0 %v231
    %534 = vmatmul.f32.gmra.mxu0 %v352
    %v535 = vpop.f32.mrf.mxu0
    %v536 = vadd.f32 %v317, %v535
    %537 = vmatmul.f32.gmra.mxu0 %v355
    %v538 = vpop.f32.mrf.mxu0
    %v539 = vadd.f32 %v317, %v538
    %540 = vdwg.mxu0
    %541 = vmatpush.msra.mxu0 0.0
    %542 = vmatpush.msra.mxu0 0.0
    %543 = vmatpush.msra.mxu0 0.0
    %544 = vmatpush.msra.mxu0 0.0
    %545 = vmatpush.msra.mxu0 0.0
    %546 = vmatpush.msra.mxu0 0.0
    %547 = vmatpush.msra.mxu0 0.0
    %548 = vmatpush.msra.mxu0 0.0
    %549 = vmatpush.msra.mxu0 0.0
    %550 = vmatpush.msra.mxu0 0.0
    %551 = vmatpush.msra.mxu0 0.0
    %552 = vmatpush.msra.mxu0 0.0
    %553 = vmatpush.msra.mxu0 %v292
    %554 = vmatpush.msra.mxu0 %v272
    %555 = vmatpush.msra.mxu0 %v252
    %556 = vmatpush.msra.mxu0 %v232
    %557 = vmatmul.f32.gmra.mxu0 %v352
    %v558 = vpop.f32.mrf.mxu0
    %v559 = vadd.f32 %v318, %v558
    %560 = vmatmul.f32.gmra.mxu0 %v355
    %v561 = vpop.f32.mrf.mxu0
    %v562 = vadd.f32 %v318, %v561
    %563 = vdwg.mxu0
    %564 = vmatpush.msra.mxu0 0.0
    %565 = vmatpush.msra.mxu0 0.0
    %566 = vmatpush.msra.mxu0 0.0
    %567 = vmatpush.msra.mxu0 0.0
    %568 = vmatpush.msra.mxu0 0.0
    %569 = vmatpush.msra.mxu0 0.0
    %570 = vmatpush.msra.mxu0 0.0
    %571 = vmatpush.msra.mxu0 0.0
    %572 = vmatpush.msra.mxu0 0.0
    %573 = vmatpush.msra.mxu0 0.0
    %574 = vmatpush.msra.mxu0 0.0
    %575 = vmatpush.msra.mxu0 0.0
    %576 = vmatpush.msra.mxu0 %v293
    %577 = vmatpush.msra.mxu0 %v273
    %578 = vmatpush.msra.mxu0 %v253
    %579 = vmatpush.msra.mxu0 %v233
    %580 = vmatmul.f32.gmra.mxu0 %v352
    %v581 = vpop.f32.mrf.mxu0
    %v582 = vadd.f32 %v319, %v581
    %583 = vmatmul.f32.gmra.mxu0 %v355
    %v584 = vpop.f32.mrf.mxu0
    %v585 = vadd.f32 %v319, %v584
    %586 = vdwg.mxu0
    %587 = vmatpush.msra.mxu0 0.0
    %588 = vmatpush.msra.mxu0 0.0
    %589 = vmatpush.msra.mxu0 0.0
    %590 = vmatpush.msra.mxu0 0.0
    %591 = vmatpush.msra.mxu0 0.0
    %592 = vmatpush.msra.mxu0 0.0
    %593 = vmatpush.msra.mxu0 0.0
    %594 = vmatpush.msra.mxu0 0.0
    %595 = vmatpush.msra.mxu0 0.0
    %596 = vmatpush.msra.mxu0 0.0
    %597 = vmatpush.msra.mxu0 0.0
    %598 = vmatpush.msra.mxu0 0.0
    %599 = vmatpush.msra.mxu0 %v294
    %600 = vmatpush.msra.mxu0 %v274
    %601 = vmatpush.msra.mxu0 %v254
    %602 = vmatpush.msra.mxu0 %v234
    %603 = vmatmul.f32.gmra.mxu0 %v352
    %v604 = vpop.f32.mrf.mxu0
    %v605 = vadd.f32 %v320, %v604
    %606 = vmatmul.f32.gmra.mxu0 %v355
    %v607 = vpop.f32.mrf.mxu0
    %v608 = vadd.f32 %v320, %v607
    %609 = vdwg.mxu0
    %610 = vmatpush.msra.mxu0 0.0
    %611 = vmatpush.msra.mxu0 0.0
    %612 = vmatpush.msra.mxu0 0.0
    %613 = vmatpush.msra.mxu0 0.0
    %614 = vmatpush.msra.mxu0 0.0
    %615 = vmatpush.msra.mxu0 0.0
    %616 = vmatpush.msra.mxu0 0.0
    %617 = vmatpush.msra.mxu0 0.0
    %618 = vmatpush.msra.mxu0 0.0
    %619 = vmatpush.msra.mxu0 0.0
    %620 = vmatpush.msra.mxu0 0.0
    %621 = vmatpush.msra.mxu0 0.0
    %622 = vmatpush.msra.mxu0 %v295
    %623 = vmatpush.msra.mxu0 %v275
    %624 = vmatpush.msra.mxu0 %v255
    %625 = vmatpush.msra.mxu0 %v235
    %626 = vmatmul.f32.gmra.mxu0 %v352
    %v627 = vpop.f32.mrf.mxu0
    %v628 = vadd.f32 %v321, %v627
    %629 = vmatmul.f32.gmra.mxu0 %v355
    %v630 = vpop.f32.mrf.mxu0
    %v631 = vadd.f32 %v321, %v630
    %632 = vdwg.mxu0
    %633 = vmatpush.msra.mxu0 0.0
    %634 = vmatpush.msra.mxu0 0.0
    %635 = vmatpush.msra.mxu0 0.0
    %636 = vmatpush.msra.mxu0 0.0
    %637 = vmatpush.msra.mxu0 0.0
    %638 = vmatpush.msra.mxu0 0.0
    %639 = vmatpush.msra.mxu0 0.0
    %640 = vmatpush.msra.mxu0 0.0
    %641 = vmatpush.msra.mxu0 0.0
    %642 = vmatpush.msra.mxu0 0.0
    %643 = vmatpush.msra.mxu0 0.0
    %644 = vmatpush.msra.mxu0 0.0
    %645 = vmatpush.msra.mxu0 %v296
    %646 = vmatpush.msra.mxu0 %v276
    %647 = vmatpush.msra.mxu0 %v256
    %648 = vmatpush.msra.mxu0 %v236
    %649 = vmatmul.f32.gmra.mxu0 %v352
    %v650 = vpop.f32.mrf.mxu0
    %v651 = vadd.f32 %v322, %v650
    %652 = vmatmul.f32.gmra.mxu0 %v355
    %v653 = vpop.f32.mrf.mxu0
    %v654 = vadd.f32 %v322, %v653
    %655 = vdwg.mxu0
    %656 = vmatpush.msra.mxu0 0.0
    %657 = vmatpush.msra.mxu0 0.0
    %658 = vmatpush.msra.mxu0 0.0
    %659 = vmatpush.msra.mxu0 0.0
    %660 = vmatpush.msra.mxu0 0.0
    %661 = vmatpush.msra.mxu0 0.0
    %662 = vmatpush.msra.mxu0 0.0
    %663 = vmatpush.msra.mxu0 0.0
    %664 = vmatpush.msra.mxu0 0.0
    %665 = vmatpush.msra.mxu0 0.0
    %666 = vmatpush.msra.mxu0 0.0
    %667 = vmatpush.msra.mxu0 0.0
    %668 = vmatpush.msra.mxu0 %v297
    %669 = vmatpush.msra.mxu0 %v277
    %670 = vmatpush.msra.mxu0 %v257
    %671 = vmatpush.msra.mxu0 %v237
    %672 = vmatmul.f32.gmra.mxu0 %v352
    %v673 = vpop.f32.mrf.mxu0
    %v674 = vadd.f32 %v323, %v673
    %675 = vmatmul.f32.gmra.mxu0 %v355
    %v676 = vpop.f32.mrf.mxu0
    %v677 = vadd.f32 %v323, %v676
    %678 = vdwg.mxu0
    %679 = vmatpush.msra.mxu0 0.0
    %680 = vmatpush.msra.mxu0 0.0
    %681 = vmatpush.msra.mxu0 0.0
    %682 = vmatpush.msra.mxu0 0.0
    %683 = vmatpush.msra.mxu0 0.0
    %684 = vmatpush.msra.mxu0 0.0
    %685 = vmatpush.msra.mxu0 0.0
    %686 = vmatpush.msra.mxu0 0.0
    %687 = vmatpush.msra.mxu0 0.0
    %688 = vmatpush.msra.mxu0 0.0
    %689 = vmatpush.msra.mxu0 0.0
    %690 = vmatpush.msra.mxu0 0.0
    %691 = vmatpush.msra.mxu0 %v298
    %692 = vmatpush.msra.mxu0 %v278
    %693 = vmatpush.msra.mxu0 %v258
    %694 = vmatpush.msra.mxu0 %v238
    %695 = vmatmul.f32.gmra.mxu0 %v352
    %v696 = vpop.f32.mrf.mxu0
    %v697 = vadd.f32 %v324, %v696
    %698 = vmatmul.f32.gmra.mxu0 %v355
    %v699 = vpop.f32.mrf.mxu0
    %v700 = vadd.f32 %v324, %v699
    %701 = vdwg.mxu0
    %702 = vmatpush.msra.mxu0 0.0
    %703 = vmatpush.msra.mxu0 0.0
    %704 = vmatpush.msra.mxu0 0.0
    %705 = vmatpush.msra.mxu0 0.0
    %706 = vmatpush.msra.mxu0 0.0
    %707 = vmatpush.msra.mxu0 0.0
    %708 = vmatpush.msra.mxu0 0.0
    %709 = vmatpush.msra.mxu0 0.0
    %710 = vmatpush.msra.mxu0 0.0
    %711 = vmatpush.msra.mxu0 0.0
    %712 = vmatpush.msra.mxu0 0.0
    %713 = vmatpush.msra.mxu0 0.0
    %714 = vmatpush.msra.mxu0 %v299
    %715 = vmatpush.msra.mxu0 %v279
    %716 = vmatpush.msra.mxu0 %v259
    %717 = vmatpush.msra.mxu0 %v239
    %718 = vmatmul.f32.gmra.mxu0 %v352
    %v719 = vpop.f32.mrf.mxu0
    %v720 = vadd.f32 %v325, %v719
    %721 = vmatmul.f32.gmra.mxu0 %v355
    %v722 = vpop.f32.mrf.mxu0
    %v723 = vadd.f32 %v325, %v722
    %724 = vdwg.mxu0
    %725 = vmatpush.msra.mxu0 0.0
    %726 = vmatpush.msra.mxu0 0.0
    %727 = vmatpush.msra.mxu0 0.0
    %728 = vmatpush.msra.mxu0 0.0
    %729 = vmatpush.msra.mxu0 0.0
    %730 = vmatpush.msra.mxu0 0.0
    %731 = vmatpush.msra.mxu0 0.0
    %732 = vmatpush.msra.mxu0 0.0
    %733 = vmatpush.msra.mxu0 0.0
    %734 = vmatpush.msra.mxu0 0.0
    %735 = vmatpush.msra.mxu0 0.0
    %736 = vmatpush.msra.mxu0 0.0
    %737 = vmatpush.msra.mxu0 %v300
    %738 = vmatpush.msra.mxu0 %v280
    %739 = vmatpush.msra.mxu0 %v260
    %740 = vmatpush.msra.mxu0 %v240
    %741 = vmatmul.f32.gmra.mxu0 %v352
    %v742 = vpop.f32.mrf.mxu0
    %v743 = vadd.f32 %v326, %v742
    %744 = vmatmul.f32.gmra.mxu0 %v355
    %v745 = vpop.f32.mrf.mxu0
    %v746 = vadd.f32 %v326, %v745
    %747 = vdwg.mxu0
    %748 = vmatpush.msra.mxu0 0.0
    %749 = vmatpush.msra.mxu0 0.0
    %750 = vmatpush.msra.mxu0 0.0
    %751 = vmatpush.msra.mxu0 0.0
    %752 = vmatpush.msra.mxu0 0.0
    %753 = vmatpush.msra.mxu0 0.0
    %754 = vmatpush.msra.mxu0 0.0
    %755 = vmatpush.msra.mxu0 0.0
    %756 = vmatpush.msra.mxu0 0.0
    %757 = vmatpush.msra.mxu0 0.0
    %758 = vmatpush.msra.mxu0 0.0
    %759 = vmatpush.msra.mxu0 0.0
    %760 = vmatpush.msra.mxu0 %v301
    %761 = vmatpush.msra.mxu0 %v281
    %762 = vmatpush.msra.mxu0 %v261
    %763 = vmatpush.msra.mxu0 %v241
    %764 = vmatmul.f32.gmra.mxu0 %v352
    %v765 = vpop.f32.mrf.mxu0
    %v766 = vadd.f32 %v327, %v765
    %767 = vmatmul.f32.gmra.mxu0 %v355
    %v768 = vpop.f32.mrf.mxu0
    %v769 = vadd.f32 %v327, %v768
    %770 = vdwg.mxu0
    %771 = vmatpush.msra.mxu0 0.0
    %772 = vmatpush.msra.mxu0 0.0
    %773 = vmatpush.msra.mxu0 0.0
    %774 = vmatpush.msra.mxu0 0.0
    %775 = vmatpush.msra.mxu0 0.0
    %776 = vmatpush.msra.mxu0 0.0
    %777 = vmatpush.msra.mxu0 0.0
    %778 = vmatpush.msra.mxu0 0.0
    %779 = vmatpush.msra.mxu0 0.0
    %780 = vmatpush.msra.mxu0 0.0
    %781 = vmatpush.msra.mxu0 0.0
    %782 = vmatpush.msra.mxu0 0.0
    %783 = vmatpush.msra.mxu0 %v302
    %784 = vmatpush.msra.mxu0 %v282
    %785 = vmatpush.msra.mxu0 %v262
    %786 = vmatpush.msra.mxu0 %v242
    %787 = vmatmul.f32.gmra.mxu0 %v352
    %v788 = vpop.f32.mrf.mxu0
    %v789 = vadd.f32 %v328, %v788
    %790 = vmatmul.f32.gmra.mxu0 %v355
    %v791 = vpop.f32.mrf.mxu0
    %v792 = vadd.f32 %v328, %v791
    %793 = vdwg.mxu0
    %794 = vmatpush.msra.mxu0 0.0
    %795 = vmatpush.msra.mxu0 0.0
    %796 = vmatpush.msra.mxu0 0.0
    %797 = vmatpush.msra.mxu0 0.0
    %798 = vmatpush.msra.mxu0 0.0
    %799 = vmatpush.msra.mxu0 0.0
    %800 = vmatpush.msra.mxu0 0.0
    %801 = vmatpush.msra.mxu0 0.0
    %802 = vmatpush.msra.mxu0 0.0
    %803 = vmatpush.msra.mxu0 0.0
    %804 = vmatpush.msra.mxu0 0.0
    %805 = vmatpush.msra.mxu0 0.0
    %806 = vmatpush.msra.mxu0 %v303
    %807 = vmatpush.msra.mxu0 %v283
    %808 = vmatpush.msra.mxu0 %v263
    %809 = vmatpush.msra.mxu0 %v243
    %810 = vmatmul.f32.gmra.mxu0 %v352
    %v811 = vpop.f32.mrf.mxu0
    %v812 = vadd.f32 %v329, %v811
    %813 = vmatmul.f32.gmra.mxu0 %v355
    %v814 = vpop.f32.mrf.mxu0
    %v815 = vadd.f32 %v329, %v814
    %816 = vdwg.mxu0
    %v817 = vld [vmem:[#allocation11] sm:$0xff]
    %v818 = vld [vmem:[#allocation11 + $0x8] sm:$0xff]
    %v819 = vld [vmem:[#allocation11 + $0x10] sm:$0xff]
    %v820 = vld [vmem:[#allocation11 + $0x18] sm:$0xff]
    %v821 = vld [vmem:[#allocation11 + $0x20] sm:$0xff]
    %v822 = vld [vmem:[#allocation11 + $0x28] sm:$0xff]
    %v823 = vld [vmem:[#allocation11 + $0x30] sm:$0xff]
    %v824 = vld [vmem:[#allocation11 + $0x38] sm:$0xff]
    %v825 = vld [vmem:[#allocation11 + $0x40] sm:$0xff]
    %v826 = vld [vmem:[#allocation11 + $0x48] sm:$0xff]
    %v827 = vld [vmem:[#allocation11 + $0x50] sm:$0xff]
    %v828 = vld [vmem:[#allocation11 + $0x58] sm:$0xff]
    %v829 = vld [vmem:[#allocation11 + $0x60] sm:$0xff]
    %v830 = vld [vmem:[#allocation11 + $0x68] sm:$0xff]
    %v831 = vld [vmem:[#allocation11 + $0x70] sm:$0xff]
    %v832 = vld [vmem:[#allocation11 + $0x78] sm:$0xff]
    %v833 = vld [vmem:[#allocation11 + $0x80] sm:$0xff]
    %v834 = vld [vmem:[#allocation11 + $0x88] sm:$0xff]
    %v835 = vld [vmem:[#allocation11 + $0x90] sm:$0xff]
    %v836 = vld [vmem:[#allocation11 + $0x98] sm:$0xff]
    %v837 = vld [vmem:[#allocation11 + $0xa0] sm:$0xff]
    %v838 = vld [vmem:[#allocation11 + $0xa8] sm:$0xff]
    %v839 = vld [vmem:[#allocation11 + $0xb0] sm:$0xff]
    %v840 = vld [vmem:[#allocation11 + $0xb8] sm:$0xff]
    %v841 = vld [vmem:[#allocation11 + $0xc0] sm:$0xff]
    %v842 = vld [vmem:[#allocation11 + $0xc8] sm:$0xff]
    %v843 = vld [vmem:[#allocation11 + $0xd0] sm:$0xff]
    %v844 = vld [vmem:[#allocation11 + $0xd8] sm:$0xff]
    %v845 = vld [vmem:[#allocation11 + $0xe0] sm:$0xff]
    %v846 = vld [vmem:[#allocation11 + $0xe8] sm:$0xff]
    %v847 = vld [vmem:[#allocation11 + $0xf0] sm:$0xff]
    %v848 = vld [vmem:[#allocation11 + $0xf8] sm:$0xff]
    %v849 = vld [vmem:[#allocation11 + $0x100] sm:$0xff]
    %v850 = vld [vmem:[#allocation11 + $0x108] sm:$0xff]
    %v851 = vld [vmem:[#allocation11 + $0x110] sm:$0xff]
    %v852 = vld [vmem:[#allocation11 + $0x118] sm:$0xff]
    %v853 = vld [vmem:[#allocation11 + $0x120] sm:$0xff]
    %v854 = vld [vmem:[#allocation11 + $0x128] sm:$0xff]
    %v855 = vld [vmem:[#allocation11 + $0x130] sm:$0xff]
    %v856 = vld [vmem:[#allocation11 + $0x138] sm:$0xff]
    %v857 = vld [vmem:[#allocation11 + $0x140] sm:$0xff]
    %v858 = vld [vmem:[#allocation11 + $0x148] sm:$0xff]
    %v859 = vld [vmem:[#allocation11 + $0x150] sm:$0xff]
    %v860 = vld [vmem:[#allocation11 + $0x158] sm:$0xff]
    %v861 = vld [vmem:[#allocation11 + $0x160] sm:$0xff]
    %v862 = vld [vmem:[#allocation11 + $0x168] sm:$0xff]
    %v863 = vld [vmem:[#allocation11 + $0x170] sm:$0xff]
    %v864 = vld [vmem:[#allocation11 + $0x178] sm:$0xff]
    %v865 = vld [vmem:[#allocation11 + $0x180] sm:$0xff]
    %v866 = vld [vmem:[#allocation11 + $0x188] sm:$0xff]
    %v867 = vld [vmem:[#allocation11 + $0x190] sm:$0xff]
    %v868 = vld [vmem:[#allocation11 + $0x198] sm:$0xff]
    %v869 = vld [vmem:[#allocation11 + $0x1a0] sm:$0xff]
    %v870 = vld [vmem:[#allocation11 + $0x1a8] sm:$0xff]
    %v871 = vld [vmem:[#allocation11 + $0x1b0] sm:$0xff]
    %v872 = vld [vmem:[#allocation11 + $0x1b8] sm:$0xff]
    %v873 = vld [vmem:[#allocation11 + $0x1c0] sm:$0xff]
    %v874 = vld [vmem:[#allocation11 + $0x1c8] sm:$0xff]
    %v875 = vld [vmem:[#allocation11 + $0x1d0] sm:$0xff]
    %v876 = vld [vmem:[#allocation11 + $0x1d8] sm:$0xff]
    %v877 = vld [vmem:[#allocation11 + $0x1e0] sm:$0xff]
    %v878 = vld [vmem:[#allocation11 + $0x1e8] sm:$0xff]
    %v879 = vld [vmem:[#allocation11 + $0x1f0] sm:$0xff]
    %v880 = vld [vmem:[#allocation11 + $0x1f8] sm:$0xff]
    %v881 = vld [vmem:[#allocation11 + $0x200] sm:$0xff]
    %v882 = vld [vmem:[#allocation11 + $0x208] sm:$0xff]
    %v883 = vld [vmem:[#allocation11 + $0x210] sm:$0xff]
    %v884 = vld [vmem:[#allocation11 + $0x218] sm:$0xff]
    %v885 = vld [vmem:[#allocation11 + $0x220] sm:$0xff]
    %v886 = vld [vmem:[#allocation11 + $0x228] sm:$0xff]
    %v887 = vld [vmem:[#allocation11 + $0x230] sm:$0xff]
    %v888 = vld [vmem:[#allocation11 + $0x238] sm:$0xff]
    %v889 = vld [vmem:[#allocation11 + $0x240] sm:$0xff]
    %v890 = vld [vmem:[#allocation11 + $0x248] sm:$0xff]
    %v891 = vld [vmem:[#allocation11 + $0x250] sm:$0xff]
    %v892 = vld [vmem:[#allocation11 + $0x258] sm:$0xff]
    %v893 = vld [vmem:[#allocation11 + $0x260] sm:$0xff]
    %v894 = vld [vmem:[#allocation11 + $0x268] sm:$0xff]
    %v895 = vld [vmem:[#allocation11 + $0x270] sm:$0xff]
    %v896 = vld [vmem:[#allocation11 + $0x278] sm:$0xff]
    %v897 = vld [vmem:[#allocation17] sm:$0xff]
    %v898 = vld [vmem:[#allocation17 + $0x8] sm:$0xff]
    %v899 = vld [vmem:[#allocation17 + $0x10] sm:$0xf]
    %v903 = vperm.slane %v897, 0
    %v904 = vperm.slane %v897, 1
    %v905 = vperm.slane %v897, 2
    %v906 = vperm.slane %v897, 3
    %v907 = vperm.slane %v897, 4
    %v908 = vperm.slane %v897, 5
    %v909 = vperm.slane %v897, 6
    %v910 = vperm.slane %v897, 7
    %v911 = vperm.slane %v898, 0
    %v912 = vperm.slane %v898, 1
    %v913 = vperm.slane %v898, 2
    %v914 = vperm.slane %v898, 3
    %v915 = vperm.slane %v898, 4
    %v916 = vperm.slane %v898, 5
    %v917 = vperm.slane %v898, 6
    %v918 = vperm.slane %v898, 7
    %v919 = vperm.slane %v899, 0
    %v920 = vperm.slane %v899, 1
    %v921 = vperm.slane %v899, 2
    %v922 = vperm.slane %v899, 3
    %v944 = vsel %vm350, %v220, 0
    %v947 = vsel %vm350, %v221, 0
    %v950 = vsel %vm350, %v222, 0
    %v953 = vsel %vm350, %v223, 0
    %955 = vmatpush.msra.mxu0 0.0
    %956 = vmatpush.msra.mxu0 0.0
    %957 = vmatpush.msra.mxu0 0.0
    %958 = vmatpush.msra.mxu0 0.0
    %959 = vmatpush.msra.mxu0 0.0
    %960 = vmatpush.msra.mxu0 0.0
    %961 = vmatpush.msra.mxu0 0.0
    %962 = vmatpush.msra.mxu0 0.0
    %963 = vmatpush.msra.mxu0 0.0
    %964 = vmatpush.msra.mxu0 0.0
    %965 = vmatpush.msra.mxu0 0.0
    %966 = vmatpush.msra.mxu0 0.0
    %967 = vmatpush.msra.mxu0 %v877
    %968 = vmatpush.msra.mxu0 %v857
    %969 = vmatpush.msra.mxu0 %v837
    %970 = vmatpush.msra.mxu0 %v817
    %971 = vmatmul.f32.gmra.mxu0 %v944
    %v972 = vpop.f32.mrf.mxu0
    %v973 = vadd.f32 %v903, %v972
    %974 = vmatmul.f32.gmra.mxu0 %v947
    %v975 = vpop.f32.mrf.mxu0
    %v976 = vadd.f32 %v903, %v975
    %977 = vmatmul.f32.gmra.mxu0 %v950
    %v978 = vpop.f32.mrf.mxu0
    %v979 = vadd.f32 %v903, %v978
    %980 = vmatmul.f32.gmra.mxu0 %v953
    %v981 = vpop.f32.mrf.mxu0
    %v982 = vadd.f32 %v903, %v981
    %983 = vdwg.mxu0
    %984 = vmatpush.msra.mxu0 0.0
    %985 = vmatpush.msra.mxu0 0.0
    %986 = vmatpush.msra.mxu0 0.0
    %987 = vmatpush.msra.mxu0 0.0
    %988 = vmatpush.msra.mxu0 0.0
    %989 = vmatpush.msra.mxu0 0.0
    %990 = vmatpush.msra.mxu0 0.0
    %991 = vmatpush.msra.mxu0 0.0
    %992 = vmatpush.msra.mxu0 0.0
    %993 = vmatpush.msra.mxu0 0.0
    %994 = vmatpush.msra.mxu0 0.0
    %995 = vmatpush.msra.mxu0 0.0
    %996 = vmatpush.msra.mxu0 %v878
    %997 = vmatpush.msra.mxu0 %v858
    %998 = vmatpush.msra.mxu0 %v838
    %999 = vmatpush.msra.mxu0 %v818
    %1000 = vmatmul.f32.gmra.mxu0 %v944
    %v1001 = vpop.f32.mrf.mxu0
    %v1002 = vadd.f32 %v904, %v1001
    %1003 = vmatmul.f32.gmra.mxu0 %v947
    %v1004 = vpop.f32.mrf.mxu0
    %v1005 = vadd.f32 %v904, %v1004
    %1006 = vmatmul.f32.gmra.mxu0 %v950
    %v1007 = vpop.f32.mrf.mxu0
    %v1008 = vadd.f32 %v904, %v1007
    %1009 = vmatmul.f32.gmra.mxu0 %v953
    %v1010 = vpop.f32.mrf.mxu0
    %v1011 = vadd.f32 %v904, %v1010
    %1012 = vdwg.mxu0
    %1013 = vmatpush.msra.mxu0 0.0
    %1014 = vmatpush.msra.mxu0 0.0
    %1015 = vmatpush.msra.mxu0 0.0
    %1016 = vmatpush.msra.mxu0 0.0
    %1017 = vmatpush.msra.mxu0 0.0
    %1018 = vmatpush.msra.mxu0 0.0
    %1019 = vmatpush.msra.mxu0 0.0
    %1020 = vmatpush.msra.mxu0 0.0
    %1021 = vmatpush.msra.mxu0 0.0
    %1022 = vmatpush.msra.mxu0 0.0
    %1023 = vmatpush.msra.mxu0 0.0
    %1024 = vmatpush.msra.mxu0 0.0
    %1025 = vmatpush.msra.mxu0 %v879
    %1026 = vmatpush.msra.mxu0 %v859
    %1027 = vmatpush.msra.mxu0 %v839
    %1028 = vmatpush.msra.mxu0 %v819
    %1029 = vmatmul.f32.gmra.mxu0 %v944
    %v1030 = vpop.f32.mrf.mxu0
    %v1031 = vadd.f32 %v905, %v1030
    %1032 = vmatmul.f32.gmra.mxu0 %v947
    %v1033 = vpop.f32.mrf.mxu0
    %v1034 = vadd.f32 %v905, %v1033
    %1035 = vmatmul.f32.gmra.mxu0 %v950
    %v1036 = vpop.f32.mrf.mxu0
    %v1037 = vadd.f32 %v905, %v1036
    %1038 = vmatmul.f32.gmra.mxu0 %v953
    %v1039 = vpop.f32.mrf.mxu0
    %v1040 = vadd.f32 %v905, %v1039
    %1041 = vdwg.mxu0
    %1042 = vmatpush.msra.mxu0 0.0
    %1043 = vmatpush.msra.mxu0 0.0
    %1044 = vmatpush.msra.mxu0 0.0
    %1045 = vmatpush.msra.mxu0 0.0
    %1046 = vmatpush.msra.mxu0 0.0
    %1047 = vmatpush.msra.mxu0 0.0
    %1048 = vmatpush.msra.mxu0 0.0
    %1049 = vmatpush.msra.mxu0 0.0
    %1050 = vmatpush.msra.mxu0 0.0
    %1051 = vmatpush.msra.mxu0 0.0
    %1052 = vmatpush.msra.mxu0 0.0
    %1053 = vmatpush.msra.mxu0 0.0
    %1054 = vmatpush.msra.mxu0 %v880
    %1055 = vmatpush.msra.mxu0 %v860
    %1056 = vmatpush.msra.mxu0 %v840
    %1057 = vmatpush.msra.mxu0 %v820
    %1058 = vmatmul.f32.gmra.mxu0 %v944
    %v1059 = vpop.f32.mrf.mxu0
    %v1060 = vadd.f32 %v906, %v1059
    %1061 = vmatmul.f32.gmra.mxu0 %v947
    %v1062 = vpop.f32.mrf.mxu0
    %v1063 = vadd.f32 %v906, %v1062
    %1064 = vmatmul.f32.gmra.mxu0 %v950
    %v1065 = vpop.f32.mrf.mxu0
    %v1066 = vadd.f32 %v906, %v1065
    %1067 = vmatmul.f32.gmra.mxu0 %v953
    %v1068 = vpop.f32.mrf.mxu0
    %v1069 = vadd.f32 %v906, %v1068
    %1070 = vdwg.mxu0
    %1071 = vmatpush.msra.mxu0 0.0
    %1072 = vmatpush.msra.mxu0 0.0
    %1073 = vmatpush.msra.mxu0 0.0
    %1074 = vmatpush.msra.mxu0 0.0
    %1075 = vmatpush.msra.mxu0 0.0
    %1076 = vmatpush.msra.mxu0 0.0
    %1077 = vmatpush.msra.mxu0 0.0
    %1078 = vmatpush.msra.mxu0 0.0
    %1079 = vmatpush.msra.mxu0 0.0
    %1080 = vmatpush.msra.mxu0 0.0
    %1081 = vmatpush.msra.mxu0 0.0
    %1082 = vmatpush.msra.mxu0 0.0
    %1083 = vmatpush.msra.mxu0 %v881
    %1084 = vmatpush.msra.mxu0 %v861
    %1085 = vmatpush.msra.mxu0 %v841
    %1086 = vmatpush.msra.mxu0 %v821
    %1087 = vmatmul.f32.gmra.mxu0 %v944
    %v1088 = vpop.f32.mrf.mxu0
    %v1089 = vadd.f32 %v907, %v1088
    %1090 = vmatmul.f32.gmra.mxu0 %v947
    %v1091 = vpop.f32.mrf.mxu0
    %v1092 = vadd.f32 %v907, %v1091
    %1093 = vmatmul.f32.gmra.mxu0 %v950
    %v1094 = vpop.f32.mrf.mxu0
    %v1095 = vadd.f32 %v907, %v1094
    %1096 = vmatmul.f32.gmra.mxu0 %v953
    %v1097 = vpop.f32.mrf.mxu0
    %v1098 = vadd.f32 %v907, %v1097
    %1099 = vdwg.mxu0
    %1100 = vmatpush.msra.mxu0 0.0
    %1101 = vmatpush.msra.mxu0 0.0
    %1102 = vmatpush.msra.mxu0 0.0
    %1103 = vmatpush.msra.mxu0 0.0
    %1104 = vmatpush.msra.mxu0 0.0
    %1105 = vmatpush.msra.mxu0 0.0
    %1106 = vmatpush.msra.mxu0 0.0
    %1107 = vmatpush.msra.mxu0 0.0
    %1108 = vmatpush.msra.mxu0 0.0
    %1109 = vmatpush.msra.mxu0 0.0
    %1110 = vmatpush.msra.mxu0 0.0
    %1111 = vmatpush.msra.mxu0 0.0
    %1112 = vmatpush.msra.mxu0 %v882
    %1113 = vmatpush.msra.mxu0 %v862
    %1114 = vmatpush.msra.mxu0 %v842
    %1115 = vmatpush.msra.mxu0 %v822
    %1116 = vmatmul.f32.gmra.mxu0 %v944
    %v1117 = vpop.f32.mrf.mxu0
    %v1118 = vadd.f32 %v908, %v1117
    %1119 = vmatmul.f32.gmra.mxu0 %v947
    %v1120 = vpop.f32.mrf.mxu0
    %v1121 = vadd.f32 %v908, %v1120
    %1122 = vmatmul.f32.gmra.mxu0 %v950
    %v1123 = vpop.f32.mrf.mxu0
    %v1124 = vadd.f32 %v908, %v1123
    %1125 = vmatmul.f32.gmra.mxu0 %v953
    %v1126 = vpop.f32.mrf.mxu0
    %v1127 = vadd.f32 %v908, %v1126
    %1128 = vdwg.mxu0
    %1129 = vmatpush.msra.mxu0 0.0
    %1130 = vmatpush.msra.mxu0 0.0
    %1131 = vmatpush.msra.mxu0 0.0
    %1132 = vmatpush.msra.mxu0 0.0
    %1133 = vmatpush.msra.mxu0 0.0
    %1134 = vmatpush.msra.mxu0 0.0
    %1135 = vmatpush.msra.mxu0 0.0
    %1136 = vmatpush.msra.mxu0 0.0
    %1137 = vmatpush.msra.mxu0 0.0
    %1138 = vmatpush.msra.mxu0 0.0
    %1139 = vmatpush.msra.mxu0 0.0
    %1140 = vmatpush.msra.mxu0 0.0
    %1141 = vmatpush.msra.mxu0 %v883
    %1142 = vmatpush.msra.mxu0 %v863
    %1143 = vmatpush.msra.mxu0 %v843
    %1144 = vmatpush.msra.mxu0 %v823
    %1145 = vmatmul.f32.gmra.mxu0 %v944
    %v1146 = vpop.f32.mrf.mxu0
    %v1147 = vadd.f32 %v909, %v1146
    %1148 = vmatmul.f32.gmra.mxu0 %v947
    %v1149 = vpop.f32.mrf.mxu0
    %v1150 = vadd.f32 %v909, %v1149
    %1151 = vmatmul.f32.gmra.mxu0 %v950
    %v1152 = vpop.f32.mrf.mxu0
    %v1153 = vadd.f32 %v909, %v1152
    %1154 = vmatmul.f32.gmra.mxu0 %v953
    %v1155 = vpop.f32.mrf.mxu0
    %v1156 = vadd.f32 %v909, %v1155
    %1157 = vdwg.mxu0
    %1158 = vmatpush.msra.mxu0 0.0
    %1159 = vmatpush.msra.mxu0 0.0
    %1160 = vmatpush.msra.mxu0 0.0
    %1161 = vmatpush.msra.mxu0 0.0
    %1162 = vmatpush.msra.mxu0 0.0
    %1163 = vmatpush.msra.mxu0 0.0
    %1164 = vmatpush.msra.mxu0 0.0
    %1165 = vmatpush.msra.mxu0 0.0
    %1166 = vmatpush.msra.mxu0 0.0
    %1167 = vmatpush.msra.mxu0 0.0
    %1168 = vmatpush.msra.mxu0 0.0
    %1169 = vmatpush.msra.mxu0 0.0
    %1170 = vmatpush.msra.mxu0 %v884
    %1171 = vmatpush.msra.mxu0 %v864
    %1172 = vmatpush.msra.mxu0 %v844
    %1173 = vmatpush.msra.mxu0 %v824
    %1174 = vmatmul.f32.gmra.mxu0 %v944
    %v1175 = vpop.f32.mrf.mxu0
    %v1176 = vadd.f32 %v910, %v1175
    %1177 = vmatmul.f32.gmra.mxu0 %v947
    %v1178 = vpop.f32.mrf.mxu0
    %v1179 = vadd.f32 %v910, %v1178
    %1180 = vmatmul.f32.gmra.mxu0 %v950
    %v1181 = vpop.f32.mrf.mxu0
    %v1182 = vadd.f32 %v910, %v1181
    %1183 = vmatmul.f32.gmra.mxu0 %v953
    %v1184 = vpop.f32.mrf.mxu0
    %v1185 = vadd.f32 %v910, %v1184
    %1186 = vdwg.mxu0
    %1187 = vmatpush.msra.mxu0 0.0
    %1188 = vmatpush.msra.mxu0 0.0
    %1189 = vmatpush.msra.mxu0 0.0
    %1190 = vmatpush.msra.mxu0 0.0
    %1191 = vmatpush.msra.mxu0 0.0
    %1192 = vmatpush.msra.mxu0 0.0
    %1193 = vmatpush.msra.mxu0 0.0
    %1194 = vmatpush.msra.mxu0 0.0
    %1195 = vmatpush.msra.mxu0 0.0
    %1196 = vmatpush.msra.mxu0 0.0
    %1197 = vmatpush.msra.mxu0 0.0
    %1198 = vmatpush.msra.mxu0 0.0
    %1199 = vmatpush.msra.mxu0 %v885
    %1200 = vmatpush.msra.mxu0 %v865
    %1201 = vmatpush.msra.mxu0 %v845
    %1202 = vmatpush.msra.mxu0 %v825
    %1203 = vmatmul.f32.gmra.mxu0 %v944
    %v1204 = vpop.f32.mrf.mxu0
    %v1205 = vadd.f32 %v911, %v1204
    %1206 = vmatmul.f32.gmra.mxu0 %v947
    %v1207 = vpop.f32.mrf.mxu0
    %v1208 = vadd.f32 %v911, %v1207
    %1209 = vmatmul.f32.gmra.mxu0 %v950
    %v1210 = vpop.f32.mrf.mxu0
    %v1211 = vadd.f32 %v911, %v1210
    %1212 = vmatmul.f32.gmra.mxu0 %v953
    %v1213 = vpop.f32.mrf.mxu0
    %v1214 = vadd.f32 %v911, %v1213
    %1215 = vdwg.mxu0
    %1216 = vmatpush.msra.mxu0 0.0
    %1217 = vmatpush.msra.mxu0 0.0
    %1218 = vmatpush.msra.mxu0 0.0
    %1219 = vmatpush.msra.mxu0 0.0
    %1220 = vmatpush.msra.mxu0 0.0
    %1221 = vmatpush.msra.mxu0 0.0
    %1222 = vmatpush.msra.mxu0 0.0
    %1223 = vmatpush.msra.mxu0 0.0
    %1224 = vmatpush.msra.mxu0 0.0
    %1225 = vmatpush.msra.mxu0 0.0
    %1226 = vmatpush.msra.mxu0 0.0
    %1227 = vmatpush.msra.mxu0 0.0
    %1228 = vmatpush.msra.mxu0 %v886
    %1229 = vmatpush.msra.mxu0 %v866
    %1230 = vmatpush.msra.mxu0 %v846
    %1231 = vmatpush.msra.mxu0 %v826
    %1232 = vmatmul.f32.gmra.mxu0 %v944
    %v1233 = vpop.f32.mrf.mxu0
    %v1234 = vadd.f32 %v912, %v1233
    %1235 = vmatmul.f32.gmra.mxu0 %v947
    %v1236 = vpop.f32.mrf.mxu0
    %v1237 = vadd.f32 %v912, %v1236
    %1238 = vmatmul.f32.gmra.mxu0 %v950
    %v1239 = vpop.f32.mrf.mxu0
    %v1240 = vadd.f32 %v912, %v1239
    %1241 = vmatmul.f32.gmra.mxu0 %v953
    %v1242 = vpop.f32.mrf.mxu0
    %v1243 = vadd.f32 %v912, %v1242
    %1244 = vdwg.mxu0
    %1245 = vmatpush.msra.mxu0 0.0
    %1246 = vmatpush.msra.mxu0 0.0
    %1247 = vmatpush.msra.mxu0 0.0
    %1248 = vmatpush.msra.mxu0 0.0
    %1249 = vmatpush.msra.mxu0 0.0
    %1250 = vmatpush.msra.mxu0 0.0
    %1251 = vmatpush.msra.mxu0 0.0
    %1252 = vmatpush.msra.mxu0 0.0
    %1253 = vmatpush.msra.mxu0 0.0
    %1254 = vmatpush.msra.mxu0 0.0
    %1255 = vmatpush.msra.mxu0 0.0
    %1256 = vmatpush.msra.mxu0 0.0
    %1257 = vmatpush.msra.mxu0 %v887
    %1258 = vmatpush.msra.mxu0 %v867
    %1259 = vmatpush.msra.mxu0 %v847
    %1260 = vmatpush.msra.mxu0 %v827
    %1261 = vmatmul.f32.gmra.mxu0 %v944
    %v1262 = vpop.f32.mrf.mxu0
    %v1263 = vadd.f32 %v913, %v1262
    %1264 = vmatmul.f32.gmra.mxu0 %v947
    %v1265 = vpop.f32.mrf.mxu0
    %v1266 = vadd.f32 %v913, %v1265
    %1267 = vmatmul.f32.gmra.mxu0 %v950
    %v1268 = vpop.f32.mrf.mxu0
    %v1269 = vadd.f32 %v913, %v1268
    %1270 = vmatmul.f32.gmra.mxu0 %v953
    %v1271 = vpop.f32.mrf.mxu0
    %v1272 = vadd.f32 %v913, %v1271
    %1273 = vdwg.mxu0
    %1274 = vmatpush.msra.mxu0 0.0
    %1275 = vmatpush.msra.mxu0 0.0
    %1276 = vmatpush.msra.mxu0 0.0
    %1277 = vmatpush.msra.mxu0 0.0
    %1278 = vmatpush.msra.mxu0 0.0
    %1279 = vmatpush.msra.mxu0 0.0
    %1280 = vmatpush.msra.mxu0 0.0
    %1281 = vmatpush.msra.mxu0 0.0
    %1282 = vmatpush.msra.mxu0 0.0
    %1283 = vmatpush.msra.mxu0 0.0
    %1284 = vmatpush.msra.mxu0 0.0
    %1285 = vmatpush.msra.mxu0 0.0
    %1286 = vmatpush.msra.mxu0 %v888
    %1287 = vmatpush.msra.mxu0 %v868
    %1288 = vmatpush.msra.mxu0 %v848
    %1289 = vmatpush.msra.mxu0 %v828
    %1290 = vmatmul.f32.gmra.mxu0 %v944
    %v1291 = vpop.f32.mrf.mxu0
    %v1292 = vadd.f32 %v914, %v1291
    %1293 = vmatmul.f32.gmra.mxu0 %v947
    %v1294 = vpop.f32.mrf.mxu0
    %v1295 = vadd.f32 %v914, %v1294
    %1296 = vmatmul.f32.gmra.mxu0 %v950
    %v1297 = vpop.f32.mrf.mxu0
    %v1298 = vadd.f32 %v914, %v1297
    %1299 = vmatmul.f32.gmra.mxu0 %v953
    %v1300 = vpop.f32.mrf.mxu0
    %v1301 = vadd.f32 %v914, %v1300
    %1302 = vdwg.mxu0
    %1303 = vmatpush.msra.mxu0 0.0
    %1304 = vmatpush.msra.mxu0 0.0
    %1305 = vmatpush.msra.mxu0 0.0
    %1306 = vmatpush.msra.mxu0 0.0
    %1307 = vmatpush.msra.mxu0 0.0
    %1308 = vmatpush.msra.mxu0 0.0
    %1309 = vmatpush.msra.mxu0 0.0
    %1310 = vmatpush.msra.mxu0 0.0
    %1311 = vmatpush.msra.mxu0 0.0
    %1312 = vmatpush.msra.mxu0 0.0
    %1313 = vmatpush.msra.mxu0 0.0
    %1314 = vmatpush.msra.mxu0 0.0
    %1315 = vmatpush.msra.mxu0 %v889
    %1316 = vmatpush.msra.mxu0 %v869
    %1317 = vmatpush.msra.mxu0 %v849
    %1318 = vmatpush.msra.mxu0 %v829
    %1319 = vmatmul.f32.gmra.mxu0 %v944
    %v1320 = vpop.f32.mrf.mxu0
    %v1321 = vadd.f32 %v915, %v1320
    %1322 = vmatmul.f32.gmra.mxu0 %v947
    %v1323 = vpop.f32.mrf.mxu0
    %v1324 = vadd.f32 %v915, %v1323
    %1325 = vmatmul.f32.gmra.mxu0 %v950
    %v1326 = vpop.f32.mrf.mxu0
    %v1327 = vadd.f32 %v915, %v1326
    %1328 = vmatmul.f32.gmra.mxu0 %v953
    %v1329 = vpop.f32.mrf.mxu0
    %v1330 = vadd.f32 %v915, %v1329
    %1331 = vdwg.mxu0
    %1332 = vmatpush.msra.mxu0 0.0
    %1333 = vmatpush.msra.mxu0 0.0
    %1334 = vmatpush.msra.mxu0 0.0
    %1335 = vmatpush.msra.mxu0 0.0
    %1336 = vmatpush.msra.mxu0 0.0
    %1337 = vmatpush.msra.mxu0 0.0
    %1338 = vmatpush.msra.mxu0 0.0
    %1339 = vmatpush.msra.mxu0 0.0
    %1340 = vmatpush.msra.mxu0 0.0
    %1341 = vmatpush.msra.mxu0 0.0
    %1342 = vmatpush.msra.mxu0 0.0
    %1343 = vmatpush.msra.mxu0 0.0
    %1344 = vmatpush.msra.mxu0 %v890
    %1345 = vmatpush.msra.mxu0 %v870
    %1346 = vmatpush.msra.mxu0 %v850
    %1347 = vmatpush.msra.mxu0 %v830
    %1348 = vmatmul.f32.gmra.mxu0 %v944
    %v1349 = vpop.f32.mrf.mxu0
    %v1350 = vadd.f32 %v916, %v1349
    %1351 = vmatmul.f32.gmra.mxu0 %v947
    %v1352 = vpop.f32.mrf.mxu0
    %v1353 = vadd.f32 %v916, %v1352
    %1354 = vmatmul.f32.gmra.mxu0 %v950
    %v1355 = vpop.f32.mrf.mxu0
    %v1356 = vadd.f32 %v916, %v1355
    %1357 = vmatmul.f32.gmra.mxu0 %v953
    %v1358 = vpop.f32.mrf.mxu0
    %v1359 = vadd.f32 %v916, %v1358
    %1360 = vdwg.mxu0
    %1361 = vmatpush.msra.mxu0 0.0
    %1362 = vmatpush.msra.mxu0 0.0
    %1363 = vmatpush.msra.mxu0 0.0
    %1364 = vmatpush.msra.mxu0 0.0
    %1365 = vmatpush.msra.mxu0 0.0
    %1366 = vmatpush.msra.mxu0 0.0
    %1367 = vmatpush.msra.mxu0 0.0
    %1368 = vmatpush.msra.mxu0 0.0
    %1369 = vmatpush.msra.mxu0 0.0
    %1370 = vmatpush.msra.mxu0 0.0
    %1371 = vmatpush.msra.mxu0 0.0
    %1372 = vmatpush.msra.mxu0 0.0
    %1373 = vmatpush.msra.mxu0 %v891
    %1374 = vmatpush.msra.mxu0 %v871
    %1375 = vmatpush.msra.mxu0 %v851
    %1376 = vmatpush.msra.mxu0 %v831
    %1377 = vmatmul.f32.gmra.mxu0 %v944
    %v1378 = vpop.f32.mrf.mxu0
    %v1379 = vadd.f32 %v917, %v1378
    %1380 = vmatmul.f32.gmra.mxu0 %v947
    %v1381 = vpop.f32.mrf.mxu0
    %v1382 = vadd.f32 %v917, %v1381
    %1383 = vmatmul.f32.gmra.mxu0 %v950
    %v1384 = vpop.f32.mrf.mxu0
    %v1385 = vadd.f32 %v917, %v1384
    %1386 = vmatmul.f32.gmra.mxu0 %v953
    %v1387 = vpop.f32.mrf.mxu0
    %v1388 = vadd.f32 %v917, %v1387
    %1389 = vdwg.mxu0
    %1390 = vmatpush.msra.mxu0 0.0
    %1391 = vmatpush.msra.mxu0 0.0
    %1392 = vmatpush.msra.mxu0 0.0
    %1393 = vmatpush.msra.mxu0 0.0
    %1394 = vmatpush.msra.mxu0 0.0
    %1395 = vmatpush.msra.mxu0 0.0
    %1396 = vmatpush.msra.mxu0 0.0
    %1397 = vmatpush.msra.mxu0 0.0
    %1398 = vmatpush.msra.mxu0 0.0
    %1399 = vmatpush.msra.mxu0 0.0
    %1400 = vmatpush.msra.mxu0 0.0
    %1401 = vmatpush.msra.mxu0 0.0
    %1402 = vmatpush.msra.mxu0 %v892
    %1403 = vmatpush.msra.mxu0 %v872
    %1404 = vmatpush.msra.mxu0 %v852
    %1405 = vmatpush.msra.mxu0 %v832
    %1406 = vmatmul.f32.gmra.mxu0 %v944
    %v1407 = vpop.f32.mrf.mxu0
    %v1408 = vadd.f32 %v918, %v1407
    %1409 = vmatmul.f32.gmra.mxu0 %v947
    %v1410 = vpop.f32.mrf.mxu0
    %v1411 = vadd.f32 %v918, %v1410
    %1412 = vmatmul.f32.gmra.mxu0 %v950
    %v1413 = vpop.f32.mrf.mxu0
    %v1414 = vadd.f32 %v918, %v1413
    %1415 = vmatmul.f32.gmra.mxu0 %v953
    %v1416 = vpop.f32.mrf.mxu0
    %v1417 = vadd.f32 %v918, %v1416
    %1418 = vdwg.mxu0
    %1419 = vmatpush.msra.mxu0 0.0
    %1420 = vmatpush.msra.mxu0 0.0
    %1421 = vmatpush.msra.mxu0 0.0
    %1422 = vmatpush.msra.mxu0 0.0
    %1423 = vmatpush.msra.mxu0 0.0
    %1424 = vmatpush.msra.mxu0 0.0
    %1425 = vmatpush.msra.mxu0 0.0
    %1426 = vmatpush.msra.mxu0 0.0
    %1427 = vmatpush.msra.mxu0 0.0
    %1428 = vmatpush.msra.mxu0 0.0
    %1429 = vmatpush.msra.mxu0 0.0
    %1430 = vmatpush.msra.mxu0 0.0
    %1431 = vmatpush.msra.mxu0 %v893
    %1432 = vmatpush.msra.mxu0 %v873
    %1433 = vmatpush.msra.mxu0 %v853
    %1434 = vmatpush.msra.mxu0 %v833
    %1435 = vmatmul.f32.gmra.mxu0 %v944
    %v1436 = vpop.f32.mrf.mxu0
    %v1437 = vadd.f32 %v919, %v1436
    %1438 = vmatmul.f32.gmra.mxu0 %v947
    %v1439 = vpop.f32.mrf.mxu0
    %v1440 = vadd.f32 %v919, %v1439
    %1441 = vmatmul.f32.gmra.mxu0 %v950
    %v1442 = vpop.f32.mrf.mxu0
    %v1443 = vadd.f32 %v919, %v1442
    %1444 = vmatmul.f32.gmra.mxu0 %v953
    %v1445 = vpop.f32.mrf.mxu0
    %v1446 = vadd.f32 %v919, %v1445
    %1447 = vdwg.mxu0
    %1448 = vmatpush.msra.mxu0 0.0
    %1449 = vmatpush.msra.mxu0 0.0
    %1450 = vmatpush.msra.mxu0 0.0
    %1451 = vmatpush.msra.mxu0 0.0
    %1452 = vmatpush.msra.mxu0 0.0
    %1453 = vmatpush.msra.mxu0 0.0
    %1454 = vmatpush.msra.mxu0 0.0
    %1455 = vmatpush.msra.mxu0 0.0
    %1456 = vmatpush.msra.mxu0 0.0
    %1457 = vmatpush.msra.mxu0 0.0
    %1458 = vmatpush.msra.mxu0 0.0
    %1459 = vmatpush.msra.mxu0 0.0
    %1460 = vmatpush.msra.mxu0 %v894
    %1461 = vmatpush.msra.mxu0 %v874
    %1462 = vmatpush.msra.mxu0 %v854
    %1463 = vmatpush.msra.mxu0 %v834
    %1464 = vmatmul.f32.gmra.mxu0 %v944
    %v1465 = vpop.f32.mrf.mxu0
    %v1466 = vadd.f32 %v920, %v1465
    %1467 = vmatmul.f32.gmra.mxu0 %v947
    %v1468 = vpop.f32.mrf.mxu0
    %v1469 = vadd.f32 %v920, %v1468
    %1470 = vmatmul.f32.gmra.mxu0 %v950
    %v1471 = vpop.f32.mrf.mxu0
    %v1472 = vadd.f32 %v920, %v1471
    %1473 = vmatmul.f32.gmra.mxu0 %v953
    %v1474 = vpop.f32.mrf.mxu0
    %v1475 = vadd.f32 %v920, %v1474
    %1476 = vdwg.mxu0
    %1477 = vmatpush.msra.mxu0 0.0
    %1478 = vmatpush.msra.mxu0 0.0
    %1479 = vmatpush.msra.mxu0 0.0
    %1480 = vmatpush.msra.mxu0 0.0
    %1481 = vmatpush.msra.mxu0 0.0
    %1482 = vmatpush.msra.mxu0 0.0
    %1483 = vmatpush.msra.mxu0 0.0
    %1484 = vmatpush.msra.mxu0 0.0
    %1485 = vmatpush.msra.mxu0 0.0
    %1486 = vmatpush.msra.mxu0 0.0
    %1487 = vmatpush.msra.mxu0 0.0
    %1488 = vmatpush.msra.mxu0 0.0
    %1489 = vmatpush.msra.mxu0 %v895
    %1490 = vmatpush.msra.mxu0 %v875
    %1491 = vmatpush.msra.mxu0 %v855
    %1492 = vmatpush.msra.mxu0 %v835
    %1493 = vmatmul.f32.gmra.mxu0 %v944
    %v1494 = vpop.f32.mrf.mxu0
    %v1495 = vadd.f32 %v921, %v1494
    %1496 = vmatmul.f32.gmra.mxu0 %v947
    %v1497 = vpop.f32.mrf.mxu0
    %v1498 = vadd.f32 %v921, %v1497
    %1499 = vmatmul.f32.gmra.mxu0 %v950
    %v1500 = vpop.f32.mrf.mxu0
    %v1501 = vadd.f32 %v921, %v1500
    %1502 = vmatmul.f32.gmra.mxu0 %v953
    %v1503 = vpop.f32.mrf.mxu0
    %v1504 = vadd.f32 %v921, %v1503
    %1505 = vdwg.mxu0
    %1506 = vmatpush.msra.mxu0 0.0
    %1507 = vmatpush.msra.mxu0 0.0
    %1508 = vmatpush.msra.mxu0 0.0
    %1509 = vmatpush.msra.mxu0 0.0
    %1510 = vmatpush.msra.mxu0 0.0
    %1511 = vmatpush.msra.mxu0 0.0
    %1512 = vmatpush.msra.mxu0 0.0
    %1513 = vmatpush.msra.mxu0 0.0
    %1514 = vmatpush.msra.mxu0 0.0
    %1515 = vmatpush.msra.mxu0 0.0
    %1516 = vmatpush.msra.mxu0 0.0
    %1517 = vmatpush.msra.mxu0 0.0
    %1518 = vmatpush.msra.mxu0 %v896
    %1519 = vmatpush.msra.mxu0 %v876
    %1520 = vmatpush.msra.mxu0 %v856
    %1521 = vmatpush.msra.mxu0 %v836
    %1522 = vmatmul.f32.gmra.mxu0 %v944
    %v1523 = vpop.f32.mrf.mxu0
    %v1524 = vadd.f32 %v922, %v1523
    %1525 = vmatmul.f32.gmra.mxu0 %v947
    %v1526 = vpop.f32.mrf.mxu0
    %v1527 = vadd.f32 %v922, %v1526
    %1528 = vmatmul.f32.gmra.mxu0 %v950
    %v1529 = vpop.f32.mrf.mxu0
    %v1530 = vadd.f32 %v922, %v1529
    %1531 = vmatmul.f32.gmra.mxu0 %v953
    %v1532 = vpop.f32.mrf.mxu0
    %v1533 = vadd.f32 %v922, %v1532
    %1534 = vdwg.mxu0
    %v1535 = vtanh.pop %v375
    %v1536 = vtanh.pop %v398
    %v1537 = vtanh.pop %v421
    %v1538 = vtanh.pop %v444
    %v1539 = vtanh.pop %v467
    %v1540 = vtanh.pop %v490
    %v1541 = vtanh.pop %v513
    %v1542 = vtanh.pop %v536
    %v1543 = vtanh.pop %v559
    %v1544 = vtanh.pop %v582
    %v1545 = vtanh.pop %v378
    %v1546 = vtanh.pop %v401
    %v1547 = vtanh.pop %v424
    %v1548 = vtanh.pop %v447
    %v1549 = vtanh.pop %v470
    %v1550 = vtanh.pop %v493
    %v1551 = vtanh.pop %v516
    %v1552 = vtanh.pop %v539
    %v1553 = vtanh.pop %v562
    %v1554 = vtanh.pop %v585
    %v1555 = vtanh.pop %v973
    %v1556 = vtanh.pop %v1002
    %v1557 = vtanh.pop %v1031
    %v1558 = vtanh.pop %v1060
    %v1559 = vtanh.pop %v1089
    %v1560 = vtanh.pop %v1118
    %v1561 = vtanh.pop %v1147
    %v1562 = vtanh.pop %v1176
    %v1563 = vtanh.pop %v1205
    %v1564 = vtanh.pop %v1234
    %v1565 = vtanh.pop %v976
    %v1566 = vtanh.pop %v1005
    %v1567 = vtanh.pop %v1034
    %v1568 = vtanh.pop %v1063
    %v1569 = vtanh.pop %v1092
    %v1570 = vtanh.pop %v1121
    %v1571 = vtanh.pop %v1150
    %v1572 = vtanh.pop %v1179
    %v1573 = vtanh.pop %v1208
    %v1574 = vtanh.pop %v1237
    %v1575 = vtanh.pop %v979
    %v1576 = vtanh.pop %v1008
    %v1577 = vtanh.pop %v1037
    %v1578 = vtanh.pop %v1066
    %v1579 = vtanh.pop %v1095
    %v1580 = vtanh.pop %v1124
    %v1581 = vtanh.pop %v1153
    %v1582 = vtanh.pop %v1182
    %v1583 = vtanh.pop %v1211
    %v1584 = vtanh.pop %v1240
    %v1585 = vtanh.pop %v982
    %v1586 = vtanh.pop %v1011
    %v1587 = vtanh.pop %v1040
    %v1588 = vtanh.pop %v1069
    %v1589 = vtanh.pop %v1098
    %v1590 = vtanh.pop %v1127
    %v1591 = vtanh.pop %v1156
    %v1592 = vtanh.pop %v1185
    %v1593 = vtanh.pop %v1214
    %v1594 = vtanh.pop %v1243
    %v1595 = vld [vmem:[#allocation18] sm:$0xff]
    %v1596 = vld [vmem:[#allocation18 + $0x8] sm:$0x3]
    %v1597 = vld [vmem:[#allocation20] sm:$0xff]
    %v1598 = vld [vmem:[#allocation20 + $0x8] sm:$0x3]
    %s1599 = sld [smem:[#allocation21]]
    %s1600 = sld [smem:[#allocation21 + $0x1]]
    %v1601 = vld [vmem:[#allocation8] sm:$0xff]
    %v1604 = vperm.slane %v1595, 0
    %v1605 = vperm.slane %v1595, 1
    %v1606 = vperm.slane %v1595, 2
    %v1607 = vperm.slane %v1595, 3
    %v1608 = vperm.slane %v1595, 4
    %v1609 = vperm.slane %v1595, 5
    %v1610 = vperm.slane %v1595, 6
    %v1611 = vperm.slane %v1595, 7
    %v1612 = vperm.slane %v1596, 0
    %v1613 = vperm.slane %v1596, 1
    %v1624 = vmul.f32 %v1535, %v1604
    %v1625 = vmul.f32 %v1536, %v1605
    %v1626 = vmul.f32 %v1537, %v1606
    %v1627 = vmul.f32 %v1538, %v1607
    %v1628 = vmul.f32 %v1539, %v1608
    %v1629 = vmul.f32 %v1540, %v1609
    %v1630 = vmul.f32 %v1541, %v1610
    %v1631 = vmul.f32 %v1542, %v1611
    %v1632 = vmul.f32 %v1543, %v1612
    %v1633 = vmul.f32 %v1544, %v1613
    %v1634 = vstv %s1599
    %1635 = vmatpush.xpose.msra.mxu0 0.0
    %1636 = vmatpush.xpose.msra.mxu0 0.0
    %1637 = vmatpush.xpose.msra.mxu0 0.0
    %1638 = vmatpush.xpose.msra.mxu0 0.0
    %1639 = vmatpush.xpose.msra.mxu0 0.0
    %1640 = vmatpush.xpose.msra.mxu0 0.0
    %1641 = vmatpush.xpose.msra.mxu0 0.0
    %1642 = vmatpush.xpose.msra.mxu0 0.0
    %1643 = vmatpush.xpose.msra.mxu0 0.0
    %1644 = vmatpush.xpose.msra.mxu0 0.0
    %1645 = vmatpush.xpose.msra.mxu0 0.0
    %1646 = vmatpush.xpose.msra.mxu0 0.0
    %1647 = vmatpush.xpose.msra.mxu0 0.0
    %1648 = vmatpush.xpose.msra.mxu0 0.0
    %1649 = vmatpush.xpose.msra.mxu0 %v1565
    %1650 = vmatpush.xpose.msra.mxu0 %v1555
    %1651 = vmatmul.f32.gmra.mxu0 %v1624
    %v1652 = vpop.f32.mrf.mxu0
    %v1653 = vadd.f32 %v1634, %v1652
    %1654 = vdwg.mxu0
    %1655 = vmatpush.xpose.msra.mxu0 0.0
    %1656 = vmatpush.xpose.msra.mxu0 0.0
    %1657 = vmatpush.xpose.msra.mxu0 0.0
    %1658 = vmatpush.xpose.msra.mxu0 0.0
    %1659 = vmatpush.xpose.msra.mxu0 0.0
    %1660 = vmatpush.xpose.msra.mxu0 0.0
    %1661 = vmatpush.xpose.msra.mxu0 0.0
    %1662 = vmatpush.xpose.msra.mxu0 0.0
    %1663 = vmatpush.xpose.msra.mxu0 0.0
    %1664 = vmatpush.xpose.msra.mxu0 0.0
    %1665 = vmatpush.xpose.msra.mxu0 0.0
    %1666 = vmatpush.xpose.msra.mxu0 0.0
    %1667 = vmatpush.xpose.msra.mxu0 0.0
    %1668 = vmatpush.xpose.msra.mxu0 0.0
    %1669 = vmatpush.xpose.msra.mxu0 %v1566
    %1670 = vmatpush.xpose.msra.mxu0 %v1556
    %1671 = vmatmul.f32.gmra.mxu0 %v1625
    %v1672 = vpop.f32.mrf.mxu0
    %v1673 = vadd.f32 %v1653, %v1672
    %1674 = vdwg.mxu0
    %1675 = vmatpush.xpose.msra.mxu0 0.0
    %1676 = vmatpush.xpose.msra.mxu0 0.0
    %1677 = vmatpush.xpose.msra.mxu0 0.0
    %1678 = vmatpush.xpose.msra.mxu0 0.0
    %1679 = vmatpush.xpose.msra.mxu0 0.0
    %1680 = vmatpush.xpose.msra.mxu0 0.0
    %1681 = vmatpush.xpose.msra.mxu0 0.0
    %1682 = vmatpush.xpose.msra.mxu0 0.0
    %1683 = vmatpush.xpose.msra.mxu0 0.0
    %1684 = vmatpush.xpose.msra.mxu0 0.0
    %1685 = vmatpush.xpose.msra.mxu0 0.0
    %1686 = vmatpush.xpose.msra.mxu0 0.0
    %1687 = vmatpush.xpose.msra.mxu0 0.0
    %1688 = vmatpush.xpose.msra.mxu0 0.0
    %1689 = vmatpush.xpose.msra.mxu0 %v1567
    %1690 = vmatpush.xpose.msra.mxu0 %v1557
    %1691 = vmatmul.f32.gmra.mxu0 %v1626
    %v1692 = vpop.f32.mrf.mxu0
    %v1693 = vadd.f32 %v1673, %v1692
    %1694 = vdwg.mxu0
    %1695 = vmatpush.xpose.msra.mxu0 0.0
    %1696 = vmatpush.xpose.msra.mxu0 0.0
    %1697 = vmatpush.xpose.msra.mxu0 0.0
    %1698 = vmatpush.xpose.msra.mxu0 0.0
    %1699 = vmatpush.xpose.msra.mxu0 0.0
    %1700 = vmatpush.xpose.msra.mxu0 0.0
    %1701 = vmatpush.xpose.msra.mxu0 0.0
    %1702 = vmatpush.xpose.msra.mxu0 0.0
    %1703 = vmatpush.xpose.msra.mxu0 0.0
    %1704 = vmatpush.xpose.msra.mxu0 0.0
    %1705 = vmatpush.xpose.msra.mxu0 0.0
    %1706 = vmatpush.xpose.msra.mxu0 0.0
    %1707 = vmatpush.xpose.msra.mxu0 0.0
    %1708 = vmatpush.xpose.msra.mxu0 0.0
    %1709 = vmatpush.xpose.msra.mxu0 %v1568
    %1710 = vmatpush.xpose.msra.mxu0 %v1558
    %1711 = vmatmul.f32.gmra.mxu0 %v1627
    %v1712 = vpop.f32.mrf.mxu0
    %v1713 = vadd.f32 %v1693, %v1712
    %1714 = vdwg.mxu0
    %1715 = vmatpush.xpose.msra.mxu0 0.0
    %1716 = vmatpush.xpose.msra.mxu0 0.0
    %1717 = vmatpush.xpose.msra.mxu0 0.0
    %1718 = vmatpush.xpose.msra.mxu0 0.0
    %1719 = vmatpush.xpose.msra.mxu0 0.0
    %1720 = vmatpush.xpose.msra.mxu0 0.0
    %1721 = vmatpush.xpose.msra.mxu0 0.0
    %1722 = vmatpush.xpose.msra.mxu0 0.0
    %1723 = vmatpush.xpose.msra.mxu0 0.0
    %1724 = vmatpush.xpose.msra.mxu0 0.0
    %1725 = vmatpush.xpose.msra.mxu0 0.0
    %1726 = vmatpush.xpose.msra.mxu0 0.0
    %1727 = vmatpush.xpose.msra.mxu0 0.0
    %1728 = vmatpush.xpose.msra.mxu0 0.0
    %1729 = vmatpush.xpose.msra.mxu0 %v1569
    %1730 = vmatpush.xpose.msra.mxu0 %v1559
    %1731 = vmatmul.f32.gmra.mxu0 %v1628
    %v1732 = vpop.f32.mrf.mxu0
    %v1733 = vadd.f32 %v1713, %v1732
    %1734 = vdwg.mxu0
    %1735 = vmatpush.xpose.msra.mxu0 0.0
    %1736 = vmatpush.xpose.msra.mxu0 0.0
    %1737 = vmatpush.xpose.msra.mxu0 0.0
    %1738 = vmatpush.xpose.msra.mxu0 0.0
    %1739 = vmatpush.xpose.msra.mxu0 0.0
    %1740 = vmatpush.xpose.msra.mxu0 0.0
    %1741 = vmatpush.xpose.msra.mxu0 0.0
    %1742 = vmatpush.xpose.msra.mxu0 0.0
    %1743 = vmatpush.xpose.msra.mxu0 0.0
    %1744 = vmatpush.xpose.msra.mxu0 0.0
    %1745 = vmatpush.xpose.msra.mxu0 0.0
    %1746 = vmatpush.xpose.msra.mxu0 0.0
    %1747 = vmatpush.xpose.msra.mxu0 0.0
    %1748 = vmatpush.xpose.msra.mxu0 0.0
    %1749 = vmatpush.xpose.msra.mxu0 %v1570
    %1750 = vmatpush.xpose.msra.mxu0 %v1560
    %1751 = vmatmul.f32.gmra.mxu0 %v1629
    %v1752 = vpop.f32.mrf.mxu0
    %v1753 = vadd.f32 %v1733, %v1752
    %1754 = vdwg.mxu0
    %1755 = vmatpush.xpose.msra.mxu0 0.0
    %1756 = vmatpush.xpose.msra.mxu0 0.0
    %1757 = vmatpush.xpose.msra.mxu0 0.0
    %1758 = vmatpush.xpose.msra.mxu0 0.0
    %1759 = vmatpush.xpose.msra.mxu0 0.0
    %1760 = vmatpush.xpose.msra.mxu0 0.0
    %1761 = vmatpush.xpose.msra.mxu0 0.0
    %1762 = vmatpush.xpose.msra.mxu0 0.0
    %1763 = vmatpush.xpose.msra.mxu0 0.0
    %1764 = vmatpush.xpose.msra.mxu0 0.0
    %1765 = vmatpush.xpose.msra.mxu0 0.0
    %1766 = vmatpush.xpose.msra.mxu0 0.0
    %1767 = vmatpush.xpose.msra.mxu0 0.0
    %1768 = vmatpush.xpose.msra.mxu0 0.0
    %1769 = vmatpush.xpose.msra.mxu0 %v1571
    %1770 = vmatpush.xpose.msra.mxu0 %v1561
    %1771 = vmatmul.f32.gmra.mxu0 %v1630
    %v1772 = vpop.f32.mrf.mxu0
    %v1773 = vadd.f32 %v1753, %v1772
    %1774 = vdwg.mxu0
    %1775 = vmatpush.xpose.msra.mxu0 0.0
    %1776 = vmatpush.xpose.msra.mxu0 0.0
    %1777 = vmatpush.xpose.msra.mxu0 0.0
    %1778 = vmatpush.xpose.msra.mxu0 0.0
    %1779 = vmatpush.xpose.msra.mxu0 0.0
    %1780 = vmatpush.xpose.msra.mxu0 0.0
    %1781 = vmatpush.xpose.msra.mxu0 0.0
    %1782 = vmatpush.xpose.msra.mxu0 0.0
    %1783 = vmatpush.xpose.msra.mxu0 0.0
    %1784 = vmatpush.xpose.msra.mxu0 0.0
    %1785 = vmatpush.xpose.msra.mxu0 0.0
    %1786 = vmatpush.xpose.msra.mxu0 0.0
    %1787 = vmatpush.xpose.msra.mxu0 0.0
    %1788 = vmatpush.xpose.msra.mxu0 0.0
    %1789 = vmatpush.xpose.msra.mxu0 %v1572
    %1790 = vmatpush.xpose.msra.mxu0 %v1562
    %1791 = vmatmul.f32.gmra.mxu0 %v1631
    %v1792 = vpop.f32.mrf.mxu0
    %v1793 = vadd.f32 %v1773, %v1792
    %1794 = vdwg.mxu0
    %1795 = vmatpush.xpose.msra.mxu0 0.0
    %1796 = vmatpush.xpose.msra.mxu0 0.0
    %1797 = vmatpush.xpose.msra.mxu0 0.0
    %1798 = vmatpush.xpose.msra.mxu0 0.0
    %1799 = vmatpush.xpose.msra.mxu0 0.0
    %1800 = vmatpush.xpose.msra.mxu0 0.0
    %1801 = vmatpush.xpose.msra.mxu0 0.0
    %1802 = vmatpush.xpose.msra.mxu0 0.0
    %1803 = vmatpush.xpose.msra.mxu0 0.0
    %1804 = vmatpush.xpose.msra.mxu0 0.0
    %1805 = vmatpush.xpose.msra.mxu0 0.0
    %1806 = vmatpush.xpose.msra.mxu0 0.0
    %1807 = vmatpush.xpose.msra.mxu0 0.0
    %1808 = vmatpush.xpose.msra.mxu0 0.0
    %1809 = vmatpush.xpose.msra.mxu0 %v1573
    %1810 = vmatpush.xpose.msra.mxu0 %v1563
    %1811 = vmatmul.f32.gmra.mxu0 %v1632
    %v1812 = vpop.f32.mrf.mxu0
    %v1813 = vadd.f32 %v1793, %v1812
    %1814 = vdwg.mxu0
    %1815 = vmatpush.xpose.msra.mxu0 0.0
    %1816 = vmatpush.xpose.msra.mxu0 0.0
    %1817 = vmatpush.xpose.msra.mxu0 0.0
    %1818 = vmatpush.xpose.msra.mxu0 0.0
    %1819 = vmatpush.xpose.msra.mxu0 0.0
    %1820 = vmatpush.xpose.msra.mxu0 0.0
    %1821 = vmatpush.xpose.msra.mxu0 0.0
    %1822 = vmatpush.xpose.msra.mxu0 0.0
    %1823 = vmatpush.xpose.msra.mxu0 0.0
    %1824 = vmatpush.xpose.msra.mxu0 0.0
    %1825 = vmatpush.xpose.msra.mxu0 0.0
    %1826 = vmatpush.xpose.msra.mxu0 0.0
    %1827 = vmatpush.xpose.msra.mxu0 0.0
    %1828 = vmatpush.xpose.msra.mxu0 0.0
    %1829 = vmatpush.xpose.msra.mxu0 %v1574
    %1830 = vmatpush.xpose.msra.mxu0 %v1564
    %1831 = vmatmul.f32.gmra.mxu0 %v1633
    %v1832 = vpop.f32.mrf.mxu0
    %v1833 = vadd.f32 %v1813, %v1832
    %1834 = vdwg.mxu0
    %v1835 = vadd.f32 %v1833, %v1601
    %vm1836 = vcmask 130048
    %v1837 = vsel %vm1836, %v1835, -inf
    %v1838 = vrot.slane %v1837, 4
    %v1839 = vmax.f32 %v1837, %v1838
    %v1840 = vrot.slane %v1839, 2
    %v1841 = vmax.f32 %v1839, %v1840
    %v1842 = vrot.slane %v1841, 1
    %v1843 = vmax.f32 %v1841, %v1842
    %v1844 = vsub.f32 %v1835, %v1843
    %v1845 = vmul.f32 %v1844, 1.442695
    %v1846 = vpow.pop %v1845
    %v1847 = vsel %vm1836, %v1846, 0.0
    %v1848 = vrot.slane %v1847, 4
    %v1849 = vadd.f32 %v1847, %v1848
    %v1850 = vrot.slane %v1849, 2
    %v1851 = vadd.f32 %v1849, %v1850
    %v1852 = vrot.slane %v1851, 1
    %v1853 = vadd.f32 %v1851, %v1852
    %v1854 = vrcp.pop %v1853
    %v1855 = vmul.f32 %v1853, %v1854
    %v1856 = vsub.f32 1.0, %v1855
    %v1857 = vmul.f32 %v1854, %v1856
    %v1858 = vadd.f32 %v1854, %v1857
    %vm1859 = vweird.f32 %v1853
    %vm1860 = vweird.f32 %v1854
    %vm1861 = vmor %vm1859, %vm1860
    %v1862 = vsel %vm1861, %v1854, %v1858
    %v1863 = vand.u32 2147483647, %v1853
    %vm1864 = vcmp.eq.f32.partialorder %v1863, 8.507059e+37
    %v1865 = vand.u32 %v1853, 2147483648
    %v1866 = vor.u32 1.1754944e-38, %v1865
    %v1867 = vsel %vm1864, %v1866, %v1862
    %v1868 = vmul.f32 %v1846, %v1867
    %1869 = vmax.xlane.f32.xlu0 %v1837
    %v1870 = vpop.xlane.xlu0 %1869
    %v1871 = vsub.f32 %v1835, %v1870
    %v1872 = vmul.f32 %v1871, 1.442695
    %v1873 = vpow.pop %v1872
    %v1874 = vsel %vm1836, %v1873, 0.0
    %1875 = vadd.xlane.f32.xlu0 %v1874
    %v1876 = vpop.xlane.xlu0 %1875
    %v1877 = vrcp.pop %v1876
    %v1878 = vmul.f32 %v1876, %v1877
    %v1879 = vsub.f32 1.0, %v1878
    %v1880 = vmul.f32 %v1877, %v1879
    %v1881 = vadd.f32 %v1877, %v1880
    %vm1882 = vweird.f32 %v1876
    %vm1883 = vweird.f32 %v1877
    %vm1884 = vmor %vm1882, %vm1883
    %v1885 = vsel %vm1884, %v1877, %v1881
    %v1886 = vand.u32 2147483647, %v1876
    %vm1887 = vcmp.eq.f32.partialorder %v1886, 8.507059e+37
    %v1888 = vand.u32 %v1876, 2147483648
    %v1889 = vor.u32 1.1754944e-38, %v1888
    %v1890 = vsel %vm1887, %v1889, %v1885
    %v1891 = vmul.f32 %v1873, %v1890
    %1892 = vxpose.xlu0.b32.start [1/16] %v1868, 128
    %1893 = vxpose.xlu0.b32.cont [2/16] 0.0, 128
    %1894 = vxpose.xlu0.b32.cont [3/16] 0.0, 128
    %1895 = vxpose.xlu0.b32.cont [4/16] 0.0, 128
    %1896 = vxpose.xlu0.b32.cont [5/16] 0.0, 128
    %1897 = vxpose.xlu0.b32.cont [6/16] 0.0, 128
    %1898 = vxpose.xlu0.b32.cont [7/16] 0.0, 128
    %1899 = vxpose.xlu0.b32.cont [8/16] 0.0, 128
    %1900 = vxpose.xlu0.b32.cont [9/16] 0.0, 128
    %1901 = vxpose.xlu0.b32.cont [10/16] 0.0, 128
    %1902 = vxpose.xlu0.b32.cont [11/16] 0.0, 128
    %1903 = vxpose.xlu0.b32.cont [12/16] 0.0, 128
    %1904 = vxpose.xlu0.b32.cont [13/16] 0.0, 128
    %1905 = vxpose.xlu0.b32.cont [14/16] 0.0, 128
    %1906 = vxpose.xlu0.b32.cont [15/16] 0.0, 128
    %1907 = vxpose.xlu0.b32.end [16/16] 0.0, 128
    %v1908 = vpop.trf.xlu0
    %v1909 = vpop.trf.xlu0
    %v1910 = vpop.trf.xlu0
    %v1911 = vpop.trf.xlu0
    %v1912 = vpop.trf.xlu0
    %v1913 = vpop.trf.xlu0
    %v1914 = vpop.trf.xlu0
    %v1915 = vpop.trf.xlu0
    %v1916 = vpop.trf.xlu0
    %v1917 = vpop.trf.xlu0
    %v1918 = vpop.trf.xlu0
    %v1919 = vpop.trf.xlu0
    %v1920 = vpop.trf.xlu0
    %v1921 = vpop.trf.xlu0
    %v1922 = vpop.trf.xlu0
    %v1923 = vpop.trf.xlu0
    %vm1924 = vcmask 64512
    %v1926 = vsel %vm1924, %v1908, 0
    %v1929 = vsel %vm1924, %v1909, 0
    %1931 = vmatpush.msra.mxu0 0.0
    %1932 = vmatpush.msra.mxu0 0.0
    %1933 = vmatpush.msra.mxu0 0.0
    %1934 = vmatpush.msra.mxu0 0.0
    %1935 = vmatpush.msra.mxu0 0.0
    %1936 = vmatpush.msra.mxu0 0.0
    %1937 = vmatpush.msra.mxu0 0.0
    %1938 = vmatpush.msra.mxu0 0.0
    %1939 = vmatpush.msra.mxu0 0.0
    %1940 = vmatpush.msra.mxu0 0.0
    %1941 = vmatpush.msra.mxu0 0.0
    %1942 = vmatpush.msra.mxu0 0.0
    %1943 = vmatpush.msra.mxu0 0.0
    %1944 = vmatpush.msra.mxu0 0.0
    %1945 = vmatpush.msra.mxu0 0.0
    %1946 = vmatpush.msra.mxu0 %v218
    %1947 = vmatmul.f32.gmra.mxu0 %v1926
    %v1948 = vpop.f32.mrf.mxu0
    %v1949 = vadd.f32 0.0, %v1948
    %1950 = vmatmul.f32.gmra.mxu0 %v1929
    %v1951 = vpop.f32.mrf.mxu0
    %v1952 = vadd.f32 0.0, %v1951
    %1953 = vdwg.mxu0
    %v1955 = vsel %vm1836, %v1891, 0
    %1957 = vmatpush.msra.mxu0 0.0
    %1958 = vmatpush.msra.mxu0 0.0
    %1959 = vmatpush.msra.mxu0 0.0
    %1960 = vmatpush.msra.mxu0 0.0
    %1961 = vmatpush.msra.mxu0 0.0
    %1962 = vmatpush.msra.mxu0 0.0
    %1963 = vmatpush.msra.mxu0 0.0
    %1964 = vmatpush.msra.mxu0 0.0
    %1965 = vmatpush.msra.mxu0 0.0
    %1966 = vmatpush.msra.mxu0 0.0
    %1967 = vmatpush.msra.mxu0 0.0
    %1968 = vmatpush.msra.mxu0 0.0
    %1969 = vmatpush.msra.mxu0 0.0
    %1970 = vmatpush.msra.mxu0 0.0
    %1971 = vmatpush.msra.mxu0 %v221
    %1972 = vmatpush.msra.mxu0 %v220
    %1973 = vmatmul.f32.gmra.mxu0 %v1955
    %v1974 = vpop.f32.mrf.mxu0
    %v1975 = vadd.f32 0.0, %v1974
    %1976 = vdwg.mxu0
    %s1977 = scalar_lea.vmem [#allocation8], 8
    %v1978 = vld [vmem:[%s1977] sm:$0xff]
    %v1979 = vmul.f32 %v1545, %v1604
    %v1980 = vmul.f32 %v1546, %v1605
    %v1981 = vmul.f32 %v1547, %v1606
    %v1982 = vmul.f32 %v1548, %v1607
    %v1983 = vmul.f32 %v1549, %v1608
    %v1984 = vmul.f32 %v1550, %v1609
    %v1985 = vmul.f32 %v1551, %v1610
    %v1986 = vmul.f32 %v1552, %v1611
    %v1987 = vmul.f32 %v1553, %v1612
    %v1988 = vmul.f32 %v1554, %v1613
    %1989 = vmatpush.xpose.msra.mxu0 0.0
    %1990 = vmatpush.xpose.msra.mxu0 0.0
    %1991 = vmatpush.xpose.msra.mxu0 0.0
    %1992 = vmatpush.xpose.msra.mxu0 0.0
    %1993 = vmatpush.xpose.msra.mxu0 0.0
    %1994 = vmatpush.xpose.msra.mxu0 0.0
    %1995 = vmatpush.xpose.msra.mxu0 0.0
    %1996 = vmatpush.xpose.msra.mxu0 0.0
    %1997 = vmatpush.xpose.msra.mxu0 0.0
    %1998 = vmatpush.xpose.msra.mxu0 0.0
    %1999 = vmatpush.xpose.msra.mxu0 0.0
    %2000 = vmatpush.xpose.msra.mxu0 0.0
    %2001 = vmatpush.xpose.msra.mxu0 0.0
    %2002 = vmatpush.xpose.msra.mxu0 0.0
    %2003 = vmatpush.xpose.msra.mxu0 %v1585
    %2004 = vmatpush.xpose.msra.mxu0 %v1575
    %2005 = vmatmul.f32.gmra.mxu0 %v1979
    %v2006 = vpop.f32.mrf.mxu0
    %v2007 = vadd.f32 %v1634, %v2006
    %2008 = vdwg.mxu0
    %2009 = vmatpush.xpose.msra.mxu0 0.0
    %2010 = vmatpush.xpose.msra.mxu0 0.0
    %2011 = vmatpush.xpose.msra.mxu0 0.0
    %2012 = vmatpush.xpose.msra.mxu0 0.0
    %2013 = vmatpush.xpose.msra.mxu0 0.0
    %2014 = vmatpush.xpose.msra.mxu0 0.0
    %2015 = vmatpush.xpose.msra.mxu0 0.0
    %2016 = vmatpush.xpose.msra.mxu0 0.0
    %2017 = vmatpush.xpose.msra.mxu0 0.0
    %2018 = vmatpush.xpose.msra.mxu0 0.0
    %2019 = vmatpush.xpose.msra.mxu0 0.0
    %2020 = vmatpush.xpose.msra.mxu0 0.0
    %2021 = vmatpush.xpose.msra.mxu0 0.0
    %2022 = vmatpush.xpose.msra.mxu0 0.0
    %2023 = vmatpush.xpose.msra.mxu0 %v1586
    %2024 = vmatpush.xpose.msra.mxu0 %v1576
    %2025 = vmatmul.f32.gmra.mxu0 %v1980
    %v2026 = vpop.f32.mrf.mxu0
    %v2027 = vadd.f32 %v2007, %v2026
    %2028 = vdwg.mxu0
    %2029 = vmatpush.xpose.msra.mxu0 0.0
    %2030 = vmatpush.xpose.msra.mxu0 0.0
    %2031 = vmatpush.xpose.msra.mxu0 0.0
    %2032 = vmatpush.xpose.msra.mxu0 0.0
    %2033 = vmatpush.xpose.msra.mxu0 0.0
    %2034 = vmatpush.xpose.msra.mxu0 0.0
    %2035 = vmatpush.xpose.msra.mxu0 0.0
    %2036 = vmatpush.xpose.msra.mxu0 0.0
    %2037 = vmatpush.xpose.msra.mxu0 0.0
    %2038 = vmatpush.xpose.msra.mxu0 0.0
    %2039 = vmatpush.xpose.msra.mxu0 0.0
    %2040 = vmatpush.xpose.msra.mxu0 0.0
    %2041 = vmatpush.xpose.msra.mxu0 0.0
    %2042 = vmatpush.xpose.msra.mxu0 0.0
    %2043 = vmatpush.xpose.msra.mxu0 %v1587
    %2044 = vmatpush.xpose.msra.mxu0 %v1577
    %2045 = vmatmul.f32.gmra.mxu0 %v1981
    %v2046 = vpop.f32.mrf.mxu0
    %v2047 = vadd.f32 %v2027, %v2046
    %2048 = vdwg.mxu0
    %2049 = vmatpush.xpose.msra.mxu0 0.0
    %2050 = vmatpush.xpose.msra.mxu0 0.0
    %2051 = vmatpush.xpose.msra.mxu0 0.0
    %2052 = vmatpush.xpose.msra.mxu0 0.0
    %2053 = vmatpush.xpose.msra.mxu0 0.0
    %2054 = vmatpush.xpose.msra.mxu0 0.0
    %2055 = vmatpush.xpose.msra.mxu0 0.0
    %2056 = vmatpush.xpose.msra.mxu0 0.0
    %2057 = vmatpush.xpose.msra.mxu0 0.0
    %2058 = vmatpush.xpose.msra.mxu0 0.0
    %2059 = vmatpush.xpose.msra.mxu0 0.0
    %2060 = vmatpush.xpose.msra.mxu0 0.0
    %2061 = vmatpush.xpose.msra.mxu0 0.0
    %2062 = vmatpush.xpose.msra.mxu0 0.0
    %2063 = vmatpush.xpose.msra.mxu0 %v1588
    %2064 = vmatpush.xpose.msra.mxu0 %v1578
    %2065 = vmatmul.f32.gmra.mxu0 %v1982
    %v2066 = vpop.f32.mrf.mxu0
    %v2067 = vadd.f32 %v2047, %v2066
    %2068 = vdwg.mxu0
    %2069 = vmatpush.xpose.msra.mxu0 0.0
    %2070 = vmatpush.xpose.msra.mxu0 0.0
    %2071 = vmatpush.xpose.msra.mxu0 0.0
    %2072 = vmatpush.xpose.msra.mxu0 0.0
    %2073 = vmatpush.xpose.msra.mxu0 0.0
    %2074 = vmatpush.xpose.msra.mxu0 0.0
    %2075 = vmatpush.xpose.msra.mxu0 0.0
    %2076 = vmatpush.xpose.msra.mxu0 0.0
    %2077 = vmatpush.xpose.msra.mxu0 0.0
    %2078 = vmatpush.xpose.msra.mxu0 0.0
    %2079 = vmatpush.xpose.msra.mxu0 0.0
    %2080 = vmatpush.xpose.msra.mxu0 0.0
    %2081 = vmatpush.xpose.msra.mxu0 0.0
    %2082 = vmatpush.xpose.msra.mxu0 0.0
    %2083 = vmatpush.xpose.msra.mxu0 %v1589
    %2084 = vmatpush.xpose.msra.mxu0 %v1579
    %2085 = vmatmul.f32.gmra.mxu0 %v1983
    %v2086 = vpop.f32.mrf.mxu0
    %v2087 = vadd.f32 %v2067, %v2086
    %2088 = vdwg.mxu0
    %2089 = vmatpush.xpose.msra.mxu0 0.0
    %2090 = vmatpush.xpose.msra.mxu0 0.0
    %2091 = vmatpush.xpose.msra.mxu0 0.0
    %2092 = vmatpush.xpose.msra.mxu0 0.0
    %2093 = vmatpush.xpose.msra.mxu0 0.0
    %2094 = vmatpush.xpose.msra.mxu0 0.0
    %2095 = vmatpush.xpose.msra.mxu0 0.0
    %2096 = vmatpush.xpose.msra.mxu0 0.0
    %2097 = vmatpush.xpose.msra.mxu0 0.0
    %2098 = vmatpush.xpose.msra.mxu0 0.0
    %2099 = vmatpush.xpose.msra.mxu0 0.0
    %2100 = vmatpush.xpose.msra.mxu0 0.0
    %2101 = vmatpush.xpose.msra.mxu0 0.0
    %2102 = vmatpush.xpose.msra.mxu0 0.0
    %2103 = vmatpush.xpose.msra.mxu0 %v1590
    %2104 = vmatpush.xpose.msra.mxu0 %v1580
    %2105 = vmatmul.f32.gmra.mxu0 %v1984
    %v2106 = vpop.f32.mrf.mxu0
    %v2107 = vadd.f32 %v2087, %v2106
    %2108 = vdwg.mxu0
    %2109 = vmatpush.xpose.msra.mxu0 0.0
    %2110 = vmatpush.xpose.msra.mxu0 0.0
    %2111 = vmatpush.xpose.msra.mxu0 0.0
    %2112 = vmatpush.xpose.msra.mxu0 0.0
    %2113 = vmatpush.xpose.msra.mxu0 0.0
    %2114 = vmatpush.xpose.msra.mxu0 0.0
    %2115 = vmatpush.xpose.msra.mxu0 0.0
    %2116 = vmatpush.xpose.msra.mxu0 0.0
    %2117 = vmatpush.xpose.msra.mxu0 0.0
    %2118 = vmatpush.xpose.msra.mxu0 0.0
    %2119 = vmatpush.xpose.msra.mxu0 0.0
    %2120 = vmatpush.xpose.msra.mxu0 0.0
    %2121 = vmatpush.xpose.msra.mxu0 0.0
    %2122 = vmatpush.xpose.msra.mxu0 0.0
    %2123 = vmatpush.xpose.msra.mxu0 %v1591
    %2124 = vmatpush.xpose.msra.mxu0 %v1581
    %2125 = vmatmul.f32.gmra.mxu0 %v1985
    %v2126 = vpop.f32.mrf.mxu0
    %v2127 = vadd.f32 %v2107, %v2126
    %2128 = vdwg.mxu0
    %2129 = vmatpush.xpose.msra.mxu0 0.0
    %2130 = vmatpush.xpose.msra.mxu0 0.0
    %2131 = vmatpush.xpose.msra.mxu0 0.0
    %2132 = vmatpush.xpose.msra.mxu0 0.0
    %2133 = vmatpush.xpose.msra.mxu0 0.0
    %2134 = vmatpush.xpose.msra.mxu0 0.0
    %2135 = vmatpush.xpose.msra.mxu0 0.0
    %2136 = vmatpush.xpose.msra.mxu0 0.0
    %2137 = vmatpush.xpose.msra.mxu0 0.0
    %2138 = vmatpush.xpose.msra.mxu0 0.0
    %2139 = vmatpush.xpose.msra.mxu0 0.0
    %2140 = vmatpush.xpose.msra.mxu0 0.0
    %2141 = vmatpush.xpose.msra.mxu0 0.0
    %2142 = vmatpush.xpose.msra.mxu0 0.0
    %2143 = vmatpush.xpose.msra.mxu0 %v1592
    %2144 = vmatpush.xpose.msra.mxu0 %v1582
    %2145 = vmatmul.f32.gmra.mxu0 %v1986
    %v2146 = vpop.f32.mrf.mxu0
    %v2147 = vadd.f32 %v2127, %v2146
    %2148 = vdwg.mxu0
    %2149 = vmatpush.xpose.msra.mxu0 0.0
    %2150 = vmatpush.xpose.msra.mxu0 0.0
    %2151 = vmatpush.xpose.msra.mxu0 0.0
    %2152 = vmatpush.xpose.msra.mxu0 0.0
    %2153 = vmatpush.xpose.msra.mxu0 0.0
    %2154 = vmatpush.xpose.msra.mxu0 0.0
    %2155 = vmatpush.xpose.msra.mxu0 0.0
    %2156 = vmatpush.xpose.msra.mxu0 0.0
    %2157 = vmatpush.xpose.msra.mxu0 0.0
    %2158 = vmatpush.xpose.msra.mxu0 0.0
    %2159 = vmatpush.xpose.msra.mxu0 0.0
    %2160 = vmatpush.xpose.msra.mxu0 0.0
    %2161 = vmatpush.xpose.msra.mxu0 0.0
    %2162 = vmatpush.xpose.msra.mxu0 0.0
    %2163 = vmatpush.xpose.msra.mxu0 %v1593
    %2164 = vmatpush.xpose.msra.mxu0 %v1583
    %2165 = vmatmul.f32.gmra.mxu0 %v1987
    %v2166 = vpop.f32.mrf.mxu0
    %v2167 = vadd.f32 %v2147, %v2166
    %2168 = vdwg.mxu0
    %2169 = vmatpush.xpose.msra.mxu0 0.0
    %2170 = vmatpush.xpose.msra.mxu0 0.0
    %2171 = vmatpush.xpose.msra.mxu0 0.0
    %2172 = vmatpush.xpose.msra.mxu0 0.0
    %2173 = vmatpush.xpose.msra.mxu0 0.0
    %2174 = vmatpush.xpose.msra.mxu0 0.0
    %2175 = vmatpush.xpose.msra.mxu0 0.0
    %2176 = vmatpush.xpose.msra.mxu0 0.0
    %2177 = vmatpush.xpose.msra.mxu0 0.0
    %2178 = vmatpush.xpose.msra.mxu0 0.0
    %2179 = vmatpush.xpose.msra.mxu0 0.0
    %2180 = vmatpush.xpose.msra.mxu0 0.0
    %2181 = vmatpush.xpose.msra.mxu0 0.0
    %2182 = vmatpush.xpose.msra.mxu0 0.0
    %2183 = vmatpush.xpose.msra.mxu0 %v1594
    %2184 = vmatpush.xpose.msra.mxu0 %v1584
    %2185 = vmatmul.f32.gmra.mxu0 %v1988
    %v2186 = vpop.f32.mrf.mxu0
    %v2187 = vadd.f32 %v2167, %v2186
    %2188 = vdwg.mxu0
    %v2189 = vadd.f32 %v2187, %v1978
    %v2190 = vsel %vm1836, %v2189, -inf
    %v2191 = vrot.slane %v2190, 4
    %v2192 = vmax.f32 %v2190, %v2191
    %v2193 = vrot.slane %v2192, 2
    %v2194 = vmax.f32 %v2192, %v2193
    %v2195 = vrot.slane %v2194, 1
    %v2196 = vmax.f32 %v2194, %v2195
    %v2197 = vsub.f32 %v2189, %v2196
    %v2198 = vmul.f32 %v2197, 1.442695
    %v2199 = vpow.pop %v2198
    %v2200 = vsel %vm1836, %v2199, 0.0
    %v2201 = vrot.slane %v2200, 4
    %v2202 = vadd.f32 %v2200, %v2201
    %v2203 = vrot.slane %v2202, 2
    %v2204 = vadd.f32 %v2202, %v2203
    %v2205 = vrot.slane %v2204, 1
    %v2206 = vadd.f32 %v2204, %v2205
    %v2207 = vrcp.pop %v2206
    %v2208 = vmul.f32 %v2206, %v2207
    %v2209 = vsub.f32 1.0, %v2208
    %v2210 = vmul.f32 %v2207, %v2209
    %v2211 = vadd.f32 %v2207, %v2210
    %vm2212 = vweird.f32 %v2206
    %vm2213 = vweird.f32 %v2207
    %vm2214 = vmor %vm2212, %vm2213
    %v2215 = vsel %vm2214, %v2207, %v2211
    %v2216 = vand.u32 2147483647, %v2206
    %vm2217 = vcmp.eq.f32.partialorder %v2216, 8.507059e+37
    %v2218 = vand.u32 %v2206, 2147483648
    %v2219 = vor.u32 1.1754944e-38, %v2218
    %v2220 = vsel %vm2217, %v2219, %v2215
    %v2221 = vmul.f32 %v2199, %v2220
    %2222 = vmax.xlane.f32.xlu0 %v2190
    %v2223 = vpop.xlane.xlu0 %2222
    %v2224 = vsub.f32 %v2189, %v2223
    %v2225 = vmul.f32 %v2224, 1.442695
    %v2226 = vpow.pop %v2225
    %v2227 = vsel %vm1836, %v2226, 0.0
    %2228 = vadd.xlane.f32.xlu0 %v2227
    %v2229 = vpop.xlane.xlu0 %2228
    %v2230 = vrcp.pop %v2229
    %v2231 = vmul.f32 %v2229, %v2230
    %v2232 = vsub.f32 1.0, %v2231
    %v2233 = vmul.f32 %v2230, %v2232
    %v2234 = vadd.f32 %v2230, %v2233
    %vm2235 = vweird.f32 %v2229
    %vm2236 = vweird.f32 %v2230
    %vm2237 = vmor %vm2235, %vm2236
    %v2238 = vsel %vm2237, %v2230, %v2234
    %v2239 = vand.u32 2147483647, %v2229
    %vm2240 = vcmp.eq.f32.partialorder %v2239, 8.507059e+37
    %v2241 = vand.u32 %v2229, 2147483648
    %v2242 = vor.u32 1.1754944e-38, %v2241
    %v2243 = vsel %vm2240, %v2242, %v2238
    %v2244 = vmul.f32 %v2226, %v2243
    %2245 = vxpose.xlu0.b32.start [1/16] %v2221, 128
    %2246 = vxpose.xlu0.b32.cont [2/16] 0.0, 128
    %2247 = vxpose.xlu0.b32.cont [3/16] 0.0, 128
    %2248 = vxpose.xlu0.b32.cont [4/16] 0.0, 128
    %2249 = vxpose.xlu0.b32.cont [5/16] 0.0, 128
    %2250 = vxpose.xlu0.b32.cont [6/16] 0.0, 128
    %2251 = vxpose.xlu0.b32.cont [7/16] 0.0, 128
    %2252 = vxpose.xlu0.b32.cont [8/16] 0.0, 128
    %2253 = vxpose.xlu0.b32.cont [9/16] 0.0, 128
    %2254 = vxpose.xlu0.b32.cont [10/16] 0.0, 128
    %2255 = vxpose.xlu0.b32.cont [11/16] 0.0, 128
    %2256 = vxpose.xlu0.b32.cont [12/16] 0.0, 128
    %2257 = vxpose.xlu0.b32.cont [13/16] 0.0, 128
    %2258 = vxpose.xlu0.b32.cont [14/16] 0.0, 128
    %2259 = vxpose.xlu0.b32.cont [15/16] 0.0, 128
    %2260 = vxpose.xlu0.b32.end [16/16] 0.0, 128
    %v2261 = vpop.trf.xlu0
    %v2262 = vpop.trf.xlu0
    %v2263 = vpop.trf.xlu0
    %v2264 = vpop.trf.xlu0
    %v2265 = vpop.trf.xlu0
    %v2266 = vpop.trf.xlu0
    %v2267 = vpop.trf.xlu0
    %v2268 = vpop.trf.xlu0
    %v2269 = vpop.trf.xlu0
    %v2270 = vpop.trf.xlu0
    %v2271 = vpop.trf.xlu0
    %v2272 = vpop.trf.xlu0
    %v2273 = vpop.trf.xlu0
    %v2274 = vpop.trf.xlu0
    %v2275 = vpop.trf.xlu0
    %v2276 = vpop.trf.xlu0
    %v2278 = vsel %vm1924, %v2261, 0
    %v2281 = vsel %vm1924, %v2262, 0
    %2283 = vmatpush.msra.mxu0 0.0
    %2284 = vmatpush.msra.mxu0 0.0
    %2285 = vmatpush.msra.mxu0 0.0
    %2286 = vmatpush.msra.mxu0 0.0
    %2287 = vmatpush.msra.mxu0 0.0
    %2288 = vmatpush.msra.mxu0 0.0
    %2289 = vmatpush.msra.mxu0 0.0
    %2290 = vmatpush.msra.mxu0 0.0
    %2291 = vmatpush.msra.mxu0 0.0
    %2292 = vmatpush.msra.mxu0 0.0
    %2293 = vmatpush.msra.mxu0 0.0
    %2294 = vmatpush.msra.mxu0 0.0
    %2295 = vmatpush.msra.mxu0 0.0
    %2296 = vmatpush.msra.mxu0 0.0
    %2297 = vmatpush.msra.mxu0 0.0
    %2298 = vmatpush.msra.mxu0 %v219
    %2299 = vmatmul.f32.gmra.mxu0 %v2278
    %v2300 = vpop.f32.mrf.mxu0
    %v2301 = vadd.f32 0.0, %v2300
    %2302 = vmatmul.f32.gmra.mxu0 %v2281
    %v2303 = vpop.f32.mrf.mxu0
    %v2304 = vadd.f32 0.0, %v2303
    %2305 = vdwg.mxu0
    %v2307 = vsel %vm1836, %v2244, 0
    %2309 = vmatpush.msra.mxu0 0.0
    %2310 = vmatpush.msra.mxu0 0.0
    %2311 = vmatpush.msra.mxu0 0.0
    %2312 = vmatpush.msra.mxu0 0.0
    %2313 = vmatpush.msra.mxu0 0.0
    %2314 = vmatpush.msra.mxu0 0.0
    %2315 = vmatpush.msra.mxu0 0.0
    %2316 = vmatpush.msra.mxu0 0.0
    %2317 = vmatpush.msra.mxu0 0.0
    %2318 = vmatpush.msra.mxu0 0.0
    %2319 = vmatpush.msra.mxu0 0.0
    %2320 = vmatpush.msra.mxu0 0.0
    %2321 = vmatpush.msra.mxu0 0.0
    %2322 = vmatpush.msra.mxu0 0.0
    %2323 = vmatpush.msra.mxu0 %v223
    %2324 = vmatpush.msra.mxu0 %v222
    %2325 = vmatmul.f32.gmra.mxu0 %v2307
    %v2326 = vpop.f32.mrf.mxu0
    %v2327 = vadd.f32 0.0, %v2326
    %2328 = vdwg.mxu0
    %v2329 = vld [vmem:[#allocation12] sm:$0xff]
    %v2330 = vld [vmem:[#allocation12 + $0x8] sm:$0xff]
    %v2331 = vld [vmem:[#allocation12 + $0x10] sm:$0xff]
    %v2332 = vld [vmem:[#allocation12 + $0x18] sm:$0xff]
    %v2333 = vld [vmem:[#allocation12 + $0x20] sm:$0xff]
    %v2334 = vld [vmem:[#allocation12 + $0x28] sm:$0xff]
    %v2335 = vld [vmem:[#allocation12 + $0x30] sm:$0xff]
    %v2336 = vld [vmem:[#allocation12 + $0x38] sm:$0xff]
    %v2337 = vld [vmem:[#allocation12 + $0x40] sm:$0xff]
    %v2338 = vld [vmem:[#allocation12 + $0x48] sm:$0xff]
    %v2339 = vld [vmem:[#allocation12 + $0x50] sm:$0xff]
    %v2340 = vld [vmem:[#allocation12 + $0x58] sm:$0xff]
    %v2341 = vld [vmem:[#allocation12 + $0x60] sm:$0xff]
    %v2342 = vld [vmem:[#allocation12 + $0x68] sm:$0xff]
    %v2343 = vld [vmem:[#allocation12 + $0x70] sm:$0xff]
    %v2344 = vld [vmem:[#allocation12 + $0x78] sm:$0xff]
    %v2345 = vld [vmem:[#allocation12 + $0x80] sm:$0xff]
    %v2346 = vld [vmem:[#allocation12 + $0x88] sm:$0xff]
    %v2347 = vld [vmem:[#allocation12 + $0x90] sm:$0xff]
    %v2348 = vld [vmem:[#allocation12 + $0x98] sm:$0xff]
    %v2349 = vld [vmem:[#allocation12 + $0xa0] sm:$0xff]
    %v2350 = vld [vmem:[#allocation12 + $0xa8] sm:$0xff]
    %v2351 = vld [vmem:[#allocation12 + $0xb0] sm:$0xff]
    %v2352 = vld [vmem:[#allocation12 + $0xb8] sm:$0xff]
    %v2353 = vld [vmem:[#allocation12 + $0xc0] sm:$0xff]
    %v2354 = vld [vmem:[#allocation12 + $0xc8] sm:$0xff]
    %v2355 = vld [vmem:[#allocation12 + $0xd0] sm:$0xff]
    %v2356 = vld [vmem:[#allocation12 + $0xd8] sm:$0xff]
    %v2357 = vld [vmem:[#allocation12 + $0xe0] sm:$0xff]
    %v2358 = vld [vmem:[#allocation12 + $0xe8] sm:$0xff]
    %v2359 = vld [vmem:[#allocation12 + $0xf0] sm:$0xff]
    %v2360 = vld [vmem:[#allocation12 + $0xf8] sm:$0xff]
    %v2361 = vld [vmem:[#allocation12 + $0x100] sm:$0xff]
    %v2362 = vld [vmem:[#allocation12 + $0x108] sm:$0xff]
    %v2363 = vld [vmem:[#allocation12 + $0x110] sm:$0xff]
    %v2364 = vld [vmem:[#allocation12 + $0x118] sm:$0xff]
    %v2365 = vld [vmem:[#allocation12 + $0x120] sm:$0xff]
    %v2366 = vld [vmem:[#allocation12 + $0x128] sm:$0xff]
    %v2367 = vld [vmem:[#allocation12 + $0x130] sm:$0xff]
    %v2368 = vld [vmem:[#allocation12 + $0x138] sm:$0xff]
    %v2370 = vsel %vm350, %v1975, 0
    %v2373 = vsel %vm350, %v2327, 0
    %2375 = vmatpush.msra.mxu0 0.0
    %2376 = vmatpush.msra.mxu0 0.0
    %2377 = vmatpush.msra.mxu0 0.0
    %2378 = vmatpush.msra.mxu0 0.0
    %2379 = vmatpush.msra.mxu0 0.0
    %2380 = vmatpush.msra.mxu0 0.0
    %2381 = vmatpush.msra.mxu0 0.0
    %2382 = vmatpush.msra.mxu0 0.0
    %2383 = vmatpush.msra.mxu0 0.0
    %2384 = vmatpush.msra.mxu0 0.0
    %2385 = vmatpush.msra.mxu0 0.0
    %2386 = vmatpush.msra.mxu0 0.0
    %2387 = vmatpush.msra.mxu0 %v2359
    %2388 = vmatpush.msra.mxu0 %v2349
    %2389 = vmatpush.msra.mxu0 %v2339
    %2390 = vmatpush.msra.mxu0 %v2329
    %2391 = vmatmul.f32.gmra.mxu0 %v2370
    %v2392 = vpop.f32.mrf.mxu0
    %v2393 = vadd.f32 0.0, %v2392
    %2394 = vmatmul.f32.gmra.mxu0 %v2373
    %v2395 = vpop.f32.mrf.mxu0
    %v2396 = vadd.f32 0.0, %v2395
    %2397 = vdwg.mxu0
    %2398 = vmatpush.msra.mxu0 0.0
    %2399 = vmatpush.msra.mxu0 0.0
    %2400 = vmatpush.msra.mxu0 0.0
    %2401 = vmatpush.msra.mxu0 0.0
    %2402 = vmatpush.msra.mxu0 0.0
    %2403 = vmatpush.msra.mxu0 0.0
    %2404 = vmatpush.msra.mxu0 0.0
    %2405 = vmatpush.msra.mxu0 0.0
    %2406 = vmatpush.msra.mxu0 0.0
    %2407 = vmatpush.msra.mxu0 0.0
    %2408 = vmatpush.msra.mxu0 0.0
    %2409 = vmatpush.msra.mxu0 0.0
    %2410 = vmatpush.msra.mxu0 %v2360
    %2411 = vmatpush.msra.mxu0 %v2350
    %2412 = vmatpush.msra.mxu0 %v2340
    %2413 = vmatpush.msra.mxu0 %v2330
    %2414 = vmatmul.f32.gmra.mxu0 %v2370
    %v2415 = vpop.f32.mrf.mxu0
    %v2416 = vadd.f32 0.0, %v2415
    %2417 = vmatmul.f32.gmra.mxu0 %v2373
    %v2418 = vpop.f32.mrf.mxu0
    %v2419 = vadd.f32 0.0, %v2418
    %2420 = vdwg.mxu0
    %2421 = vmatpush.msra.mxu0 0.0
    %2422 = vmatpush.msra.mxu0 0.0
    %2423 = vmatpush.msra.mxu0 0.0
    %2424 = vmatpush.msra.mxu0 0.0
    %2425 = vmatpush.msra.mxu0 0.0
    %2426 = vmatpush.msra.mxu0 0.0
    %2427 = vmatpush.msra.mxu0 0.0
    %2428 = vmatpush.msra.mxu0 0.0
    %2429 = vmatpush.msra.mxu0 0.0
    %2430 = vmatpush.msra.mxu0 0.0
    %2431 = vmatpush.msra.mxu0 0.0
    %2432 = vmatpush.msra.mxu0 0.0
    %2433 = vmatpush.msra.mxu0 %v2361
    %2434 = vmatpush.msra.mxu0 %v2351
    %2435 = vmatpush.msra.mxu0 %v2341
    %2436 = vmatpush.msra.mxu0 %v2331
    %2437 = vmatmul.f32.gmra.mxu0 %v2370
    %v2438 = vpop.f32.mrf.mxu0
    %v2439 = vadd.f32 0.0, %v2438
    %2440 = vmatmul.f32.gmra.mxu0 %v2373
    %v2441 = vpop.f32.mrf.mxu0
    %v2442 = vadd.f32 0.0, %v2441
    %2443 = vdwg.mxu0
    %2444 = vmatpush.msra.mxu0 0.0
    %2445 = vmatpush.msra.mxu0 0.0
    %2446 = vmatpush.msra.mxu0 0.0
    %2447 = vmatpush.msra.mxu0 0.0
    %2448 = vmatpush.msra.mxu0 0.0
    %2449 = vmatpush.msra.mxu0 0.0
    %2450 = vmatpush.msra.mxu0 0.0
    %2451 = vmatpush.msra.mxu0 0.0
    %2452 = vmatpush.msra.mxu0 0.0
    %2453 = vmatpush.msra.mxu0 0.0
    %2454 = vmatpush.msra.mxu0 0.0
    %2455 = vmatpush.msra.mxu0 0.0
    %2456 = vmatpush.msra.mxu0 %v2362
    %2457 = vmatpush.msra.mxu0 %v2352
    %2458 = vmatpush.msra.mxu0 %v2342
    %2459 = vmatpush.msra.mxu0 %v2332
    %2460 = vmatmul.f32.gmra.mxu0 %v2370
    %v2461 = vpop.f32.mrf.mxu0
    %v2462 = vadd.f32 0.0, %v2461
    %2463 = vmatmul.f32.gmra.mxu0 %v2373
    %v2464 = vpop.f32.mrf.mxu0
    %v2465 = vadd.f32 0.0, %v2464
    %2466 = vdwg.mxu0
    %2467 = vmatpush.msra.mxu0 0.0
    %2468 = vmatpush.msra.mxu0 0.0
    %2469 = vmatpush.msra.mxu0 0.0
    %2470 = vmatpush.msra.mxu0 0.0
    %2471 = vmatpush.msra.mxu0 0.0
    %2472 = vmatpush.msra.mxu0 0.0
    %2473 = vmatpush.msra.mxu0 0.0
    %2474 = vmatpush.msra.mxu0 0.0
    %2475 = vmatpush.msra.mxu0 0.0
    %2476 = vmatpush.msra.mxu0 0.0
    %2477 = vmatpush.msra.mxu0 0.0
    %2478 = vmatpush.msra.mxu0 0.0
    %2479 = vmatpush.msra.mxu0 %v2363
    %2480 = vmatpush.msra.mxu0 %v2353
    %2481 = vmatpush.msra.mxu0 %v2343
    %2482 = vmatpush.msra.mxu0 %v2333
    %2483 = vmatmul.f32.gmra.mxu0 %v2370
    %v2484 = vpop.f32.mrf.mxu0
    %v2485 = vadd.f32 0.0, %v2484
    %2486 = vmatmul.f32.gmra.mxu0 %v2373
    %v2487 = vpop.f32.mrf.mxu0
    %v2488 = vadd.f32 0.0, %v2487
    %2489 = vdwg.mxu0
    %2490 = vmatpush.msra.mxu0 0.0
    %2491 = vmatpush.msra.mxu0 0.0
    %2492 = vmatpush.msra.mxu0 0.0
    %2493 = vmatpush.msra.mxu0 0.0
    %2494 = vmatpush.msra.mxu0 0.0
    %2495 = vmatpush.msra.mxu0 0.0
    %2496 = vmatpush.msra.mxu0 0.0
    %2497 = vmatpush.msra.mxu0 0.0
    %2498 = vmatpush.msra.mxu0 0.0
    %2499 = vmatpush.msra.mxu0 0.0
    %2500 = vmatpush.msra.mxu0 0.0
    %2501 = vmatpush.msra.mxu0 0.0
    %2502 = vmatpush.msra.mxu0 %v2364
    %2503 = vmatpush.msra.mxu0 %v2354
    %2504 = vmatpush.msra.mxu0 %v2344
    %2505 = vmatpush.msra.mxu0 %v2334
    %2506 = vmatmul.f32.gmra.mxu0 %v2370
    %v2507 = vpop.f32.mrf.mxu0
    %v2508 = vadd.f32 0.0, %v2507
    %2509 = vmatmul.f32.gmra.mxu0 %v2373
    %v2510 = vpop.f32.mrf.mxu0
    %v2511 = vadd.f32 0.0, %v2510
    %2512 = vdwg.mxu0
    %2513 = vmatpush.msra.mxu0 0.0
    %2514 = vmatpush.msra.mxu0 0.0
    %2515 = vmatpush.msra.mxu0 0.0
    %2516 = vmatpush.msra.mxu0 0.0
    %2517 = vmatpush.msra.mxu0 0.0
    %2518 = vmatpush.msra.mxu0 0.0
    %2519 = vmatpush.msra.mxu0 0.0
    %2520 = vmatpush.msra.mxu0 0.0
    %2521 = vmatpush.msra.mxu0 0.0
    %2522 = vmatpush.msra.mxu0 0.0
    %2523 = vmatpush.msra.mxu0 0.0
    %2524 = vmatpush.msra.mxu0 0.0
    %2525 = vmatpush.msra.mxu0 %v2365
    %2526 = vmatpush.msra.mxu0 %v2355
    %2527 = vmatpush.msra.mxu0 %v2345
    %2528 = vmatpush.msra.mxu0 %v2335
    %2529 = vmatmul.f32.gmra.mxu0 %v2370
    %v2530 = vpop.f32.mrf.mxu0
    %v2531 = vadd.f32 0.0, %v2530
    %2532 = vmatmul.f32.gmra.mxu0 %v2373
    %v2533 = vpop.f32.mrf.mxu0
    %v2534 = vadd.f32 0.0, %v2533
    %2535 = vdwg.mxu0
    %2536 = vmatpush.msra.mxu0 0.0
    %2537 = vmatpush.msra.mxu0 0.0
    %2538 = vmatpush.msra.mxu0 0.0
    %2539 = vmatpush.msra.mxu0 0.0
    %2540 = vmatpush.msra.mxu0 0.0
    %2541 = vmatpush.msra.mxu0 0.0
    %2542 = vmatpush.msra.mxu0 0.0
    %2543 = vmatpush.msra.mxu0 0.0
    %2544 = vmatpush.msra.mxu0 0.0
    %2545 = vmatpush.msra.mxu0 0.0
    %2546 = vmatpush.msra.mxu0 0.0
    %2547 = vmatpush.msra.mxu0 0.0
    %2548 = vmatpush.msra.mxu0 %v2366
    %2549 = vmatpush.msra.mxu0 %v2356
    %2550 = vmatpush.msra.mxu0 %v2346
    %2551 = vmatpush.msra.mxu0 %v2336
    %2552 = vmatmul.f32.gmra.mxu0 %v2370
    %v2553 = vpop.f32.mrf.mxu0
    %v2554 = vadd.f32 0.0, %v2553
    %2555 = vmatmul.f32.gmra.mxu0 %v2373
    %v2556 = vpop.f32.mrf.mxu0
    %v2557 = vadd.f32 0.0, %v2556
    %2558 = vdwg.mxu0
    %2559 = vmatpush.msra.mxu0 0.0
    %2560 = vmatpush.msra.mxu0 0.0
    %2561 = vmatpush.msra.mxu0 0.0
    %2562 = vmatpush.msra.mxu0 0.0
    %2563 = vmatpush.msra.mxu0 0.0
    %2564 = vmatpush.msra.mxu0 0.0
    %2565 = vmatpush.msra.mxu0 0.0
    %2566 = vmatpush.msra.mxu0 0.0
    %2567 = vmatpush.msra.mxu0 0.0
    %2568 = vmatpush.msra.mxu0 0.0
    %2569 = vmatpush.msra.mxu0 0.0
    %2570 = vmatpush.msra.mxu0 0.0
    %2571 = vmatpush.msra.mxu0 %v2367
    %2572 = vmatpush.msra.mxu0 %v2357
    %2573 = vmatpush.msra.mxu0 %v2347
    %2574 = vmatpush.msra.mxu0 %v2337
    %2575 = vmatmul.f32.gmra.mxu0 %v2370
    %v2576 = vpop.f32.mrf.mxu0
    %v2577 = vadd.f32 0.0, %v2576
    %2578 = vmatmul.f32.gmra.mxu0 %v2373
    %v2579 = vpop.f32.mrf.mxu0
    %v2580 = vadd.f32 0.0, %v2579
    %2581 = vdwg.mxu0
    %2582 = vmatpush.msra.mxu0 0.0
    %2583 = vmatpush.msra.mxu0 0.0
    %2584 = vmatpush.msra.mxu0 0.0
    %2585 = vmatpush.msra.mxu0 0.0
    %2586 = vmatpush.msra.mxu0 0.0
    %2587 = vmatpush.msra.mxu0 0.0
    %2588 = vmatpush.msra.mxu0 0.0
    %2589 = vmatpush.msra.mxu0 0.0
    %2590 = vmatpush.msra.mxu0 0.0
    %2591 = vmatpush.msra.mxu0 0.0
    %2592 = vmatpush.msra.mxu0 0.0
    %2593 = vmatpush.msra.mxu0 0.0
    %2594 = vmatpush.msra.mxu0 %v2368
    %2595 = vmatpush.msra.mxu0 %v2358
    %2596 = vmatpush.msra.mxu0 %v2348
    %2597 = vmatpush.msra.mxu0 %v2338
    %2598 = vmatmul.f32.gmra.mxu0 %v2370
    %v2599 = vpop.f32.mrf.mxu0
    %v2600 = vadd.f32 0.0, %v2599
    %2601 = vmatmul.f32.gmra.mxu0 %v2373
    %v2602 = vpop.f32.mrf.mxu0
    %v2603 = vadd.f32 0.0, %v2602
    %2604 = vdwg.mxu0
    %v2605 = vadd.f32 %v605, %v2393
    %v2606 = vadd.f32 %v628, %v2416
    %v2607 = vadd.f32 %v651, %v2439
    %v2608 = vadd.f32 %v674, %v2462
    %v2609 = vadd.f32 %v697, %v2485
    %v2610 = vadd.f32 %v720, %v2508
    %v2611 = vadd.f32 %v743, %v2531
    %v2612 = vadd.f32 %v766, %v2554
    %v2613 = vadd.f32 %v789, %v2577
    %v2614 = vadd.f32 %v812, %v2600
    %v2615 = vadd.f32 %v608, %v2396
    %v2616 = vadd.f32 %v631, %v2419
    %v2617 = vadd.f32 %v654, %v2442
    %v2618 = vadd.f32 %v677, %v2465
    %v2619 = vadd.f32 %v700, %v2488
    %v2620 = vadd.f32 %v723, %v2511
    %v2621 = vadd.f32 %v746, %v2534
    %v2622 = vadd.f32 %v769, %v2557
    %v2623 = vadd.f32 %v792, %v2580
    %v2624 = vadd.f32 %v815, %v2603
    %v2625 = vtanh.pop %v2605
    %v2626 = vtanh.pop %v2606
    %v2627 = vtanh.pop %v2607
    %v2628 = vtanh.pop %v2608
    %v2629 = vtanh.pop %v2609
    %v2630 = vtanh.pop %v2610
    %v2631 = vtanh.pop %v2611
    %v2632 = vtanh.pop %v2612
    %v2633 = vtanh.pop %v2613
    %v2634 = vtanh.pop %v2614
    %v2635 = vtanh.pop %v2615
    %v2636 = vtanh.pop %v2616
    %v2637 = vtanh.pop %v2617
    %v2638 = vtanh.pop %v2618
    %v2639 = vtanh.pop %v2619
    %v2640 = vtanh.pop %v2620
    %v2641 = vtanh.pop %v2621
    %v2642 = vtanh.pop %v2622
    %v2643 = vtanh.pop %v2623
    %v2644 = vtanh.pop %v2624
    %v2645 = vld [vmem:[#allocation14] sm:$0xff]
    %v2646 = vld [vmem:[#allocation14 + $0x8] sm:$0xff]
    %v2647 = vld [vmem:[#allocation14 + $0x10] sm:$0xff]
    %v2648 = vld [vmem:[#allocation14 + $0x18] sm:$0xff]
    %v2649 = vld [vmem:[#allocation14 + $0x20] sm:$0xff]
    %v2650 = vld [vmem:[#allocation14 + $0x28] sm:$0xff]
    %v2651 = vld [vmem:[#allocation14 + $0x30] sm:$0xff]
    %v2652 = vld [vmem:[#allocation14 + $0x38] sm:$0xff]
    %v2653 = vld [vmem:[#allocation14 + $0x40] sm:$0xff]
    %v2654 = vld [vmem:[#allocation14 + $0x48] sm:$0xff]
    %v2655 = vld [vmem:[#allocation14 + $0x50] sm:$0xff]
    %v2656 = vld [vmem:[#allocation14 + $0x58] sm:$0xff]
    %v2657 = vld [vmem:[#allocation14 + $0x60] sm:$0xff]
    %v2658 = vld [vmem:[#allocation14 + $0x68] sm:$0xff]
    %v2659 = vld [vmem:[#allocation14 + $0x70] sm:$0xff]
    %v2660 = vld [vmem:[#allocation14 + $0x78] sm:$0xff]
    %v2661 = vld [vmem:[#allocation14 + $0x80] sm:$0xff]
    %v2662 = vld [vmem:[#allocation14 + $0x88] sm:$0xff]
    %v2663 = vld [vmem:[#allocation14 + $0x90] sm:$0xff]
    %v2664 = vld [vmem:[#allocation14 + $0x98] sm:$0xff]
    %v2665 = vld [vmem:[#allocation14 + $0xa0] sm:$0xff]
    %v2666 = vld [vmem:[#allocation14 + $0xa8] sm:$0xff]
    %v2667 = vld [vmem:[#allocation14 + $0xb0] sm:$0xff]
    %v2668 = vld [vmem:[#allocation14 + $0xb8] sm:$0xff]
    %v2669 = vld [vmem:[#allocation14 + $0xc0] sm:$0xff]
    %v2670 = vld [vmem:[#allocation14 + $0xc8] sm:$0xff]
    %v2671 = vld [vmem:[#allocation14 + $0xd0] sm:$0xff]
    %v2672 = vld [vmem:[#allocation14 + $0xd8] sm:$0xff]
    %v2673 = vld [vmem:[#allocation14 + $0xe0] sm:$0xff]
    %v2674 = vld [vmem:[#allocation14 + $0xe8] sm:$0xff]
    %v2675 = vld [vmem:[#allocation14 + $0xf0] sm:$0xff]
    %v2676 = vld [vmem:[#allocation14 + $0xf8] sm:$0xff]
    %v2677 = vld [vmem:[#allocation14 + $0x100] sm:$0xff]
    %v2678 = vld [vmem:[#allocation14 + $0x108] sm:$0xff]
    %v2679 = vld [vmem:[#allocation14 + $0x110] sm:$0xff]
    %v2680 = vld [vmem:[#allocation14 + $0x118] sm:$0xff]
    %v2681 = vld [vmem:[#allocation14 + $0x120] sm:$0xff]
    %v2682 = vld [vmem:[#allocation14 + $0x128] sm:$0xff]
    %v2683 = vld [vmem:[#allocation14 + $0x130] sm:$0xff]
    %v2684 = vld [vmem:[#allocation14 + $0x138] sm:$0xff]
    %v2686 = vsel %vm350, %v1949, 0
    %v2689 = vsel %vm350, %v1952, 0
    %v2692 = vsel %vm350, %v2301, 0
    %v2695 = vsel %vm350, %v2304, 0
    %2697 = vmatpush.msra.mxu0 0.0
    %2698 = vmatpush.msra.mxu0 0.0
    %2699 = vmatpush.msra.mxu0 0.0
    %2700 = vmatpush.msra.mxu0 0.0
    %2701 = vmatpush.msra.mxu0 0.0
    %2702 = vmatpush.msra.mxu0 0.0
    %2703 = vmatpush.msra.mxu0 0.0
    %2704 = vmatpush.msra.mxu0 0.0
    %2705 = vmatpush.msra.mxu0 0.0
    %2706 = vmatpush.msra.mxu0 0.0
    %2707 = vmatpush.msra.mxu0 0.0
    %2708 = vmatpush.msra.mxu0 0.0
    %2709 = vmatpush.msra.mxu0 %v2675
    %2710 = vmatpush.msra.mxu0 %v2665
    %2711 = vmatpush.msra.mxu0 %v2655
    %2712 = vmatpush.msra.mxu0 %v2645
    %2713 = vmatmul.f32.gmra.mxu0 %v2686
    %v2714 = vpop.f32.mrf.mxu0
    %v2715 = vadd.f32 0.0, %v2714
    %2716 = vmatmul.f32.gmra.mxu0 %v2689
    %v2717 = vpop.f32.mrf.mxu0
    %v2718 = vadd.f32 0.0, %v2717
    %2719 = vmatmul.f32.gmra.mxu0 %v2692
    %v2720 = vpop.f32.mrf.mxu0
    %v2721 = vadd.f32 0.0, %v2720
    %2722 = vmatmul.f32.gmra.mxu0 %v2695
    %v2723 = vpop.f32.mrf.mxu0
    %v2724 = vadd.f32 0.0, %v2723
    %2725 = vdwg.mxu0
    %2726 = vmatpush.msra.mxu0 0.0
    %2727 = vmatpush.msra.mxu0 0.0
    %2728 = vmatpush.msra.mxu0 0.0
    %2729 = vmatpush.msra.mxu0 0.0
    %2730 = vmatpush.msra.mxu0 0.0
    %2731 = vmatpush.msra.mxu0 0.0
    %2732 = vmatpush.msra.mxu0 0.0
    %2733 = vmatpush.msra.mxu0 0.0
    %2734 = vmatpush.msra.mxu0 0.0
    %2735 = vmatpush.msra.mxu0 0.0
    %2736 = vmatpush.msra.mxu0 0.0
    %2737 = vmatpush.msra.mxu0 0.0
    %2738 = vmatpush.msra.mxu0 %v2676
    %2739 = vmatpush.msra.mxu0 %v2666
    %2740 = vmatpush.msra.mxu0 %v2656
    %2741 = vmatpush.msra.mxu0 %v2646
    %2742 = vmatmul.f32.gmra.mxu0 %v2686
    %v2743 = vpop.f32.mrf.mxu0
    %v2744 = vadd.f32 0.0, %v2743
    %2745 = vmatmul.f32.gmra.mxu0 %v2689
    %v2746 = vpop.f32.mrf.mxu0
    %v2747 = vadd.f32 0.0, %v2746
    %2748 = vmatmul.f32.gmra.mxu0 %v2692
    %v2749 = vpop.f32.mrf.mxu0
    %v2750 = vadd.f32 0.0, %v2749
    %2751 = vmatmul.f32.gmra.mxu0 %v2695
    %v2752 = vpop.f32.mrf.mxu0
    %v2753 = vadd.f32 0.0, %v2752
    %2754 = vdwg.mxu0
    %2755 = vmatpush.msra.mxu0 0.0
    %2756 = vmatpush.msra.mxu0 0.0
    %2757 = vmatpush.msra.mxu0 0.0
    %2758 = vmatpush.msra.mxu0 0.0
    %2759 = vmatpush.msra.mxu0 0.0
    %2760 = vmatpush.msra.mxu0 0.0
    %2761 = vmatpush.msra.mxu0 0.0
    %2762 = vmatpush.msra.mxu0 0.0
    %2763 = vmatpush.msra.mxu0 0.0
    %2764 = vmatpush.msra.mxu0 0.0
    %2765 = vmatpush.msra.mxu0 0.0
    %2766 = vmatpush.msra.mxu0 0.0
    %2767 = vmatpush.msra.mxu0 %v2677
    %2768 = vmatpush.msra.mxu0 %v2667
    %2769 = vmatpush.msra.mxu0 %v2657
    %2770 = vmatpush.msra.mxu0 %v2647
    %2771 = vmatmul.f32.gmra.mxu0 %v2686
    %v2772 = vpop.f32.mrf.mxu0
    %v2773 = vadd.f32 0.0, %v2772
    %2774 = vmatmul.f32.gmra.mxu0 %v2689
    %v2775 = vpop.f32.mrf.mxu0
    %v2776 = vadd.f32 0.0, %v2775
    %2777 = vmatmul.f32.gmra.mxu0 %v2692
    %v2778 = vpop.f32.mrf.mxu0
    %v2779 = vadd.f32 0.0, %v2778
    %2780 = vmatmul.f32.gmra.mxu0 %v2695
    %v2781 = vpop.f32.mrf.mxu0
    %v2782 = vadd.f32 0.0, %v2781
    %2783 = vdwg.mxu0
    %2784 = vmatpush.msra.mxu0 0.0
    %2785 = vmatpush.msra.mxu0 0.0
    %2786 = vmatpush.msra.mxu0 0.0
    %2787 = vmatpush.msra.mxu0 0.0
    %2788 = vmatpush.msra.mxu0 0.0
    %2789 = vmatpush.msra.mxu0 0.0
    %2790 = vmatpush.msra.mxu0 0.0
    %2791 = vmatpush.msra.mxu0 0.0
    %2792 = vmatpush.msra.mxu0 0.0
    %2793 = vmatpush.msra.mxu0 0.0
    %2794 = vmatpush.msra.mxu0 0.0
    %2795 = vmatpush.msra.mxu0 0.0
    %2796 = vmatpush.msra.mxu0 %v2678
    %2797 = vmatpush.msra.mxu0 %v2668
    %2798 = vmatpush.msra.mxu0 %v2658
    %2799 = vmatpush.msra.mxu0 %v2648
    %2800 = vmatmul.f32.gmra.mxu0 %v2686
    %v2801 = vpop.f32.mrf.mxu0
    %v2802 = vadd.f32 0.0, %v2801
    %2803 = vmatmul.f32.gmra.mxu0 %v2689
    %v2804 = vpop.f32.mrf.mxu0
    %v2805 = vadd.f32 0.0, %v2804
    %2806 = vmatmul.f32.gmra.mxu0 %v2692
    %v2807 = vpop.f32.mrf.mxu0
    %v2808 = vadd.f32 0.0, %v2807
    %2809 = vmatmul.f32.gmra.mxu0 %v2695
    %v2810 = vpop.f32.mrf.mxu0
    %v2811 = vadd.f32 0.0, %v2810
    %2812 = vdwg.mxu0
    %2813 = vmatpush.msra.mxu0 0.0
    %2814 = vmatpush.msra.mxu0 0.0
    %2815 = vmatpush.msra.mxu0 0.0
    %2816 = vmatpush.msra.mxu0 0.0
    %2817 = vmatpush.msra.mxu0 0.0
    %2818 = vmatpush.msra.mxu0 0.0
    %2819 = vmatpush.msra.mxu0 0.0
    %2820 = vmatpush.msra.mxu0 0.0
    %2821 = vmatpush.msra.mxu0 0.0
    %2822 = vmatpush.msra.mxu0 0.0
    %2823 = vmatpush.msra.mxu0 0.0
    %2824 = vmatpush.msra.mxu0 0.0
    %2825 = vmatpush.msra.mxu0 %v2679
    %2826 = vmatpush.msra.mxu0 %v2669
    %2827 = vmatpush.msra.mxu0 %v2659
    %2828 = vmatpush.msra.mxu0 %v2649
    %2829 = vmatmul.f32.gmra.mxu0 %v2686
    %v2830 = vpop.f32.mrf.mxu0
    %v2831 = vadd.f32 0.0, %v2830
    %2832 = vmatmul.f32.gmra.mxu0 %v2689
    %v2833 = vpop.f32.mrf.mxu0
    %v2834 = vadd.f32 0.0, %v2833
    %2835 = vmatmul.f32.gmra.mxu0 %v2692
    %v2836 = vpop.f32.mrf.mxu0
    %v2837 = vadd.f32 0.0, %v2836
    %2838 = vmatmul.f32.gmra.mxu0 %v2695
    %v2839 = vpop.f32.mrf.mxu0
    %v2840 = vadd.f32 0.0, %v2839
    %2841 = vdwg.mxu0
    %2842 = vmatpush.msra.mxu0 0.0
    %2843 = vmatpush.msra.mxu0 0.0
    %2844 = vmatpush.msra.mxu0 0.0
    %2845 = vmatpush.msra.mxu0 0.0
    %2846 = vmatpush.msra.mxu0 0.0
    %2847 = vmatpush.msra.mxu0 0.0
    %2848 = vmatpush.msra.mxu0 0.0
    %2849 = vmatpush.msra.mxu0 0.0
    %2850 = vmatpush.msra.mxu0 0.0
    %2851 = vmatpush.msra.mxu0 0.0
    %2852 = vmatpush.msra.mxu0 0.0
    %2853 = vmatpush.msra.mxu0 0.0
    %2854 = vmatpush.msra.mxu0 %v2680
    %2855 = vmatpush.msra.mxu0 %v2670
    %2856 = vmatpush.msra.mxu0 %v2660
    %2857 = vmatpush.msra.mxu0 %v2650
    %2858 = vmatmul.f32.gmra.mxu0 %v2686
    %v2859 = vpop.f32.mrf.mxu0
    %v2860 = vadd.f32 0.0, %v2859
    %2861 = vmatmul.f32.gmra.mxu0 %v2689
    %v2862 = vpop.f32.mrf.mxu0
    %v2863 = vadd.f32 0.0, %v2862
    %2864 = vmatmul.f32.gmra.mxu0 %v2692
    %v2865 = vpop.f32.mrf.mxu0
    %v2866 = vadd.f32 0.0, %v2865
    %2867 = vmatmul.f32.gmra.mxu0 %v2695
    %v2868 = vpop.f32.mrf.mxu0
    %v2869 = vadd.f32 0.0, %v2868
    %2870 = vdwg.mxu0
    %2871 = vmatpush.msra.mxu0 0.0
    %2872 = vmatpush.msra.mxu0 0.0
    %2873 = vmatpush.msra.mxu0 0.0
    %2874 = vmatpush.msra.mxu0 0.0
    %2875 = vmatpush.msra.mxu0 0.0
    %2876 = vmatpush.msra.mxu0 0.0
    %2877 = vmatpush.msra.mxu0 0.0
    %2878 = vmatpush.msra.mxu0 0.0
    %2879 = vmatpush.msra.mxu0 0.0
    %2880 = vmatpush.msra.mxu0 0.0
    %2881 = vmatpush.msra.mxu0 0.0
    %2882 = vmatpush.msra.mxu0 0.0
    %2883 = vmatpush.msra.mxu0 %v2681
    %2884 = vmatpush.msra.mxu0 %v2671
    %2885 = vmatpush.msra.mxu0 %v2661
    %2886 = vmatpush.msra.mxu0 %v2651
    %2887 = vmatmul.f32.gmra.mxu0 %v2686
    %v2888 = vpop.f32.mrf.mxu0
    %v2889 = vadd.f32 0.0, %v2888
    %2890 = vmatmul.f32.gmra.mxu0 %v2689
    %v2891 = vpop.f32.mrf.mxu0
    %v2892 = vadd.f32 0.0, %v2891
    %2893 = vmatmul.f32.gmra.mxu0 %v2692
    %v2894 = vpop.f32.mrf.mxu0
    %v2895 = vadd.f32 0.0, %v2894
    %2896 = vmatmul.f32.gmra.mxu0 %v2695
    %v2897 = vpop.f32.mrf.mxu0
    %v2898 = vadd.f32 0.0, %v2897
    %2899 = vdwg.mxu0
    %2900 = vmatpush.msra.mxu0 0.0
    %2901 = vmatpush.msra.mxu0 0.0
    %2902 = vmatpush.msra.mxu0 0.0
    %2903 = vmatpush.msra.mxu0 0.0
    %2904 = vmatpush.msra.mxu0 0.0
    %2905 = vmatpush.msra.mxu0 0.0
    %2906 = vmatpush.msra.mxu0 0.0
    %2907 = vmatpush.msra.mxu0 0.0
    %2908 = vmatpush.msra.mxu0 0.0
    %2909 = vmatpush.msra.mxu0 0.0
    %2910 = vmatpush.msra.mxu0 0.0
    %2911 = vmatpush.msra.mxu0 0.0
    %2912 = vmatpush.msra.mxu0 %v2682
    %2913 = vmatpush.msra.mxu0 %v2672
    %2914 = vmatpush.msra.mxu0 %v2662
    %2915 = vmatpush.msra.mxu0 %v2652
    %2916 = vmatmul.f32.gmra.mxu0 %v2686
    %v2917 = vpop.f32.mrf.mxu0
    %v2918 = vadd.f32 0.0, %v2917
    %2919 = vmatmul.f32.gmra.mxu0 %v2689
    %v2920 = vpop.f32.mrf.mxu0
    %v2921 = vadd.f32 0.0, %v2920
    %2922 = vmatmul.f32.gmra.mxu0 %v2692
    %v2923 = vpop.f32.mrf.mxu0
    %v2924 = vadd.f32 0.0, %v2923
    %2925 = vmatmul.f32.gmra.mxu0 %v2695
    %v2926 = vpop.f32.mrf.mxu0
    %v2927 = vadd.f32 0.0, %v2926
    %2928 = vdwg.mxu0
    %2929 = vmatpush.msra.mxu0 0.0
    %2930 = vmatpush.msra.mxu0 0.0
    %2931 = vmatpush.msra.mxu0 0.0
    %2932 = vmatpush.msra.mxu0 0.0
    %2933 = vmatpush.msra.mxu0 0.0
    %2934 = vmatpush.msra.mxu0 0.0
    %2935 = vmatpush.msra.mxu0 0.0
    %2936 = vmatpush.msra.mxu0 0.0
    %2937 = vmatpush.msra.mxu0 0.0
    %2938 = vmatpush.msra.mxu0 0.0
    %2939 = vmatpush.msra.mxu0 0.0
    %2940 = vmatpush.msra.mxu0 0.0
    %2941 = vmatpush.msra.mxu0 %v2683
    %2942 = vmatpush.msra.mxu0 %v2673
    %2943 = vmatpush.msra.mxu0 %v2663
    %2944 = vmatpush.msra.mxu0 %v2653
    %2945 = vmatmul.f32.gmra.mxu0 %v2686
    %v2946 = vpop.f32.mrf.mxu0
    %v2947 = vadd.f32 0.0, %v2946
    %2948 = vmatmul.f32.gmra.mxu0 %v2689
    %v2949 = vpop.f32.mrf.mxu0
    %v2950 = vadd.f32 0.0, %v2949
    %2951 = vmatmul.f32.gmra.mxu0 %v2692
    %v2952 = vpop.f32.mrf.mxu0
    %v2953 = vadd.f32 0.0, %v2952
    %2954 = vmatmul.f32.gmra.mxu0 %v2695
    %v2955 = vpop.f32.mrf.mxu0
    %v2956 = vadd.f32 0.0, %v2955
    %2957 = vdwg.mxu0
    %2958 = vmatpush.msra.mxu0 0.0
    %2959 = vmatpush.msra.mxu0 0.0
    %2960 = vmatpush.msra.mxu0 0.0
    %2961 = vmatpush.msra.mxu0 0.0
    %2962 = vmatpush.msra.mxu0 0.0
    %2963 = vmatpush.msra.mxu0 0.0
    %2964 = vmatpush.msra.mxu0 0.0
    %2965 = vmatpush.msra.mxu0 0.0
    %2966 = vmatpush.msra.mxu0 0.0
    %2967 = vmatpush.msra.mxu0 0.0
    %2968 = vmatpush.msra.mxu0 0.0
    %2969 = vmatpush.msra.mxu0 0.0
    %2970 = vmatpush.msra.mxu0 %v2684
    %2971 = vmatpush.msra.mxu0 %v2674
    %2972 = vmatpush.msra.mxu0 %v2664
    %2973 = vmatpush.msra.mxu0 %v2654
    %2974 = vmatmul.f32.gmra.mxu0 %v2686
    %v2975 = vpop.f32.mrf.mxu0
    %v2976 = vadd.f32 0.0, %v2975
    %2977 = vmatmul.f32.gmra.mxu0 %v2689
    %v2978 = vpop.f32.mrf.mxu0
    %v2979 = vadd.f32 0.0, %v2978
    %2980 = vmatmul.f32.gmra.mxu0 %v2692
    %v2981 = vpop.f32.mrf.mxu0
    %v2982 = vadd.f32 0.0, %v2981
    %2983 = vmatmul.f32.gmra.mxu0 %v2695
    %v2984 = vpop.f32.mrf.mxu0
    %v2985 = vadd.f32 0.0, %v2984
    %2986 = vdwg.mxu0
    %v2987 = vadd.f32 %v1263, %v2715
    %v2988 = vadd.f32 %v1292, %v2744
    %v2989 = vadd.f32 %v1321, %v2773
    %v2990 = vadd.f32 %v1350, %v2802
    %v2991 = vadd.f32 %v1379, %v2831
    %v2992 = vadd.f32 %v1408, %v2860
    %v2993 = vadd.f32 %v1437, %v2889
    %v2994 = vadd.f32 %v1466, %v2918
    %v2995 = vadd.f32 %v1495, %v2947
    %v2996 = vadd.f32 %v1524, %v2976
    %v2997 = vadd.f32 %v1266, %v2718
    %v2998 = vadd.f32 %v1295, %v2747
    %v2999 = vadd.f32 %v1324, %v2776
    %v3000 = vadd.f32 %v1353, %v2805
    %v3001 = vadd.f32 %v1382, %v2834
    %v3002 = vadd.f32 %v1411, %v2863
    %v3003 = vadd.f32 %v1440, %v2892
    %v3004 = vadd.f32 %v1469, %v2921
    %v3005 = vadd.f32 %v1498, %v2950
    %v3006 = vadd.f32 %v1527, %v2979
    %v3007 = vadd.f32 %v1269, %v2721
    %v3008 = vadd.f32 %v1298, %v2750
    %v3009 = vadd.f32 %v1327, %v2779
    %v3010 = vadd.f32 %v1356, %v2808
    %v3011 = vadd.f32 %v1385, %v2837
    %v3012 = vadd.f32 %v1414, %v2866
    %v3013 = vadd.f32 %v1443, %v2895
    %v3014 = vadd.f32 %v1472, %v2924
    %v3015 = vadd.f32 %v1501, %v2953
    %v3016 = vadd.f32 %v1530, %v2982
    %v3017 = vadd.f32 %v1272, %v2724
    %v3018 = vadd.f32 %v1301, %v2753
    %v3019 = vadd.f32 %v1330, %v2782
    %v3020 = vadd.f32 %v1359, %v2811
    %v3021 = vadd.f32 %v1388, %v2840
    %v3022 = vadd.f32 %v1417, %v2869
    %v3023 = vadd.f32 %v1446, %v2898
    %v3024 = vadd.f32 %v1475, %v2927
    %v3025 = vadd.f32 %v1504, %v2956
    %v3026 = vadd.f32 %v1533, %v2985
    %v3027 = vtanh.pop %v2987
    %v3028 = vtanh.pop %v2988
    %v3029 = vtanh.pop %v2989
    %v3030 = vtanh.pop %v2990
    %v3031 = vtanh.pop %v2991
    %v3032 = vtanh.pop %v2992
    %v3033 = vtanh.pop %v2993
    %v3034 = vtanh.pop %v2994
    %v3035 = vtanh.pop %v2995
    %v3036 = vtanh.pop %v2996
    %v3037 = vtanh.pop %v2997
    %v3038 = vtanh.pop %v2998
    %v3039 = vtanh.pop %v2999
    %v3040 = vtanh.pop %v3000
    %v3041 = vtanh.pop %v3001
    %v3042 = vtanh.pop %v3002
    %v3043 = vtanh.pop %v3003
    %v3044 = vtanh.pop %v3004
    %v3045 = vtanh.pop %v3005
    %v3046 = vtanh.pop %v3006
    %v3047 = vtanh.pop %v3007
    %v3048 = vtanh.pop %v3008
    %v3049 = vtanh.pop %v3009
    %v3050 = vtanh.pop %v3010
    %v3051 = vtanh.pop %v3011
    %v3052 = vtanh.pop %v3012
    %v3053 = vtanh.pop %v3013
    %v3054 = vtanh.pop %v3014
    %v3055 = vtanh.pop %v3015
    %v3056 = vtanh.pop %v3016
    %v3057 = vtanh.pop %v3017
    %v3058 = vtanh.pop %v3018
    %v3059 = vtanh.pop %v3019
    %v3060 = vtanh.pop %v3020
    %v3061 = vtanh.pop %v3021
    %v3062 = vtanh.pop %v3022
    %v3063 = vtanh.pop %v3023
    %v3064 = vtanh.pop %v3024
    %v3065 = vtanh.pop %v3025
    %v3066 = vtanh.pop %v3026
    %v3069 = vperm.slane %v1597, 0
    %v3070 = vperm.slane %v1597, 1
    %v3071 = vperm.slane %v1597, 2
    %v3072 = vperm.slane %v1597, 3
    %v3073 = vperm.slane %v1597, 4
    %v3074 = vperm.slane %v1597, 5
    %v3075 = vperm.slane %v1597, 6
    %v3076 = vperm.slane %v1597, 7
    %v3077 = vperm.slane %v1598, 0
    %v3078 = vperm.slane %v1598, 1
    %v3089 = vmul.f32 %v2625, %v3069
    %v3090 = vmul.f32 %v2626, %v3070
    %v3091 = vmul.f32 %v2627, %v3071
    %v3092 = vmul.f32 %v2628, %v3072
    %v3093 = vmul.f32 %v2629, %v3073
    %v3094 = vmul.f32 %v2630, %v3074
    %v3095 = vmul.f32 %v2631, %v3075
    %v3096 = vmul.f32 %v2632, %v3076
    %v3097 = vmul.f32 %v2633, %v3077
    %v3098 = vmul.f32 %v2634, %v3078
    %v3099 = vstv %s1600
    %3100 = vmatpush.xpose.msra.mxu0 0.0
    %3101 = vmatpush.xpose.msra.mxu0 0.0
    %3102 = vmatpush.xpose.msra.mxu0 0.0
    %3103 = vmatpush.xpose.msra.mxu0 0.0
    %3104 = vmatpush.xpose.msra.mxu0 0.0
    %3105 = vmatpush.xpose.msra.mxu0 0.0
    %3106 = vmatpush.xpose.msra.mxu0 0.0
    %3107 = vmatpush.xpose.msra.mxu0 0.0
    %3108 = vmatpush.xpose.msra.mxu0 0.0
    %3109 = vmatpush.xpose.msra.mxu0 0.0
    %3110 = vmatpush.xpose.msra.mxu0 0.0
    %3111 = vmatpush.xpose.msra.mxu0 0.0
    %3112 = vmatpush.xpose.msra.mxu0 0.0
    %3113 = vmatpush.xpose.msra.mxu0 0.0
    %3114 = vmatpush.xpose.msra.mxu0 %v3037
    %3115 = vmatpush.xpose.msra.mxu0 %v3027
    %3116 = vmatmul.f32.gmra.mxu0 %v3089
    %v3117 = vpop.f32.mrf.mxu0
    %v3118 = vadd.f32 %v3099, %v3117
    %3119 = vdwg.mxu0
    %3120 = vmatpush.xpose.msra.mxu0 0.0
    %3121 = vmatpush.xpose.msra.mxu0 0.0
    %3122 = vmatpush.xpose.msra.mxu0 0.0
    %3123 = vmatpush.xpose.msra.mxu0 0.0
    %3124 = vmatpush.xpose.msra.mxu0 0.0
    %3125 = vmatpush.xpose.msra.mxu0 0.0
    %3126 = vmatpush.xpose.msra.mxu0 0.0
    %3127 = vmatpush.xpose.msra.mxu0 0.0
    %3128 = vmatpush.xpose.msra.mxu0 0.0
    %3129 = vmatpush.xpose.msra.mxu0 0.0
    %3130 = vmatpush.xpose.msra.mxu0 0.0
    %3131 = vmatpush.xpose.msra.mxu0 0.0
    %3132 = vmatpush.xpose.msra.mxu0 0.0
    %3133 = vmatpush.xpose.msra.mxu0 0.0
    %3134 = vmatpush.xpose.msra.mxu0 %v3038
    %3135 = vmatpush.xpose.msra.mxu0 %v3028
    %3136 = vmatmul.f32.gmra.mxu0 %v3090
    %v3137 = vpop.f32.mrf.mxu0
    %v3138 = vadd.f32 %v3118, %v3137
    %3139 = vdwg.mxu0
    %3140 = vmatpush.xpose.msra.mxu0 0.0
    %3141 = vmatpush.xpose.msra.mxu0 0.0
    %3142 = vmatpush.xpose.msra.mxu0 0.0
    %3143 = vmatpush.xpose.msra.mxu0 0.0
    %3144 = vmatpush.xpose.msra.mxu0 0.0
    %3145 = vmatpush.xpose.msra.mxu0 0.0
    %3146 = vmatpush.xpose.msra.mxu0 0.0
    %3147 = vmatpush.xpose.msra.mxu0 0.0
    %3148 = vmatpush.xpose.msra.mxu0 0.0
    %3149 = vmatpush.xpose.msra.mxu0 0.0
    %3150 = vmatpush.xpose.msra.mxu0 0.0
    %3151 = vmatpush.xpose.msra.mxu0 0.0
    %3152 = vmatpush.xpose.msra.mxu0 0.0
    %3153 = vmatpush.xpose.msra.mxu0 0.0
    %3154 = vmatpush.xpose.msra.mxu0 %v3039
    %3155 = vmatpush.xpose.msra.mxu0 %v3029
    %3156 = vmatmul.f32.gmra.mxu0 %v3091
    %v3157 = vpop.f32.mrf.mxu0
    %v3158 = vadd.f32 %v3138, %v3157
    %3159 = vdwg.mxu0
    %3160 = vmatpush.xpose.msra.mxu0 0.0
    %3161 = vmatpush.xpose.msra.mxu0 0.0
    %3162 = vmatpush.xpose.msra.mxu0 0.0
    %3163 = vmatpush.xpose.msra.mxu0 0.0
    %3164 = vmatpush.xpose.msra.mxu0 0.0
    %3165 = vmatpush.xpose.msra.mxu0 0.0
    %3166 = vmatpush.xpose.msra.mxu0 0.0
    %3167 = vmatpush.xpose.msra.mxu0 0.0
    %3168 = vmatpush.xpose.msra.mxu0 0.0
    %3169 = vmatpush.xpose.msra.mxu0 0.0
    %3170 = vmatpush.xpose.msra.mxu0 0.0
    %3171 = vmatpush.xpose.msra.mxu0 0.0
    %3172 = vmatpush.xpose.msra.mxu0 0.0
    %3173 = vmatpush.xpose.msra.mxu0 0.0
    %3174 = vmatpush.xpose.msra.mxu0 %v3040
    %3175 = vmatpush.xpose.msra.mxu0 %v3030
    %3176 = vmatmul.f32.gmra.mxu0 %v3092
    %v3177 = vpop.f32.mrf.mxu0
    %v3178 = vadd.f32 %v3158, %v3177
    %3179 = vdwg.mxu0
    %3180 = vmatpush.xpose.msra.mxu0 0.0
    %3181 = vmatpush.xpose.msra.mxu0 0.0
    %3182 = vmatpush.xpose.msra.mxu0 0.0
    %3183 = vmatpush.xpose.msra.mxu0 0.0
    %3184 = vmatpush.xpose.msra.mxu0 0.0
    %3185 = vmatpush.xpose.msra.mxu0 0.0
    %3186 = vmatpush.xpose.msra.mxu0 0.0
    %3187 = vmatpush.xpose.msra.mxu0 0.0
    %3188 = vmatpush.xpose.msra.mxu0 0.0
    %3189 = vmatpush.xpose.msra.mxu0 0.0
    %3190 = vmatpush.xpose.msra.mxu0 0.0
    %3191 = vmatpush.xpose.msra.mxu0 0.0
    %3192 = vmatpush.xpose.msra.mxu0 0.0
    %3193 = vmatpush.xpose.msra.mxu0 0.0
    %3194 = vmatpush.xpose.msra.mxu0 %v3041
    %3195 = vmatpush.xpose.msra.mxu0 %v3031
    %3196 = vmatmul.f32.gmra.mxu0 %v3093
    %v3197 = vpop.f32.mrf.mxu0
    %v3198 = vadd.f32 %v3178, %v3197
    %3199 = vdwg.mxu0
    %3200 = vmatpush.xpose.msra.mxu0 0.0
    %3201 = vmatpush.xpose.msra.mxu0 0.0
    %3202 = vmatpush.xpose.msra.mxu0 0.0
    %3203 = vmatpush.xpose.msra.mxu0 0.0
    %3204 = vmatpush.xpose.msra.mxu0 0.0
    %3205 = vmatpush.xpose.msra.mxu0 0.0
    %3206 = vmatpush.xpose.msra.mxu0 0.0
    %3207 = vmatpush.xpose.msra.mxu0 0.0
    %3208 = vmatpush.xpose.msra.mxu0 0.0
    %3209 = vmatpush.xpose.msra.mxu0 0.0
    %3210 = vmatpush.xpose.msra.mxu0 0.0
    %3211 = vmatpush.xpose.msra.mxu0 0.0
    %3212 = vmatpush.xpose.msra.mxu0 0.0
    %3213 = vmatpush.xpose.msra.mxu0 0.0
    %3214 = vmatpush.xpose.msra.mxu0 %v3042
    %3215 = vmatpush.xpose.msra.mxu0 %v3032
    %3216 = vmatmul.f32.gmra.mxu0 %v3094
    %v3217 = vpop.f32.mrf.mxu0
    %v3218 = vadd.f32 %v3198, %v3217
    %3219 = vdwg.mxu0
    %3220 = vmatpush.xpose.msra.mxu0 0.0
    %3221 = vmatpush.xpose.msra.mxu0 0.0
    %3222 = vmatpush.xpose.msra.mxu0 0.0
    %3223 = vmatpush.xpose.msra.mxu0 0.0
    %3224 = vmatpush.xpose.msra.mxu0 0.0
    %3225 = vmatpush.xpose.msra.mxu0 0.0
    %3226 = vmatpush.xpose.msra.mxu0 0.0
    %3227 = vmatpush.xpose.msra.mxu0 0.0
    %3228 = vmatpush.xpose.msra.mxu0 0.0
    %3229 = vmatpush.xpose.msra.mxu0 0.0
    %3230 = vmatpush.xpose.msra.mxu0 0.0
    %3231 = vmatpush.xpose.msra.mxu0 0.0
    %3232 = vmatpush.xpose.msra.mxu0 0.0
    %3233 = vmatpush.xpose.msra.mxu0 0.0
    %3234 = vmatpush.xpose.msra.mxu0 %v3043
    %3235 = vmatpush.xpose.msra.mxu0 %v3033
    %3236 = vmatmul.f32.gmra.mxu0 %v3095
    %v3237 = vpop.f32.mrf.mxu0
    %v3238 = vadd.f32 %v3218, %v3237
    %3239 = vdwg.mxu0
    %3240 = vmatpush.xpose.msra.mxu0 0.0
    %3241 = vmatpush.xpose.msra.mxu0 0.0
    %3242 = vmatpush.xpose.msra.mxu0 0.0
    %3243 = vmatpush.xpose.msra.mxu0 0.0
    %3244 = vmatpush.xpose.msra.mxu0 0.0
    %3245 = vmatpush.xpose.msra.mxu0 0.0
    %3246 = vmatpush.xpose.msra.mxu0 0.0
    %3247 = vmatpush.xpose.msra.mxu0 0.0
    %3248 = vmatpush.xpose.msra.mxu0 0.0
    %3249 = vmatpush.xpose.msra.mxu0 0.0
    %3250 = vmatpush.xpose.msra.mxu0 0.0
    %3251 = vmatpush.xpose.msra.mxu0 0.0
    %3252 = vmatpush.xpose.msra.mxu0 0.0
    %3253 = vmatpush.xpose.msra.mxu0 0.0
    %3254 = vmatpush.xpose.msra.mxu0 %v3044
    %3255 = vmatpush.xpose.msra.mxu0 %v3034
    %3256 = vmatmul.f32.gmra.mxu0 %v3096
    %v3257 = vpop.f32.mrf.mxu0
    %v3258 = vadd.f32 %v3238, %v3257
    %3259 = vdwg.mxu0
    %3260 = vmatpush.xpose.msra.mxu0 0.0
    %3261 = vmatpush.xpose.msra.mxu0 0.0
    %3262 = vmatpush.xpose.msra.mxu0 0.0
    %3263 = vmatpush.xpose.msra.mxu0 0.0
    %3264 = vmatpush.xpose.msra.mxu0 0.0
    %3265 = vmatpush.xpose.msra.mxu0 0.0
    %3266 = vmatpush.xpose.msra.mxu0 0.0
    %3267 = vmatpush.xpose.msra.mxu0 0.0
    %3268 = vmatpush.xpose.msra.mxu0 0.0
    %3269 = vmatpush.xpose.msra.mxu0 0.0
    %3270 = vmatpush.xpose.msra.mxu0 0.0
    %3271 = vmatpush.xpose.msra.mxu0 0.0
    %3272 = vmatpush.xpose.msra.mxu0 0.0
    %3273 = vmatpush.xpose.msra.mxu0 0.0
    %3274 = vmatpush.xpose.msra.mxu0 %v3045
    %3275 = vmatpush.xpose.msra.mxu0 %v3035
    %3276 = vmatmul.f32.gmra.mxu0 %v3097
    %v3277 = vpop.f32.mrf.mxu0
    %v3278 = vadd.f32 %v3258, %v3277
    %3279 = vdwg.mxu0
    %3280 = vmatpush.xpose.msra.mxu0 0.0
    %3281 = vmatpush.xpose.msra.mxu0 0.0
    %3282 = vmatpush.xpose.msra.mxu0 0.0
    %3283 = vmatpush.xpose.msra.mxu0 0.0
    %3284 = vmatpush.xpose.msra.mxu0 0.0
    %3285 = vmatpush.xpose.msra.mxu0 0.0
    %3286 = vmatpush.xpose.msra.mxu0 0.0
    %3287 = vmatpush.xpose.msra.mxu0 0.0
    %3288 = vmatpush.xpose.msra.mxu0 0.0
    %3289 = vmatpush.xpose.msra.mxu0 0.0
    %3290 = vmatpush.xpose.msra.mxu0 0.0
    %3291 = vmatpush.xpose.msra.mxu0 0.0
    %3292 = vmatpush.xpose.msra.mxu0 0.0
    %3293 = vmatpush.xpose.msra.mxu0 0.0
    %3294 = vmatpush.xpose.msra.mxu0 %v3046
    %3295 = vmatpush.xpose.msra.mxu0 %v3036
    %3296 = vmatmul.f32.gmra.mxu0 %v3098
    %v3297 = vpop.f32.mrf.mxu0
    %v3298 = vadd.f32 %v3278, %v3297
    %3299 = vdwg.mxu0
    %v3300 = vadd.f32 %v3298, %v1601
    %v3301 = vadd.f32 %v3300, %v1835
    %v3302 = vadd.f32 %v3301, %v1601
    %3303 = vst.msk [vmem:[#allocation22] sm:$0xff] %vm1836, %v3302
    %v3304 = vld [vmem:[%s1977] sm:$0xff]
    %v3305 = vmul.f32 %v2635, %v3069
    %v3306 = vmul.f32 %v2636, %v3070
    %v3307 = vmul.f32 %v2637, %v3071
    %v3308 = vmul.f32 %v2638, %v3072
    %v3309 = vmul.f32 %v2639, %v3073
    %v3310 = vmul.f32 %v2640, %v3074
    %v3311 = vmul.f32 %v2641, %v3075
    %v3312 = vmul.f32 %v2642, %v3076
    %v3313 = vmul.f32 %v2643, %v3077
    %v3314 = vmul.f32 %v2644, %v3078
    %3315 = vmatpush.xpose.msra.mxu0 0.0
    %3316 = vmatpush.xpose.msra.mxu0 0.0
    %3317 = vmatpush.xpose.msra.mxu0 0.0
    %3318 = vmatpush.xpose.msra.mxu0 0.0
    %3319 = vmatpush.xpose.msra.mxu0 0.0
    %3320 = vmatpush.xpose.msra.mxu0 0.0
    %3321 = vmatpush.xpose.msra.mxu0 0.0
    %3322 = vmatpush.xpose.msra.mxu0 0.0
    %3323 = vmatpush.xpose.msra.mxu0 0.0
    %3324 = vmatpush.xpose.msra.mxu0 0.0
    %3325 = vmatpush.xpose.msra.mxu0 0.0
    %3326 = vmatpush.xpose.msra.mxu0 0.0
    %3327 = vmatpush.xpose.msra.mxu0 0.0
    %3328 = vmatpush.xpose.msra.mxu0 0.0
    %3329 = vmatpush.xpose.msra.mxu0 %v3057
    %3330 = vmatpush.xpose.msra.mxu0 %v3047
    %3331 = vmatmul.f32.gmra.mxu0 %v3305
    %v3332 = vpop.f32.mrf.mxu0
    %v3333 = vadd.f32 %v3099, %v3332
    %3334 = vdwg.mxu0
    %3335 = vmatpush.xpose.msra.mxu0 0.0
    %3336 = vmatpush.xpose.msra.mxu0 0.0
    %3337 = vmatpush.xpose.msra.mxu0 0.0
    %3338 = vmatpush.xpose.msra.mxu0 0.0
    %3339 = vmatpush.xpose.msra.mxu0 0.0
    %3340 = vmatpush.xpose.msra.mxu0 0.0
    %3341 = vmatpush.xpose.msra.mxu0 0.0
    %3342 = vmatpush.xpose.msra.mxu0 0.0
    %3343 = vmatpush.xpose.msra.mxu0 0.0
    %3344 = vmatpush.xpose.msra.mxu0 0.0
    %3345 = vmatpush.xpose.msra.mxu0 0.0
    %3346 = vmatpush.xpose.msra.mxu0 0.0
    %3347 = vmatpush.xpose.msra.mxu0 0.0
    %3348 = vmatpush.xpose.msra.mxu0 0.0
    %3349 = vmatpush.xpose.msra.mxu0 %v3058
    %3350 = vmatpush.xpose.msra.mxu0 %v3048
    %3351 = vmatmul.f32.gmra.mxu0 %v3306
    %v3352 = vpop.f32.mrf.mxu0
    %v3353 = vadd.f32 %v3333, %v3352
    %3354 = vdwg.mxu0
    %3355 = vmatpush.xpose.msra.mxu0 0.0
    %3356 = vmatpush.xpose.msra.mxu0 0.0
    %3357 = vmatpush.xpose.msra.mxu0 0.0
    %3358 = vmatpush.xpose.msra.mxu0 0.0
    %3359 = vmatpush.xpose.msra.mxu0 0.0
    %3360 = vmatpush.xpose.msra.mxu0 0.0
    %3361 = vmatpush.xpose.msra.mxu0 0.0
    %3362 = vmatpush.xpose.msra.mxu0 0.0
    %3363 = vmatpush.xpose.msra.mxu0 0.0
    %3364 = vmatpush.xpose.msra.mxu0 0.0
    %3365 = vmatpush.xpose.msra.mxu0 0.0
    %3366 = vmatpush.xpose.msra.mxu0 0.0
    %3367 = vmatpush.xpose.msra.mxu0 0.0
    %3368 = vmatpush.xpose.msra.mxu0 0.0
    %3369 = vmatpush.xpose.msra.mxu0 %v3059
    %3370 = vmatpush.xpose.msra.mxu0 %v3049
    %3371 = vmatmul.f32.gmra.mxu0 %v3307
    %v3372 = vpop.f32.mrf.mxu0
    %v3373 = vadd.f32 %v3353, %v3372
    %3374 = vdwg.mxu0
    %3375 = vmatpush.xpose.msra.mxu0 0.0
    %3376 = vmatpush.xpose.msra.mxu0 0.0
    %3377 = vmatpush.xpose.msra.mxu0 0.0
    %3378 = vmatpush.xpose.msra.mxu0 0.0
    %3379 = vmatpush.xpose.msra.mxu0 0.0
    %3380 = vmatpush.xpose.msra.mxu0 0.0
    %3381 = vmatpush.xpose.msra.mxu0 0.0
    %3382 = vmatpush.xpose.msra.mxu0 0.0
    %3383 = vmatpush.xpose.msra.mxu0 0.0
    %3384 = vmatpush.xpose.msra.mxu0 0.0
    %3385 = vmatpush.xpose.msra.mxu0 0.0
    %3386 = vmatpush.xpose.msra.mxu0 0.0
    %3387 = vmatpush.xpose.msra.mxu0 0.0
    %3388 = vmatpush.xpose.msra.mxu0 0.0
    %3389 = vmatpush.xpose.msra.mxu0 %v3060
    %3390 = vmatpush.xpose.msra.mxu0 %v3050
    %3391 = vmatmul.f32.gmra.mxu0 %v3308
    %v3392 = vpop.f32.mrf.mxu0
    %v3393 = vadd.f32 %v3373, %v3392
    %3394 = vdwg.mxu0
    %3395 = vmatpush.xpose.msra.mxu0 0.0
    %3396 = vmatpush.xpose.msra.mxu0 0.0
    %3397 = vmatpush.xpose.msra.mxu0 0.0
    %3398 = vmatpush.xpose.msra.mxu0 0.0
    %3399 = vmatpush.xpose.msra.mxu0 0.0
    %3400 = vmatpush.xpose.msra.mxu0 0.0
    %3401 = vmatpush.xpose.msra.mxu0 0.0
    %3402 = vmatpush.xpose.msra.mxu0 0.0
    %3403 = vmatpush.xpose.msra.mxu0 0.0
    %3404 = vmatpush.xpose.msra.mxu0 0.0
    %3405 = vmatpush.xpose.msra.mxu0 0.0
    %3406 = vmatpush.xpose.msra.mxu0 0.0
    %3407 = vmatpush.xpose.msra.mxu0 0.0
    %3408 = vmatpush.xpose.msra.mxu0 0.0
    %3409 = vmatpush.xpose.msra.mxu0 %v3061
    %3410 = vmatpush.xpose.msra.mxu0 %v3051
    %3411 = vmatmul.f32.gmra.mxu0 %v3309
    %v3412 = vpop.f32.mrf.mxu0
    %v3413 = vadd.f32 %v3393, %v3412
    %3414 = vdwg.mxu0
    %3415 = vmatpush.xpose.msra.mxu0 0.0
    %3416 = vmatpush.xpose.msra.mxu0 0.0
    %3417 = vmatpush.xpose.msra.mxu0 0.0
    %3418 = vmatpush.xpose.msra.mxu0 0.0
    %3419 = vmatpush.xpose.msra.mxu0 0.0
    %3420 = vmatpush.xpose.msra.mxu0 0.0
    %3421 = vmatpush.xpose.msra.mxu0 0.0
    %3422 = vmatpush.xpose.msra.mxu0 0.0
    %3423 = vmatpush.xpose.msra.mxu0 0.0
    %3424 = vmatpush.xpose.msra.mxu0 0.0
    %3425 = vmatpush.xpose.msra.mxu0 0.0
    %3426 = vmatpush.xpose.msra.mxu0 0.0
    %3427 = vmatpush.xpose.msra.mxu0 0.0
    %3428 = vmatpush.xpose.msra.mxu0 0.0
    %3429 = vmatpush.xpose.msra.mxu0 %v3062
    %3430 = vmatpush.xpose.msra.mxu0 %v3052
    %3431 = vmatmul.f32.gmra.mxu0 %v3310
    %v3432 = vpop.f32.mrf.mxu0
    %v3433 = vadd.f32 %v3413, %v3432
    %3434 = vdwg.mxu0
    %3435 = vmatpush.xpose.msra.mxu0 0.0
    %3436 = vmatpush.xpose.msra.mxu0 0.0
    %3437 = vmatpush.xpose.msra.mxu0 0.0
    %3438 = vmatpush.xpose.msra.mxu0 0.0
    %3439 = vmatpush.xpose.msra.mxu0 0.0
    %3440 = vmatpush.xpose.msra.mxu0 0.0
    %3441 = vmatpush.xpose.msra.mxu0 0.0
    %3442 = vmatpush.xpose.msra.mxu0 0.0
    %3443 = vmatpush.xpose.msra.mxu0 0.0
    %3444 = vmatpush.xpose.msra.mxu0 0.0
    %3445 = vmatpush.xpose.msra.mxu0 0.0
    %3446 = vmatpush.xpose.msra.mxu0 0.0
    %3447 = vmatpush.xpose.msra.mxu0 0.0
    %3448 = vmatpush.xpose.msra.mxu0 0.0
    %3449 = vmatpush.xpose.msra.mxu0 %v3063
    %3450 = vmatpush.xpose.msra.mxu0 %v3053
    %3451 = vmatmul.f32.gmra.mxu0 %v3311
    %v3452 = vpop.f32.mrf.mxu0
    %v3453 = vadd.f32 %v3433, %v3452
    %3454 = vdwg.mxu0
    %3455 = vmatpush.xpose.msra.mxu0 0.0
    %3456 = vmatpush.xpose.msra.mxu0 0.0
    %3457 = vmatpush.xpose.msra.mxu0 0.0
    %3458 = vmatpush.xpose.msra.mxu0 0.0
    %3459 = vmatpush.xpose.msra.mxu0 0.0
    %3460 = vmatpush.xpose.msra.mxu0 0.0
    %3461 = vmatpush.xpose.msra.mxu0 0.0
    %3462 = vmatpush.xpose.msra.mxu0 0.0
    %3463 = vmatpush.xpose.msra.mxu0 0.0
    %3464 = vmatpush.xpose.msra.mxu0 0.0
    %3465 = vmatpush.xpose.msra.mxu0 0.0
    %3466 = vmatpush.xpose.msra.mxu0 0.0
    %3467 = vmatpush.xpose.msra.mxu0 0.0
    %3468 = vmatpush.xpose.msra.mxu0 0.0
    %3469 = vmatpush.xpose.msra.mxu0 %v3064
    %3470 = vmatpush.xpose.msra.mxu0 %v3054
    %3471 = vmatmul.f32.gmra.mxu0 %v3312
    %v3472 = vpop.f32.mrf.mxu0
    %v3473 = vadd.f32 %v3453, %v3472
    %3474 = vdwg.mxu0
    %3475 = vmatpush.xpose.msra.mxu0 0.0
    %3476 = vmatpush.xpose.msra.mxu0 0.0
    %3477 = vmatpush.xpose.msra.mxu0 0.0
    %3478 = vmatpush.xpose.msra.mxu0 0.0
    %3479 = vmatpush.xpose.msra.mxu0 0.0
    %3480 = vmatpush.xpose.msra.mxu0 0.0
    %3481 = vmatpush.xpose.msra.mxu0 0.0
    %3482 = vmatpush.xpose.msra.mxu0 0.0
    %3483 = vmatpush.xpose.msra.mxu0 0.0
    %3484 = vmatpush.xpose.msra.mxu0 0.0
    %3485 = vmatpush.xpose.msra.mxu0 0.0
    %3486 = vmatpush.xpose.msra.mxu0 0.0
    %3487 = vmatpush.xpose.msra.mxu0 0.0
    %3488 = vmatpush.xpose.msra.mxu0 0.0
    %3489 = vmatpush.xpose.msra.mxu0 %v3065
    %3490 = vmatpush.xpose.msra.mxu0 %v3055
    %3491 = vmatmul.f32.gmra.mxu0 %v3313
    %v3492 = vpop.f32.mrf.mxu0
    %v3493 = vadd.f32 %v3473, %v3492
    %3494 = vdwg.mxu0
    %3495 = vmatpush.xpose.msra.mxu0 0.0
    %3496 = vmatpush.xpose.msra.mxu0 0.0
    %3497 = vmatpush.xpose.msra.mxu0 0.0
    %3498 = vmatpush.xpose.msra.mxu0 0.0
    %3499 = vmatpush.xpose.msra.mxu0 0.0
    %3500 = vmatpush.xpose.msra.mxu0 0.0
    %3501 = vmatpush.xpose.msra.mxu0 0.0
    %3502 = vmatpush.xpose.msra.mxu0 0.0
    %3503 = vmatpush.xpose.msra.mxu0 0.0
    %3504 = vmatpush.xpose.msra.mxu0 0.0
    %3505 = vmatpush.xpose.msra.mxu0 0.0
    %3506 = vmatpush.xpose.msra.mxu0 0.0
    %3507 = vmatpush.xpose.msra.mxu0 0.0
    %3508 = vmatpush.xpose.msra.mxu0 0.0
    %3509 = vmatpush.xpose.msra.mxu0 %v3066
    %3510 = vmatpush.xpose.msra.mxu0 %v3056
    %3511 = vmatmul.f32.gmra.mxu0 %v3314
    %v3512 = vpop.f32.mrf.mxu0
    %v3513 = vadd.f32 %v3493, %v3512
    %3514 = vdwg.mxu0
    %v3515 = vadd.f32 %v3513, %v3304
    %v3516 = vadd.f32 %v3515, %v2189
    %v3517 = vadd.f32 %v3516, %v3304
    %s3518 = scalar_lea.vmem [#allocation22], 8
    %3519 = vst.msk [vmem:[%s3518] sm:$0xff] %vm1836, %v3517
    // Predicated region
    $region98: #{tpu_custom_call.1} parent=1 // pred_check
      _
    $region99: #{tpu_custom_call.1} parent=1 // pred_check_branch
      %3521 = sbr.rel (0) target = $region101
    $region100: #{tpu_custom_call.1} parent=1 // pred_region
      %3523 = vsyncadd [#allocation4], 0
      %s3524 = sshll.u32 [#allocation22], 4
      %s3525 = int_to_ptr.vmem [resolvable:$true] %s3524
      %s3526 = sshll.u32 %s12, 4
      %s3527 = int_to_ptr.hbm [resolvable:$true] %s3526
      %3532 = dma.vmem_to_hbm [thread:$0]  %s3525, 256, %s3527, [#allocation4], 128, 128, 8
    $region101: #{tpu_custom_call.1} parent=1 // pred_fallthru
      _
    // Predicated region
    $region102: #{tpu_custom_call.1} parent=1 // pred_check
      _
    $region103: #{tpu_custom_call.1} parent=1 // pred_check_branch
      %3534 = sbr.rel (0) target = $region105
    $region104: #{tpu_custom_call.1} parent=1 // pred_region
      %3536 = dma.done [#allocation4], 256
    $region105: #{tpu_custom_call.1} parent=1 // pred_fallthru
      _
    %3537 = vsyncpa [#allocation3], 1
    %3538 = vsyncpa [#allocation7], 1
    %3539 = vsyncpa [#allocation10], 1
    %3540 = vsyncpa [#allocation13], 1
    %3541 = vsyncpa [#allocation16], 1
    %3542 = vsyncpa [#allocation19], 1
    %3543 = vsyncpa [#allocation4], 1
    %3544 = vsyncpa [#allocation5], 1

</llo_original>
